<compile_context>
chip_gen: v7x
topology: tpu7x:2x2x1
jax: 0.10.0
libtpu: 0.0.40
codegen_flags: <defaults>
</compile_context>

<pallas_src>
import jax
import jax.numpy as jnp
import numpy as np
from jax.experimental import pallas as pl
from jax.experimental.pallas import tpu as pltpu  # noqa: F401  (kept for TPU-specific params if needed)

# ---- hyperparameters (small, consistent with the module) ----
B, N, C = 2, 8, 32            # batch, seq len, dim
NUM_HEADS = 2
COEF = 4
H = NUM_HEADS * COEF          # effective heads = 8
D4 = C * COEF                 # trans_dims output = 128
HD = D4 // H                  # per-head dim = 16
K = 256 // COEF               # external-attention key count = 64
HIDDEN = int(C * 4.0)         # mlp hidden = 128
R = B * N                     # batch*tokens folded into matmul rows = 16
LN_EPS = 1e-5
SQRT_2_OVER_PI = 0.7978845608028654


def block_kernel(x_ref,
                 ln1g_ref, ln1b_ref,
                 wtd_ref, btd_ref,
                 w0_ref, b0_ref,
                 w1_ref, b1_ref,
                 wp_ref, bp_ref,
                 ln2g_ref, ln2b_ref,
                 wf1_ref, bf1_ref,
                 wf2_ref, bf2_ref,
                 o_ref):
    x = x_ref[...]                                                   # (R, C) = (B*N, C)

    def layer_norm(z, g, b):
        mu = jnp.mean(z, axis=-1, keepdims=True)
        var = jnp.mean((z - mu) ** 2, axis=-1, keepdims=True)
        return (z - mu) * jax.lax.rsqrt(var + LN_EPS) * g + b

    # ---------- attention branch ----------
    h = layer_norm(x, ln1g_ref[...], ln1b_ref[...])                  # (R, C)

    w0t = w0_ref[...]                                                # (HD, K)
    b0 = b0_ref[...]                                                 # (1, K)
    w1t = w1_ref[...]                                                # (K, HD)
    b1 = b1_ref[...]                                                 # (1, HD)

    # Per-head external attention with the true small shared weights (no zero padding).
    # Head merge + proj is folded into a per-head accumulation: out += y_h @ Wp_head.
    y_proj = None
    for hd in range(H):
        # trans_dims restricted to this head's output slice: (R, C) @ (C, HD)
        th = jnp.dot(h, wtd_ref[hd], preferred_element_type=jnp.float32) + btd_ref[hd]   # (R, HD)
        # linear_0 (shared across heads): (R, HD) @ (HD, K)
        a = jnp.dot(th, w0t, preferred_element_type=jnp.float32) + b0                    # (R, K)

        # softmax over the token axis, independently per batch (rows are (b, n) with
        # n fastest, so each batch is a contiguous, sublane-tile-aligned 8-row group).
        parts = []
        for b in range(B):
            ab = a[b * N:(b + 1) * N, :]                                                 # (N, K)
            m = jnp.max(ab, axis=0, keepdims=True)
            e = jnp.exp(ab - m)
            sm = e * pl.reciprocal(jnp.sum(e, axis=0, keepdims=True), approx=True)
            # attn / (1e-9 + attn.sum(dim=-1, keepdim=True))
            sm = sm * pl.reciprocal(1e-9 + jnp.sum(sm, axis=-1, keepdims=True), approx=True)
            parts.append(sm)
        attn = jnp.concatenate(parts, axis=0)                                            # (R, K)

        # linear_1 (shared across heads): (R, K) @ (K, HD)
        y_h = jnp.dot(attn, w1t, preferred_element_type=jnp.float32) + b1                # (R, HD)
        # proj contribution of this head: (R, HD) @ (HD, C)
        contrib = jnp.dot(y_h, wp_ref[hd], preferred_element_type=jnp.float32)           # (R, C)
        y_proj = contrib if y_proj is None else y_proj + contrib

    y = y_proj + bp_ref[...]                                                             # (R, C)
    # TODO(synk): dropout / attn_drop / drop_path are stochastic in training; identity here (eval mode).
    x1 = x + y

    # ---------- MLP branch ----------
    h2 = layer_norm(x1, ln2g_ref[...], ln2b_ref[...])
    f = jnp.dot(h2, wf1_ref[...], preferred_element_type=jnp.float32) + bf1_ref[...]     # (R, HIDDEN)
    # tanh-approximate GELU (tanh runs on the EUP slot)
    f = 0.5 * f * (1.0 + jnp.tanh(SQRT_2_OVER_PI * (f + 0.044715 * f * f * f)))
    f = jnp.dot(f, wf2_ref[...], preferred_element_type=jnp.float32) + bf2_ref[...]      # (R, C)

    o_ref[...] = (x1 + f).astype(o_ref.dtype)


def make_params(key):
    ks = jax.random.split(key, 16)
    w = lambda k, shape, s=0.02: (s * jax.random.normal(k, shape)).astype(jnp.float32)
    return dict(
        ln1g=(1.0 + 0.1 * jax.random.normal(ks[12], (C,))).astype(jnp.float32),
        ln1b=w(ks[13], (C,), 0.05),
        Wtd=w(ks[0], (D4, C)), btd=w(ks[1], (D4,)),
        W0=w(ks[2], (K, HD)), b0=w(ks[3], (K,)),
        W1=w(ks[4], (HD, K)), b1=w(ks[5], (HD,)),
        Wp=w(ks[6], (C, D4)), bp=w(ks[7], (C,)),
        ln2g=(1.0 + 0.1 * jax.random.normal(ks[14], (C,))).astype(jnp.float32),
        ln2b=w(ks[15], (C,), 0.05),
        Wf1=w(ks[8], (HIDDEN, C)), bf1=w(ks[9], (HIDDEN,)),
        Wf2=w(ks[10], (C, HIDDEN)), bf2=w(ks[11], (C,)),
    )


def prepare_params(p):
    """One-time weight re-layout for the kernel (pure reshapes/transposes, no kron/tile)."""
    return (
        p['ln1g'].reshape(1, C), p['ln1b'].reshape(1, C),
        p['Wtd'].reshape(H, HD, C).transpose(0, 2, 1),    # (H, C, HD): per-head trans_dims slice
        p['btd'].reshape(H, 1, HD),                       # (H, 1, HD)
        p['W0'].T, p['b0'].reshape(1, K),                 # (HD, K), (1, K)
        p['W1'].T, p['b1'].reshape(1, HD),                # (K, HD), (1, HD)
        p['Wp'].T.reshape(H, HD, C),                      # (H, HD, C): per-head proj slice
        p['bp'].reshape(1, C),
        p['ln2g'].reshape(1, C), p['ln2b'].reshape(1, C),
        p['Wf1'].T, p['bf1'].reshape(1, HIDDEN),
        p['Wf2'].T, p['bf2'].reshape(1, C),
    )


def block_forward(x, prepared):
    # Single kernel invocation (no grid): the whole batch is folded into the row dim,
    # every array fits VMEM whole, weights are DMA'd exactly once.
    x2 = x.reshape(R, C)
    out = pl.pallas_call(
        block_kernel,
        out_shape=jax.ShapeDtypeStruct((R, C), jnp.float32),
    )(x2, *prepared)
    return out.reshape(B, N, C)


def ref_forward(x, p):
    """Pure-JAX mirror of the PyTorch Block (eval mode, exact erf GELU)."""
    def ln(z, g, b):
        mu = z.mean(-1, keepdims=True)
        var = ((z - mu) ** 2).mean(-1, keepdims=True)
        return (z - mu) / jnp.sqrt(var + LN_EPS) * g + b

    h = ln(x, p['ln1g'], p['ln1b'])
    t = h @ p['Wtd'].T + p['btd']                                  # (B,N,4C)
    t = t.reshape(B, N, H, HD).transpose(0, 2, 1, 3)               # (B,H,N,HD)
    attn = t @ p['W0'].T + p['b0']                                 # (B,H,N,K)
    attn = jax.nn.softmax(attn, axis=-2)
    attn = attn / (1e-9 + attn.sum(-1, keepdims=True))
    y = attn @ p['W1'].T + p['b1']                                 # (B,H,N,HD)
    y = y.transpose(0, 2, 1, 3).reshape(B, N, D4)
    y = y @ p['Wp'].T + p['bp']
    x1 = x + y
    h2 = ln(x1, p['ln2g'], p['ln2b'])
    f = h2 @ p['Wf1'].T + p['bf1']
    f = 0.5 * f * (1.0 + jax.lax.erf(f * 0.7071067811865476))
    f = f @ p['Wf2'].T + p['bf2']
    return x1 + f


if __name__ == "__main__":
    key = jax.random.PRNGKey(0)
    kx, kp = jax.random.split(key)
    x = jax.random.normal(kx, (B, N, C), dtype=jnp.float32)
    params = make_params(kp)
    prepared = prepare_params(params)          # hoisted out of the forward path

    out = block_forward(x, prepared)
    out = jax.block_until_ready(out)

    ref = jax.block_until_ready(ref_forward(x, params))
    np.testing.assert_allclose(np.asarray(out), np.asarray(ref), rtol=2e-2, atol=2e-3)

    print("KERNEL_OK")
</pallas_src>

<mosaic_0001>
module attributes {stable_mosaic.version = 11 : i64} {
  func.func @block_kernel(%arg0: memref<16x32xf32, #tpu.memory_space<vmem>>, %arg1: memref<1x32xf32, #tpu.memory_space<vmem>>, %arg2: memref<1x32xf32, #tpu.memory_space<vmem>>, %arg3: memref<8x32x16xf32, #tpu.memory_space<vmem>>, %arg4: memref<8x1x16xf32, #tpu.memory_space<vmem>>, %arg5: memref<16x64xf32, #tpu.memory_space<vmem>>, %arg6: memref<1x64xf32, #tpu.memory_space<vmem>>, %arg7: memref<64x16xf32, #tpu.memory_space<vmem>>, %arg8: memref<1x16xf32, #tpu.memory_space<vmem>>, %arg9: memref<8x16x32xf32, #tpu.memory_space<vmem>>, %arg10: memref<1x32xf32, #tpu.memory_space<vmem>>, %arg11: memref<1x32xf32, #tpu.memory_space<vmem>>, %arg12: memref<1x32xf32, #tpu.memory_space<vmem>>, %arg13: memref<32x128xf32, #tpu.memory_space<vmem>>, %arg14: memref<1x128xf32, #tpu.memory_space<vmem>>, %arg15: memref<128x32xf32, #tpu.memory_space<vmem>>, %arg16: memref<1x32xf32, #tpu.memory_space<vmem>>, %arg17: memref<16x32xf32, #tpu.memory_space<vmem>>) attributes {dimension_semantics = [], scalar_prefetch = 0 : i64, scratch_operands = 0 : i64, tpu.core_type = #tpu.core_type<tc>} {
    %c0 = arith.constant 0 : index
    %c0_0 = arith.constant 0 : index
    %0 = vector.load %arg0[%c0, %c0_0] : memref<16x32xf32, #tpu.memory_space<vmem>>, vector<16x32xf32>
    %c0_1 = arith.constant 0 : index
    %c0_2 = arith.constant 0 : index
    %1 = vector.load %arg1[%c0_1, %c0_2] : memref<1x32xf32, #tpu.memory_space<vmem>>, vector<1x32xf32>
    %c0_3 = arith.constant 0 : index
    %c0_4 = arith.constant 0 : index
    %2 = vector.load %arg2[%c0_3, %c0_4] : memref<1x32xf32, #tpu.memory_space<vmem>>, vector<1x32xf32>
    %cst = arith.constant dense<0.000000e+00> : vector<16xf32>
    %3 = vector.multi_reduction <add>, %0, %cst [1] : vector<16x32xf32> to vector<16xf32>
    %4 = vector.shape_cast %3 : vector<16xf32> to vector<16x1xf32>
    %cst_5 = arith.constant 3.200000e+01 : f32
    %5 = vector.broadcast %cst_5 : f32 to vector<16x1xf32>
    %6 = arith.divf %4, %5 : vector<16x1xf32>
    %7 = vector.broadcast %6 : vector<16x1xf32> to vector<16x32xf32>
    %8 = arith.subf %0, %7 : vector<16x32xf32>
    %9 = arith.mulf %8, %8 : vector<16x32xf32>
    %cst_6 = arith.constant dense<0.000000e+00> : vector<16xf32>
    %10 = vector.multi_reduction <add>, %9, %cst_6 [1] : vector<16x32xf32> to vector<16xf32>
    %11 = vector.shape_cast %10 : vector<16xf32> to vector<16x1xf32>
    %cst_7 = arith.constant 3.200000e+01 : f32
    %12 = vector.broadcast %cst_7 : f32 to vector<16x1xf32>
    %13 = arith.divf %11, %12 : vector<16x1xf32>
    %14 = vector.broadcast %6 : vector<16x1xf32> to vector<16x32xf32>
    %15 = arith.subf %0, %14 : vector<16x32xf32>
    %cst_8 = arith.constant 9.99999974E-6 : f32
    %16 = vector.broadcast %cst_8 : f32 to vector<16x1xf32>
    %17 = arith.addf %13, %16 : vector<16x1xf32>
    %18 = math.rsqrt %17 : vector<16x1xf32>
    %19 = vector.broadcast %18 : vector<16x1xf32> to vector<16x32xf32>
    %20 = arith.mulf %15, %19 : vector<16x32xf32>
    %21 = vector.broadcast %1 : vector<1x32xf32> to vector<16x32xf32>
    %22 = arith.mulf %20, %21 : vector<16x32xf32>
    %23 = vector.broadcast %2 : vector<1x32xf32> to vector<16x32xf32>
    %24 = arith.addf %22, %23 : vector<16x32xf32>
    %c0_9 = arith.constant 0 : index
    %c0_10 = arith.constant 0 : index
    %25 = vector.load %arg5[%c0_9, %c0_10] : memref<16x64xf32, #tpu.memory_space<vmem>>, vector<16x64xf32>
    %c0_11 = arith.constant 0 : index
    %c0_12 = arith.constant 0 : index
    %26 = vector.load %arg6[%c0_11, %c0_12] : memref<1x64xf32, #tpu.memory_space<vmem>>, vector<1x64xf32>
    %c0_13 = arith.constant 0 : index
    %c0_14 = arith.constant 0 : index
    %27 = vector.load %arg7[%c0_13, %c0_14] : memref<64x16xf32, #tpu.memory_space<vmem>>, vector<64x16xf32>
    %c0_15 = arith.constant 0 : index
    %c0_16 = arith.constant 0 : index
    %28 = vector.load %arg8[%c0_15, %c0_16] : memref<1x16xf32, #tpu.memory_space<vmem>>, vector<1x16xf32>
    %c0_17 = arith.constant 0 : index
    %c0_18 = arith.constant 0 : index
    %c0_19 = arith.constant 0 : index
    %29 = vector.load %arg3[%c0_17, %c0_18, %c0_19] : memref<8x32x16xf32, #tpu.memory_space<vmem>>, vector<1x32x16xf32>
    %30 = vector.shape_cast %29 : vector<1x32x16xf32> to vector<32x16xf32>
    %cst_20 = arith.constant dense<0.000000e+00> : vector<16x16xf32>
    %31 = tpu.matmul %24, %30, %cst_20 {dimension_numbers = #tpu.dot_dimension_numbers<[1], [0], [0], [1], [0, 0, 1, 1], [], []>} : vector<16x32xf32>, vector<32x16xf32>, vector<16x16xf32> -> vector<16x16xf32>
    %c0_21 = arith.constant 0 : index
    %c0_22 = arith.constant 0 : index
    %c0_23 = arith.constant 0 : index
    %32 = vector.load %arg4[%c0_21, %c0_22, %c0_23] : memref<8x1x16xf32, #tpu.memory_space<vmem>>, vector<1x1x16xf32>
    %33 = vector.shape_cast %32 : vector<1x1x16xf32> to vector<1x16xf32>
    %34 = vector.broadcast %33 : vector<1x16xf32> to vector<16x16xf32>
    %35 = arith.addf %31, %34 : vector<16x16xf32>
    %cst_24 = arith.constant dense<0.000000e+00> : vector<16x64xf32>
    %36 = tpu.matmul %35, %25, %cst_24 {dimension_numbers = #tpu.dot_dimension_numbers<[1], [0], [0], [1], [0, 0, 1, 1], [], []>} : vector<16x16xf32>, vector<16x64xf32>, vector<16x64xf32> -> vector<16x64xf32>
    %37 = vector.broadcast %26 : vector<1x64xf32> to vector<16x64xf32>
    %38 = arith.addf %36, %37 : vector<16x64xf32>
    %39 = vector.extract_strided_slice %38 {offsets = [0, 0], sizes = [8, 64], strides = [1, 1]} : vector<16x64xf32> to vector<8x64xf32>
    %cst_25 = arith.constant dense<0xFF800000> : vector<64xf32>
    %40 = vector.multi_reduction <maximumf>, %39, %cst_25 [0] : vector<8x64xf32> to vector<64xf32>
    %41 = vector.shape_cast %40 : vector<64xf32> to vector<1x64xf32>
    %42 = vector.broadcast %41 : vector<1x64xf32> to vector<8x64xf32>
    %43 = arith.subf %39, %42 : vector<8x64xf32>
    %44 = math.exp %43 : vector<8x64xf32>
    %cst_26 = arith.constant dense<0.000000e+00> : vector<64xf32>
    %45 = vector.multi_reduction <add>, %44, %cst_26 [0] : vector<8x64xf32> to vector<64xf32>
    %46 = vector.shape_cast %45 : vector<64xf32> to vector<1x64xf32>
    %47 = tpu.reciprocal %46 {approx = true} : vector<1x64xf32> -> vector<1x64xf32>
    %48 = vector.broadcast %47 : vector<1x64xf32> to vector<8x64xf32>
    %49 = arith.mulf %44, %48 : vector<8x64xf32>
    %cst_27 = arith.constant dense<0.000000e+00> : vector<8xf32>
    %50 = vector.multi_reduction <add>, %49, %cst_27 [1] : vector<8x64xf32> to vector<8xf32>
    %51 = vector.shape_cast %50 : vector<8xf32> to vector<8x1xf32>
    %cst_28 = arith.constant 9.99999971E-10 : f32
    %52 = vector.broadcast %cst_28 : f32 to vector<8x1xf32>
    %53 = arith.addf %52, %51 : vector<8x1xf32>
    %54 = tpu.reciprocal %53 {approx = true} : vector<8x1xf32> -> vector<8x1xf32>
    %55 = vector.broadcast %54 : vector<8x1xf32> to vector<8x64xf32>
    %56 = arith.mulf %49, %55 : vector<8x64xf32>
    %57 = vector.extract_strided_slice %38 {offsets = [8, 0], sizes = [8, 64], strides = [1, 1]} : vector<16x64xf32> to vector<8x64xf32>
    %cst_29 = arith.constant dense<0xFF800000> : vector<64xf32>
    %58 = vector.multi_reduction <maximumf>, %57, %cst_29 [0] : vector<8x64xf32> to vector<64xf32>
    %59 = vector.shape_cast %58 : vector<64xf32> to vector<1x64xf32>
    %60 = vector.broadcast %59 : vector<1x64xf32> to vector<8x64xf32>
    %61 = arith.subf %57, %60 : vector<8x64xf32>
    %62 = math.exp %61 : vector<8x64xf32>
    %cst_30 = arith.constant dense<0.000000e+00> : vector<64xf32>
    %63 = vector.multi_reduction <add>, %62, %cst_30 [0] : vector<8x64xf32> to vector<64xf32>
    %64 = vector.shape_cast %63 : vector<64xf32> to vector<1x64xf32>
    %65 = tpu.reciprocal %64 {approx = true} : vector<1x64xf32> -> vector<1x64xf32>
    %66 = vector.broadcast %65 : vector<1x64xf32> to vector<8x64xf32>
    %67 = arith.mulf %62, %66 : vector<8x64xf32>
    %cst_31 = arith.constant dense<0.000000e+00> : vector<8xf32>
    %68 = vector.multi_reduction <add>, %67, %cst_31 [1] : vector<8x64xf32> to vector<8xf32>
    %69 = vector.shape_cast %68 : vector<8xf32> to vector<8x1xf32>
    %cst_32 = arith.constant 9.99999971E-10 : f32
    %70 = vector.broadcast %cst_32 : f32 to vector<8x1xf32>
    %71 = arith.addf %70, %69 : vector<8x1xf32>
    %72 = tpu.reciprocal %71 {approx = true} : vector<8x1xf32> -> vector<8x1xf32>
    %73 = vector.broadcast %72 : vector<8x1xf32> to vector<8x64xf32>
    %74 = arith.mulf %67, %73 : vector<8x64xf32>
    %75 = tpu.concatenate %56, %74 in 0 : vector<8x64xf32>, vector<8x64xf32> -> vector<16x64xf32>
    %cst_33 = arith.constant dense<0.000000e+00> : vector<16x16xf32>
    %76 = tpu.matmul %75, %27, %cst_33 {dimension_numbers = #tpu.dot_dimension_numbers<[1], [0], [0], [1], [0, 0, 1, 1], [], []>} : vector<16x64xf32>, vector<64x16xf32>, vector<16x16xf32> -> vector<16x16xf32>
    %77 = vector.broadcast %28 : vector<1x16xf32> to vector<16x16xf32>
    %78 = arith.addf %76, %77 : vector<16x16xf32>
    %c0_34 = arith.constant 0 : index
    %c0_35 = arith.constant 0 : index
    %c0_36 = arith.constant 0 : index
    %79 = vector.load %arg9[%c0_34, %c0_35, %c0_36] : memref<8x16x32xf32, #tpu.memory_space<vmem>>, vector<1x16x32xf32>
    %80 = vector.shape_cast %79 : vector<1x16x32xf32> to vector<16x32xf32>
    %cst_37 = arith.constant dense<0.000000e+00> : vector<16x32xf32>
    %81 = tpu.matmul %78, %80, %cst_37 {dimension_numbers = #tpu.dot_dimension_numbers<[1], [0], [0], [1], [0, 0, 1, 1], [], []>} : vector<16x16xf32>, vector<16x32xf32>, vector<16x32xf32> -> vector<16x32xf32>
    %c1 = arith.constant 1 : index
    %c0_38 = arith.constant 0 : index
    %c0_39 = arith.constant 0 : index
    %82 = vector.load %arg3[%c1, %c0_38, %c0_39] : memref<8x32x16xf32, #tpu.memory_space<vmem>>, vector<1x32x16xf32>
    %83 = vector.shape_cast %82 : vector<1x32x16xf32> to vector<32x16xf32>
    %cst_40 = arith.constant dense<0.000000e+00> : vector<16x16xf32>
    %84 = tpu.matmul %24, %83, %cst_40 {dimension_numbers = #tpu.dot_dimension_numbers<[1], [0], [0], [1], [0, 0, 1, 1], [], []>} : vector<16x32xf32>, vector<32x16xf32>, vector<16x16xf32> -> vector<16x16xf32>
    %c1_41 = arith.constant 1 : index
    %c0_42 = arith.constant 0 : index
    %c0_43 = arith.constant 0 : index
    %85 = vector.load %arg4[%c1_41, %c0_42, %c0_43] : memref<8x1x16xf32, #tpu.memory_space<vmem>>, vector<1x1x16xf32>
    %86 = vector.shape_cast %85 : vector<1x1x16xf32> to vector<1x16xf32>
    %87 = vector.broadcast %86 : vector<1x16xf32> to vector<16x16xf32>
    %88 = arith.addf %84, %87 : vector<16x16xf32>
    %cst_44 = arith.constant dense<0.000000e+00> : vector<16x64xf32>
    %89 = tpu.matmul %88, %25, %cst_44 {dimension_numbers = #tpu.dot_dimension_numbers<[1], [0], [0], [1], [0, 0, 1, 1], [], []>} : vector<16x16xf32>, vector<16x64xf32>, vector<16x64xf32> -> vector<16x64xf32>
    %90 = vector.broadcast %26 : vector<1x64xf32> to vector<16x64xf32>
    %91 = arith.addf %89, %90 : vector<16x64xf32>
    %92 = vector.extract_strided_slice %91 {offsets = [0, 0], sizes = [8, 64], strides = [1, 1]} : vector<16x64xf32> to vector<8x64xf32>
    %cst_45 = arith.constant dense<0xFF800000> : vector<64xf32>
    %93 = vector.multi_reduction <maximumf>, %92, %cst_45 [0] : vector<8x64xf32> to vector<64xf32>
    %94 = vector.shape_cast %93 : vector<64xf32> to vector<1x64xf32>
    %95 = vector.broadcast %94 : vector<1x64xf32> to vector<8x64xf32>
    %96 = arith.subf %92, %95 : vector<8x64xf32>
    %97 = math.exp %96 : vector<8x64xf32>
    %cst_46 = arith.constant dense<0.000000e+00> : vector<64xf32>
    %98 = vector.multi_reduction <add>, %97, %cst_46 [0] : vector<8x64xf32> to vector<64xf32>
    %99 = vector.shape_cast %98 : vector<64xf32> to vector<1x64xf32>
    %100 = tpu.reciprocal %99 {approx = true} : vector<1x64xf32> -> vector<1x64xf32>
    %101 = vector.broadcast %100 : vector<1x64xf32> to vector<8x64xf32>
    %102 = arith.mulf %97, %101 : vector<8x64xf32>
    %cst_47 = arith.constant dense<0.000000e+00> : vector<8xf32>
    %103 = vector.multi_reduction <add>, %102, %cst_47 [1] : vector<8x64xf32> to vector<8xf32>
    %104 = vector.shape_cast %103 : vector<8xf32> to vector<8x1xf32>
    %cst_48 = arith.constant 9.99999971E-10 : f32
    %105 = vector.broadcast %cst_48 : f32 to vector<8x1xf32>
    %106 = arith.addf %105, %104 : vector<8x1xf32>
    %107 = tpu.reciprocal %106 {approx = true} : vector<8x1xf32> -> vector<8x1xf32>
    %108 = vector.broadcast %107 : vector<8x1xf32> to vector<8x64xf32>
    %109 = arith.mulf %102, %108 : vector<8x64xf32>
    %110 = vector.extract_strided_slice %91 {offsets = [8, 0], sizes = [8, 64], strides = [1, 1]} : vector<16x64xf32> to vector<8x64xf32>
    %cst_49 = arith.constant dense<0xFF800000> : vector<64xf32>
    %111 = vector.multi_reduction <maximumf>, %110, %cst_49 [0] : vector<8x64xf32> to vector<64xf32>
    %112 = vector.shape_cast %111 : vector<64xf32> to vector<1x64xf32>
    %113 = vector.broadcast %112 : vector<1x64xf32> to vector<8x64xf32>
    %114 = arith.subf %110, %113 : vector<8x64xf32>
    %115 = math.exp %114 : vector<8x64xf32>
    %cst_50 = arith.constant dense<0.000000e+00> : vector<64xf32>
    %116 = vector.multi_reduction <add>, %115, %cst_50 [0] : vector<8x64xf32> to vector<64xf32>
    %117 = vector.shape_cast %116 : vector<64xf32> to vector<1x64xf32>
    %118 = tpu.reciprocal %117 {approx = true} : vector<1x64xf32> -> vector<1x64xf32>
    %119 = vector.broadcast %118 : vector<1x64xf32> to vector<8x64xf32>
    %120 = arith.mulf %115, %119 : vector<8x64xf32>
    %cst_51 = arith.constant dense<0.000000e+00> : vector<8xf32>
    %121 = vector.multi_reduction <add>, %120, %cst_51 [1] : vector<8x64xf32> to vector<8xf32>
    %122 = vector.shape_cast %121 : vector<8xf32> to vector<8x1xf32>
    %cst_52 = arith.constant 9.99999971E-10 : f32
    %123 = vector.broadcast %cst_52 : f32 to vector<8x1xf32>
    %124 = arith.addf %123, %122 : vector<8x1xf32>
    %125 = tpu.reciprocal %124 {approx = true} : vector<8x1xf32> -> vector<8x1xf32>
    %126 = vector.broadcast %125 : vector<8x1xf32> to vector<8x64xf32>
    %127 = arith.mulf %120, %126 : vector<8x64xf32>
    %128 = tpu.concatenate %109, %127 in 0 : vector<8x64xf32>, vector<8x64xf32> -> vector<16x64xf32>
    %cst_53 = arith.constant dense<0.000000e+00> : vector<16x16xf32>
    %129 = tpu.matmul %128, %27, %cst_53 {dimension_numbers = #tpu.dot_dimension_numbers<[1], [0], [0], [1], [0, 0, 1, 1], [], []>} : vector<16x64xf32>, vector<64x16xf32>, vector<16x16xf32> -> vector<16x16xf32>
    %130 = vector.broadcast %28 : vector<1x16xf32> to vector<16x16xf32>
    %131 = arith.addf %129, %130 : vector<16x16xf32>
    %c1_54 = arith.constant 1 : index
    %c0_55 = arith.constant 0 : index
    %c0_56 = arith.constant 0 : index
    %132 = vector.load %arg9[%c1_54, %c0_55, %c0_56] : memref<8x16x32xf32, #tpu.memory_space<vmem>>, vector<1x16x32xf32>
    %133 = vector.shape_cast %132 : vector<1x16x32xf32> to vector<16x32xf32>
    %cst_57 = arith.constant dense<0.000000e+00> : vector<16x32xf32>
    %134 = tpu.matmul %131, %133, %cst_57 {dimension_numbers = #tpu.dot_dimension_numbers<[1], [0], [0], [1], [0, 0, 1, 1], [], []>} : vector<16x16xf32>, vector<16x32xf32>, vector<16x32xf32> -> vector<16x32xf32>
    %135 = arith.addf %81, %134 : vector<16x32xf32>
    %c2 = arith.constant 2 : index
    %c0_58 = arith.constant 0 : index
    %c0_59 = arith.constant 0 : index
    %136 = vector.load %arg3[%c2, %c0_58, %c0_59] : memref<8x32x16xf32, #tpu.memory_space<vmem>>, vector<1x32x16xf32>
    %137 = vector.shape_cast %136 : vector<1x32x16xf32> to vector<32x16xf32>
    %cst_60 = arith.constant dense<0.000000e+00> : vector<16x16xf32>
    %138 = tpu.matmul %24, %137, %cst_60 {dimension_numbers = #tpu.dot_dimension_numbers<[1], [0], [0], [1], [0, 0, 1, 1], [], []>} : vector<16x32xf32>, vector<32x16xf32>, vector<16x16xf32> -> vector<16x16xf32>
    %c2_61 = arith.constant 2 : index
    %c0_62 = arith.constant 0 : index
    %c0_63 = arith.constant 0 : index
    %139 = vector.load %arg4[%c2_61, %c0_62, %c0_63] : memref<8x1x16xf32, #tpu.memory_space<vmem>>, vector<1x1x16xf32>
    %140 = vector.shape_cast %139 : vector<1x1x16xf32> to vector<1x16xf32>
    %141 = vector.broadcast %140 : vector<1x16xf32> to vector<16x16xf32>
    %142 = arith.addf %138, %141 : vector<16x16xf32>
    %cst_64 = arith.constant dense<0.000000e+00> : vector<16x64xf32>
    %143 = tpu.matmul %142, %25, %cst_64 {dimension_numbers = #tpu.dot_dimension_numbers<[1], [0], [0], [1], [0, 0, 1, 1], [], []>} : vector<16x16xf32>, vector<16x64xf32>, vector<16x64xf32> -> vector<16x64xf32>
    %144 = vector.broadcast %26 : vector<1x64xf32> to vector<16x64xf32>
    %145 = arith.addf %143, %144 : vector<16x64xf32>
    %146 = vector.extract_strided_slice %145 {offsets = [0, 0], sizes = [8, 64], strides = [1, 1]} : vector<16x64xf32> to vector<8x64xf32>
    %cst_65 = arith.constant dense<0xFF800000> : vector<64xf32>
    %147 = vector.multi_reduction <maximumf>, %146, %cst_65 [0] : vector<8x64xf32> to vector<64xf32>
    %148 = vector.shape_cast %147 : vector<64xf32> to vector<1x64xf32>
    %149 = vector.broadcast %148 : vector<1x64xf32> to vector<8x64xf32>
    %150 = arith.subf %146, %149 : vector<8x64xf32>
    %151 = math.exp %150 : vector<8x64xf32>
    %cst_66 = arith.constant dense<0.000000e+00> : vector<64xf32>
    %152 = vector.multi_reduction <add>, %151, %cst_66 [0] : vector<8x64xf32> to vector<64xf32>
    %153 = vector.shape_cast %152 : vector<64xf32> to vector<1x64xf32>
    %154 = tpu.reciprocal %153 {approx = true} : vector<1x64xf32> -> vector<1x64xf32>
    %155 = vector.broadcast %154 : vector<1x64xf32> to vector<8x64xf32>
    %156 = arith.mulf %151, %155 : vector<8x64xf32>
    %cst_67 = arith.constant dense<0.000000e+00> : vector<8xf32>
    %157 = vector.multi_reduction <add>, %156, %cst_67 [1] : vector<8x64xf32> to vector<8xf32>
    %158 = vector.shape_cast %157 : vector<8xf32> to vector<8x1xf32>
    %cst_68 = arith.constant 9.99999971E-10 : f32
    %159 = vector.broadcast %cst_68 : f32 to vector<8x1xf32>
    %160 = arith.addf %159, %158 : vector<8x1xf32>
    %161 = tpu.reciprocal %160 {approx = true} : vector<8x1xf32> -> vector<8x1xf32>
    %162 = vector.broadcast %161 : vector<8x1xf32> to vector<8x64xf32>
    %163 = arith.mulf %156, %162 : vector<8x64xf32>
    %164 = vector.extract_strided_slice %145 {offsets = [8, 0], sizes = [8, 64], strides = [1, 1]} : vector<16x64xf32> to vector<8x64xf32>
    %cst_69 = arith.constant dense<0xFF800000> : vector<64xf32>
    %165 = vector.multi_reduction <maximumf>, %164, %cst_69 [0] : vector<8x64xf32> to vector<64xf32>
    %166 = vector.shape_cast %165 : vector<64xf32> to vector<1x64xf32>
    %167 = vector.broadcast %166 : vector<1x64xf32> to vector<8x64xf32>
    %168 = arith.subf %164, %167 : vector<8x64xf32>
    %169 = math.exp %168 : vector<8x64xf32>
    %cst_70 = arith.constant dense<0.000000e+00> : vector<64xf32>
    %170 = vector.multi_reduction <add>, %169, %cst_70 [0] : vector<8x64xf32> to vector<64xf32>
    %171 = vector.shape_cast %170 : vector<64xf32> to vector<1x64xf32>
    %172 = tpu.reciprocal %171 {approx = true} : vector<1x64xf32> -> vector<1x64xf32>
    %173 = vector.broadcast %172 : vector<1x64xf32> to vector<8x64xf32>
    %174 = arith.mulf %169, %173 : vector<8x64xf32>
    %cst_71 = arith.constant dense<0.000000e+00> : vector<8xf32>
    %175 = vector.multi_reduction <add>, %174, %cst_71 [1] : vector<8x64xf32> to vector<8xf32>
    %176 = vector.shape_cast %175 : vector<8xf32> to vector<8x1xf32>
    %cst_72 = arith.constant 9.99999971E-10 : f32
    %177 = vector.broadcast %cst_72 : f32 to vector<8x1xf32>
    %178 = arith.addf %177, %176 : vector<8x1xf32>
    %179 = tpu.reciprocal %178 {approx = true} : vector<8x1xf32> -> vector<8x1xf32>
    %180 = vector.broadcast %179 : vector<8x1xf32> to vector<8x64xf32>
    %181 = arith.mulf %174, %180 : vector<8x64xf32>
    %182 = tpu.concatenate %163, %181 in 0 : vector<8x64xf32>, vector<8x64xf32> -> vector<16x64xf32>
    %cst_73 = arith.constant dense<0.000000e+00> : vector<16x16xf32>
    %183 = tpu.matmul %182, %27, %cst_73 {dimension_numbers = #tpu.dot_dimension_numbers<[1], [0], [0], [1], [0, 0, 1, 1], [], []>} : vector<16x64xf32>, vector<64x16xf32>, vector<16x16xf32> -> vector<16x16xf32>
    %184 = vector.broadcast %28 : vector<1x16xf32> to vector<16x16xf32>
    %185 = arith.addf %183, %184 : vector<16x16xf32>
    %c2_74 = arith.constant 2 : index
    %c0_75 = arith.constant 0 : index
    %c0_76 = arith.constant 0 : index
    %186 = vector.load %arg9[%c2_74, %c0_75, %c0_76] : memref<8x16x32xf32, #tpu.memory_space<vmem>>, vector<1x16x32xf32>
    %187 = vector.shape_cast %186 : vector<1x16x32xf32> to vector<16x32xf32>
    %cst_77 = arith.constant dense<0.000000e+00> : vector<16x32xf32>
    %188 = tpu.matmul %185, %187, %cst_77 {dimension_numbers = #tpu.dot_dimension_numbers<[1], [0], [0], [1], [0, 0, 1, 1], [], []>} : vector<16x16xf32>, vector<16x32xf32>, vector<16x32xf32> -> vector<16x32xf32>
    %189 = arith.addf %135, %188 : vector<16x32xf32>
    %c3 = arith.constant 3 : index
    %c0_78 = arith.constant 0 : index
    %c0_79 = arith.constant 0 : index
    %190 = vector.load %arg3[%c3, %c0_78, %c0_79] : memref<8x32x16xf32, #tpu.memory_space<vmem>>, vector<1x32x16xf32>
    %191 = vector.shape_cast %190 : vector<1x32x16xf32> to vector<32x16xf32>
    %cst_80 = arith.constant dense<0.000000e+00> : vector<16x16xf32>
    %192 = tpu.matmul %24, %191, %cst_80 {dimension_numbers = #tpu.dot_dimension_numbers<[1], [0], [0], [1], [0, 0, 1, 1], [], []>} : vector<16x32xf32>, vector<32x16xf32>, vector<16x16xf32> -> vector<16x16xf32>
    %c3_81 = arith.constant 3 : index
    %c0_82 = arith.constant 0 : index
    %c0_83 = arith.constant 0 : index
    %193 = vector.load %arg4[%c3_81, %c0_82, %c0_83] : memref<8x1x16xf32, #tpu.memory_space<vmem>>, vector<1x1x16xf32>
    %194 = vector.shape_cast %193 : vector<1x1x16xf32> to vector<1x16xf32>
    %195 = vector.broadcast %194 : vector<1x16xf32> to vector<16x16xf32>
    %196 = arith.addf %192, %195 : vector<16x16xf32>
    %cst_84 = arith.constant dense<0.000000e+00> : vector<16x64xf32>
    %197 = tpu.matmul %196, %25, %cst_84 {dimension_numbers = #tpu.dot_dimension_numbers<[1], [0], [0], [1], [0, 0, 1, 1], [], []>} : vector<16x16xf32>, vector<16x64xf32>, vector<16x64xf32> -> vector<16x64xf32>
    %198 = vector.broadcast %26 : vector<1x64xf32> to vector<16x64xf32>
    %199 = arith.addf %197, %198 : vector<16x64xf32>
    %200 = vector.extract_strided_slice %199 {offsets = [0, 0], sizes = [8, 64], strides = [1, 1]} : vector<16x64xf32> to vector<8x64xf32>
    %cst_85 = arith.constant dense<0xFF800000> : vector<64xf32>
    %201 = vector.multi_reduction <maximumf>, %200, %cst_85 [0] : vector<8x64xf32> to vector<64xf32>
    %202 = vector.shape_cast %201 : vector<64xf32> to vector<1x64xf32>
    %203 = vector.broadcast %202 : vector<1x64xf32> to vector<8x64xf32>
    %204 = arith.subf %200, %203 : vector<8x64xf32>
    %205 = math.exp %204 : vector<8x64xf32>
    %cst_86 = arith.constant dense<0.000000e+00> : vector<64xf32>
    %206 = vector.multi_reduction <add>, %205, %cst_86 [0] : vector<8x64xf32> to vector<64xf32>
    %207 = vector.shape_cast %206 : vector<64xf32> to vector<1x64xf32>
    %208 = tpu.reciprocal %207 {approx = true} : vector<1x64xf32> -> vector<1x64xf32>
    %209 = vector.broadcast %208 : vector<1x64xf32> to vector<8x64xf32>
    %210 = arith.mulf %205, %209 : vector<8x64xf32>
    %cst_87 = arith.constant dense<0.000000e+00> : vector<8xf32>
    %211 = vector.multi_reduction <add>, %210, %cst_87 [1] : vector<8x64xf32> to vector<8xf32>
    %212 = vector.shape_cast %211 : vector<8xf32> to vector<8x1xf32>
    %cst_88 = arith.constant 9.99999971E-10 : f32
    %213 = vector.broadcast %cst_88 : f32 to vector<8x1xf32>
    %214 = arith.addf %213, %212 : vector<8x1xf32>
    %215 = tpu.reciprocal %214 {approx = true} : vector<8x1xf32> -> vector<8x1xf32>
    %216 = vector.broadcast %215 : vector<8x1xf32> to vector<8x64xf32>
    %217 = arith.mulf %210, %216 : vector<8x64xf32>
    %218 = vector.extract_strided_slice %199 {offsets = [8, 0], sizes = [8, 64], strides = [1, 1]} : vector<16x64xf32> to vector<8x64xf32>
    %cst_89 = arith.constant dense<0xFF800000> : vector<64xf32>
    %219 = vector.multi_reduction <maximumf>, %218, %cst_89 [0] : vector<8x64xf32> to vector<64xf32>
    %220 = vector.shape_cast %219 : vector<64xf32> to vector<1x64xf32>
    %221 = vector.broadcast %220 : vector<1x64xf32> to vector<8x64xf32>
    %222 = arith.subf %218, %221 : vector<8x64xf32>
    %223 = math.exp %222 : vector<8x64xf32>
    %cst_90 = arith.constant dense<0.000000e+00> : vector<64xf32>
    %224 = vector.multi_reduction <add>, %223, %cst_90 [0] : vector<8x64xf32> to vector<64xf32>
    %225 = vector.shape_cast %224 : vector<64xf32> to vector<1x64xf32>
    %226 = tpu.reciprocal %225 {approx = true} : vector<1x64xf32> -> vector<1x64xf32>
    %227 = vector.broadcast %226 : vector<1x64xf32> to vector<8x64xf32>
    %228 = arith.mulf %223, %227 : vector<8x64xf32>
    %cst_91 = arith.constant dense<0.000000e+00> : vector<8xf32>
    %229 = vector.multi_reduction <add>, %228, %cst_91 [1] : vector<8x64xf32> to vector<8xf32>
    %230 = vector.shape_cast %229 : vector<8xf32> to vector<8x1xf32>
    %cst_92 = arith.constant 9.99999971E-10 : f32
    %231 = vector.broadcast %cst_92 : f32 to vector<8x1xf32>
    %232 = arith.addf %231, %230 : vector<8x1xf32>
    %233 = tpu.reciprocal %232 {approx = true} : vector<8x1xf32> -> vector<8x1xf32>
    %234 = vector.broadcast %233 : vector<8x1xf32> to vector<8x64xf32>
    %235 = arith.mulf %228, %234 : vector<8x64xf32>
    %236 = tpu.concatenate %217, %235 in 0 : vector<8x64xf32>, vector<8x64xf32> -> vector<16x64xf32>
    %cst_93 = arith.constant dense<0.000000e+00> : vector<16x16xf32>
    %237 = tpu.matmul %236, %27, %cst_93 {dimension_numbers = #tpu.dot_dimension_numbers<[1], [0], [0], [1], [0, 0, 1, 1], [], []>} : vector<16x64xf32>, vector<64x16xf32>, vector<16x16xf32> -> vector<16x16xf32>
    %238 = vector.broadcast %28 : vector<1x16xf32> to vector<16x16xf32>
    %239 = arith.addf %237, %238 : vector<16x16xf32>
    %c3_94 = arith.constant 3 : index
    %c0_95 = arith.constant 0 : index
    %c0_96 = arith.constant 0 : index
    %240 = vector.load %arg9[%c3_94, %c0_95, %c0_96] : memref<8x16x32xf32, #tpu.memory_space<vmem>>, vector<1x16x32xf32>
    %241 = vector.shape_cast %240 : vector<1x16x32xf32> to vector<16x32xf32>
    %cst_97 = arith.constant dense<0.000000e+00> : vector<16x32xf32>
    %242 = tpu.matmul %239, %241, %cst_97 {dimension_numbers = #tpu.dot_dimension_numbers<[1], [0], [0], [1], [0, 0, 1, 1], [], []>} : vector<16x16xf32>, vector<16x32xf32>, vector<16x32xf32> -> vector<16x32xf32>
    %243 = arith.addf %189, %242 : vector<16x32xf32>
    %c4 = arith.constant 4 : index
    %c0_98 = arith.constant 0 : index
    %c0_99 = arith.constant 0 : index
    %244 = vector.load %arg3[%c4, %c0_98, %c0_99] : memref<8x32x16xf32, #tpu.memory_space<vmem>>, vector<1x32x16xf32>
    %245 = vector.shape_cast %244 : vector<1x32x16xf32> to vector<32x16xf32>
    %cst_100 = arith.constant dense<0.000000e+00> : vector<16x16xf32>
    %246 = tpu.matmul %24, %245, %cst_100 {dimension_numbers = #tpu.dot_dimension_numbers<[1], [0], [0], [1], [0, 0, 1, 1], [], []>} : vector<16x32xf32>, vector<32x16xf32>, vector<16x16xf32> -> vector<16x16xf32>
    %c4_101 = arith.constant 4 : index
    %c0_102 = arith.constant 0 : index
    %c0_103 = arith.constant 0 : index
    %247 = vector.load %arg4[%c4_101, %c0_102, %c0_103] : memref<8x1x16xf32, #tpu.memory_space<vmem>>, vector<1x1x16xf32>
    %248 = vector.shape_cast %247 : vector<1x1x16xf32> to vector<1x16xf32>
    %249 = vector.broadcast %248 : vector<1x16xf32> to vector<16x16xf32>
    %250 = arith.addf %246, %249 : vector<16x16xf32>
    %cst_104 = arith.constant dense<0.000000e+00> : vector<16x64xf32>
    %251 = tpu.matmul %250, %25, %cst_104 {dimension_numbers = #tpu.dot_dimension_numbers<[1], [0], [0], [1], [0, 0, 1, 1], [], []>} : vector<16x16xf32>, vector<16x64xf32>, vector<16x64xf32> -> vector<16x64xf32>
    %252 = vector.broadcast %26 : vector<1x64xf32> to vector<16x64xf32>
    %253 = arith.addf %251, %252 : vector<16x64xf32>
    %254 = vector.extract_strided_slice %253 {offsets = [0, 0], sizes = [8, 64], strides = [1, 1]} : vector<16x64xf32> to vector<8x64xf32>
    %cst_105 = arith.constant dense<0xFF800000> : vector<64xf32>
    %255 = vector.multi_reduction <maximumf>, %254, %cst_105 [0] : vector<8x64xf32> to vector<64xf32>
    %256 = vector.shape_cast %255 : vector<64xf32> to vector<1x64xf32>
    %257 = vector.broadcast %256 : vector<1x64xf32> to vector<8x64xf32>
    %258 = arith.subf %254, %257 : vector<8x64xf32>
    %259 = math.exp %258 : vector<8x64xf32>
    %cst_106 = arith.constant dense<0.000000e+00> : vector<64xf32>
    %260 = vector.multi_reduction <add>, %259, %cst_106 [0] : vector<8x64xf32> to vector<64xf32>
    %261 = vector.shape_cast %260 : vector<64xf32> to vector<1x64xf32>
    %262 = tpu.reciprocal %261 {approx = true} : vector<1x64xf32> -> vector<1x64xf32>
    %263 = vector.broadcast %262 : vector<1x64xf32> to vector<8x64xf32>
    %264 = arith.mulf %259, %263 : vector<8x64xf32>
    %cst_107 = arith.constant dense<0.000000e+00> : vector<8xf32>
    %265 = vector.multi_reduction <add>, %264, %cst_107 [1] : vector<8x64xf32> to vector<8xf32>
    %266 = vector.shape_cast %265 : vector<8xf32> to vector<8x1xf32>
    %cst_108 = arith.constant 9.99999971E-10 : f32
    %267 = vector.broadcast %cst_108 : f32 to vector<8x1xf32>
    %268 = arith.addf %267, %266 : vector<8x1xf32>
    %269 = tpu.reciprocal %268 {approx = true} : vector<8x1xf32> -> vector<8x1xf32>
    %270 = vector.broadcast %269 : vector<8x1xf32> to vector<8x64xf32>
    %271 = arith.mulf %264, %270 : vector<8x64xf32>
    %272 = vector.extract_strided_slice %253 {offsets = [8, 0], sizes = [8, 64], strides = [1, 1]} : vector<16x64xf32> to vector<8x64xf32>
    %cst_109 = arith.constant dense<0xFF800000> : vector<64xf32>
    %273 = vector.multi_reduction <maximumf>, %272, %cst_109 [0] : vector<8x64xf32> to vector<64xf32>
    %274 = vector.shape_cast %273 : vector<64xf32> to vector<1x64xf32>
    %275 = vector.broadcast %274 : vector<1x64xf32> to vector<8x64xf32>
    %276 = arith.subf %272, %275 : vector<8x64xf32>
    %277 = math.exp %276 : vector<8x64xf32>
    %cst_110 = arith.constant dense<0.000000e+00> : vector<64xf32>
    %278 = vector.multi_reduction <add>, %277, %cst_110 [0] : vector<8x64xf32> to vector<64xf32>
    %279 = vector.shape_cast %278 : vector<64xf32> to vector<1x64xf32>
    %280 = tpu.reciprocal %279 {approx = true} : vector<1x64xf32> -> vector<1x64xf32>
    %281 = vector.broadcast %280 : vector<1x64xf32> to vector<8x64xf32>
    %282 = arith.mulf %277, %281 : vector<8x64xf32>
    %cst_111 = arith.constant dense<0.000000e+00> : vector<8xf32>
    %283 = vector.multi_reduction <add>, %282, %cst_111 [1] : vector<8x64xf32> to vector<8xf32>
    %284 = vector.shape_cast %283 : vector<8xf32> to vector<8x1xf32>
    %cst_112 = arith.constant 9.99999971E-10 : f32
    %285 = vector.broadcast %cst_112 : f32 to vector<8x1xf32>
    %286 = arith.addf %285, %284 : vector<8x1xf32>
    %287 = tpu.reciprocal %286 {approx = true} : vector<8x1xf32> -> vector<8x1xf32>
    %288 = vector.broadcast %287 : vector<8x1xf32> to vector<8x64xf32>
    %289 = arith.mulf %282, %288 : vector<8x64xf32>
    %290 = tpu.concatenate %271, %289 in 0 : vector<8x64xf32>, vector<8x64xf32> -> vector<16x64xf32>
    %cst_113 = arith.constant dense<0.000000e+00> : vector<16x16xf32>
    %291 = tpu.matmul %290, %27, %cst_113 {dimension_numbers = #tpu.dot_dimension_numbers<[1], [0], [0], [1], [0, 0, 1, 1], [], []>} : vector<16x64xf32>, vector<64x16xf32>, vector<16x16xf32> -> vector<16x16xf32>
    %292 = vector.broadcast %28 : vector<1x16xf32> to vector<16x16xf32>
    %293 = arith.addf %291, %292 : vector<16x16xf32>
    %c4_114 = arith.constant 4 : index
    %c0_115 = arith.constant 0 : index
    %c0_116 = arith.constant 0 : index
    %294 = vector.load %arg9[%c4_114, %c0_115, %c0_116] : memref<8x16x32xf32, #tpu.memory_space<vmem>>, vector<1x16x32xf32>
    %295 = vector.shape_cast %294 : vector<1x16x32xf32> to vector<16x32xf32>
    %cst_117 = arith.constant dense<0.000000e+00> : vector<16x32xf32>
    %296 = tpu.matmul %293, %295, %cst_117 {dimension_numbers = #tpu.dot_dimension_numbers<[1], [0], [0], [1], [0, 0, 1, 1], [], []>} : vector<16x16xf32>, vector<16x32xf32>, vector<16x32xf32> -> vector<16x32xf32>
    %297 = arith.addf %243, %296 : vector<16x32xf32>
    %c5 = arith.constant 5 : index
    %c0_118 = arith.constant 0 : index
    %c0_119 = arith.constant 0 : index
    %298 = vector.load %arg3[%c5, %c0_118, %c0_119] : memref<8x32x16xf32, #tpu.memory_space<vmem>>, vector<1x32x16xf32>
    %299 = vector.shape_cast %298 : vector<1x32x16xf32> to vector<32x16xf32>
    %cst_120 = arith.constant dense<0.000000e+00> : vector<16x16xf32>
    %300 = tpu.matmul %24, %299, %cst_120 {dimension_numbers = #tpu.dot_dimension_numbers<[1], [0], [0], [1], [0, 0, 1, 1], [], []>} : vector<16x32xf32>, vector<32x16xf32>, vector<16x16xf32> -> vector<16x16xf32>
    %c5_121 = arith.constant 5 : index
    %c0_122 = arith.constant 0 : index
    %c0_123 = arith.constant 0 : index
    %301 = vector.load %arg4[%c5_121, %c0_122, %c0_123] : memref<8x1x16xf32, #tpu.memory_space<vmem>>, vector<1x1x16xf32>
    %302 = vector.shape_cast %301 : vector<1x1x16xf32> to vector<1x16xf32>
    %303 = vector.broadcast %302 : vector<1x16xf32> to vector<16x16xf32>
    %304 = arith.addf %300, %303 : vector<16x16xf32>
    %cst_124 = arith.constant dense<0.000000e+00> : vector<16x64xf32>
    %305 = tpu.matmul %304, %25, %cst_124 {dimension_numbers = #tpu.dot_dimension_numbers<[1], [0], [0], [1], [0, 0, 1, 1], [], []>} : vector<16x16xf32>, vector<16x64xf32>, vector<16x64xf32> -> vector<16x64xf32>
    %306 = vector.broadcast %26 : vector<1x64xf32> to vector<16x64xf32>
    %307 = arith.addf %305, %306 : vector<16x64xf32>
    %308 = vector.extract_strided_slice %307 {offsets = [0, 0], sizes = [8, 64], strides = [1, 1]} : vector<16x64xf32> to vector<8x64xf32>
    %cst_125 = arith.constant dense<0xFF800000> : vector<64xf32>
    %309 = vector.multi_reduction <maximumf>, %308, %cst_125 [0] : vector<8x64xf32> to vector<64xf32>
    %310 = vector.shape_cast %309 : vector<64xf32> to vector<1x64xf32>
    %311 = vector.broadcast %310 : vector<1x64xf32> to vector<8x64xf32>
    %312 = arith.subf %308, %311 : vector<8x64xf32>
    %313 = math.exp %312 : vector<8x64xf32>
    %cst_126 = arith.constant dense<0.000000e+00> : vector<64xf32>
    %314 = vector.multi_reduction <add>, %313, %cst_126 [0] : vector<8x64xf32> to vector<64xf32>
    %315 = vector.shape_cast %314 : vector<64xf32> to vector<1x64xf32>
    %316 = tpu.reciprocal %315 {approx = true} : vector<1x64xf32> -> vector<1x64xf32>
    %317 = vector.broadcast %316 : vector<1x64xf32> to vector<8x64xf32>
    %318 = arith.mulf %313, %317 : vector<8x64xf32>
    %cst_127 = arith.constant dense<0.000000e+00> : vector<8xf32>
    %319 = vector.multi_reduction <add>, %318, %cst_127 [1] : vector<8x64xf32> to vector<8xf32>
    %320 = vector.shape_cast %319 : vector<8xf32> to vector<8x1xf32>
    %cst_128 = arith.constant 9.99999971E-10 : f32
    %321 = vector.broadcast %cst_128 : f32 to vector<8x1xf32>
    %322 = arith.addf %321, %320 : vector<8x1xf32>
    %323 = tpu.reciprocal %322 {approx = true} : vector<8x1xf32> -> vector<8x1xf32>
    %324 = vector.broadcast %323 : vector<8x1xf32> to vector<8x64xf32>
    %325 = arith.mulf %318, %324 : vector<8x64xf32>
    %326 = vector.extract_strided_slice %307 {offsets = [8, 0], sizes = [8, 64], strides = [1, 1]} : vector<16x64xf32> to vector<8x64xf32>
    %cst_129 = arith.constant dense<0xFF800000> : vector<64xf32>
    %327 = vector.multi_reduction <maximumf>, %326, %cst_129 [0] : vector<8x64xf32> to vector<64xf32>
    %328 = vector.shape_cast %327 : vector<64xf32> to vector<1x64xf32>
    %329 = vector.broadcast %328 : vector<1x64xf32> to vector<8x64xf32>
    %330 = arith.subf %326, %329 : vector<8x64xf32>
    %331 = math.exp %330 : vector<8x64xf32>
    %cst_130 = arith.constant dense<0.000000e+00> : vector<64xf32>
    %332 = vector.multi_reduction <add>, %331, %cst_130 [0] : vector<8x64xf32> to vector<64xf32>
    %333 = vector.shape_cast %332 : vector<64xf32> to vector<1x64xf32>
    %334 = tpu.reciprocal %333 {approx = true} : vector<1x64xf32> -> vector<1x64xf32>
    %335 = vector.broadcast %334 : vector<1x64xf32> to vector<8x64xf32>
    %336 = arith.mulf %331, %335 : vector<8x64xf32>
    %cst_131 = arith.constant dense<0.000000e+00> : vector<8xf32>
    %337 = vector.multi_reduction <add>, %336, %cst_131 [1] : vector<8x64xf32> to vector<8xf32>
    %338 = vector.shape_cast %337 : vector<8xf32> to vector<8x1xf32>
    %cst_132 = arith.constant 9.99999971E-10 : f32
    %339 = vector.broadcast %cst_132 : f32 to vector<8x1xf32>
    %340 = arith.addf %339, %338 : vector<8x1xf32>
    %341 = tpu.reciprocal %340 {approx = true} : vector<8x1xf32> -> vector<8x1xf32>
    %342 = vector.broadcast %341 : vector<8x1xf32> to vector<8x64xf32>
    %343 = arith.mulf %336, %342 : vector<8x64xf32>
    %344 = tpu.concatenate %325, %343 in 0 : vector<8x64xf32>, vector<8x64xf32> -> vector<16x64xf32>
    %cst_133 = arith.constant dense<0.000000e+00> : vector<16x16xf32>
    %345 = tpu.matmul %344, %27, %cst_133 {dimension_numbers = #tpu.dot_dimension_numbers<[1], [0], [0], [1], [0, 0, 1, 1], [], []>} : vector<16x64xf32>, vector<64x16xf32>, vector<16x16xf32> -> vector<16x16xf32>
    %346 = vector.broadcast %28 : vector<1x16xf32> to vector<16x16xf32>
    %347 = arith.addf %345, %346 : vector<16x16xf32>
    %c5_134 = arith.constant 5 : index
    %c0_135 = arith.constant 0 : index
    %c0_136 = arith.constant 0 : index
    %348 = vector.load %arg9[%c5_134, %c0_135, %c0_136] : memref<8x16x32xf32, #tpu.memory_space<vmem>>, vector<1x16x32xf32>
    %349 = vector.shape_cast %348 : vector<1x16x32xf32> to vector<16x32xf32>
    %cst_137 = arith.constant dense<0.000000e+00> : vector<16x32xf32>
    %350 = tpu.matmul %347, %349, %cst_137 {dimension_numbers = #tpu.dot_dimension_numbers<[1], [0], [0], [1], [0, 0, 1, 1], [], []>} : vector<16x16xf32>, vector<16x32xf32>, vector<16x32xf32> -> vector<16x32xf32>
    %351 = arith.addf %297, %350 : vector<16x32xf32>
    %c6 = arith.constant 6 : index
    %c0_138 = arith.constant 0 : index
    %c0_139 = arith.constant 0 : index
    %352 = vector.load %arg3[%c6, %c0_138, %c0_139] : memref<8x32x16xf32, #tpu.memory_space<vmem>>, vector<1x32x16xf32>
    %353 = vector.shape_cast %352 : vector<1x32x16xf32> to vector<32x16xf32>
    %cst_140 = arith.constant dense<0.000000e+00> : vector<16x16xf32>
    %354 = tpu.matmul %24, %353, %cst_140 {dimension_numbers = #tpu.dot_dimension_numbers<[1], [0], [0], [1], [0, 0, 1, 1], [], []>} : vector<16x32xf32>, vector<32x16xf32>, vector<16x16xf32> -> vector<16x16xf32>
    %c6_141 = arith.constant 6 : index
    %c0_142 = arith.constant 0 : index
    %c0_143 = arith.constant 0 : index
    %355 = vector.load %arg4[%c6_141, %c0_142, %c0_143] : memref<8x1x16xf32, #tpu.memory_space<vmem>>, vector<1x1x16xf32>
    %356 = vector.shape_cast %355 : vector<1x1x16xf32> to vector<1x16xf32>
    %357 = vector.broadcast %356 : vector<1x16xf32> to vector<16x16xf32>
    %358 = arith.addf %354, %357 : vector<16x16xf32>
    %cst_144 = arith.constant dense<0.000000e+00> : vector<16x64xf32>
    %359 = tpu.matmul %358, %25, %cst_144 {dimension_numbers = #tpu.dot_dimension_numbers<[1], [0], [0], [1], [0, 0, 1, 1], [], []>} : vector<16x16xf32>, vector<16x64xf32>, vector<16x64xf32> -> vector<16x64xf32>
    %360 = vector.broadcast %26 : vector<1x64xf32> to vector<16x64xf32>
    %361 = arith.addf %359, %360 : vector<16x64xf32>
    %362 = vector.extract_strided_slice %361 {offsets = [0, 0], sizes = [8, 64], strides = [1, 1]} : vector<16x64xf32> to vector<8x64xf32>
    %cst_145 = arith.constant dense<0xFF800000> : vector<64xf32>
    %363 = vector.multi_reduction <maximumf>, %362, %cst_145 [0] : vector<8x64xf32> to vector<64xf32>
    %364 = vector.shape_cast %363 : vector<64xf32> to vector<1x64xf32>
    %365 = vector.broadcast %364 : vector<1x64xf32> to vector<8x64xf32>
    %366 = arith.subf %362, %365 : vector<8x64xf32>
    %367 = math.exp %366 : vector<8x64xf32>
    %cst_146 = arith.constant dense<0.000000e+00> : vector<64xf32>
    %368 = vector.multi_reduction <add>, %367, %cst_146 [0] : vector<8x64xf32> to vector<64xf32>
    %369 = vector.shape_cast %368 : vector<64xf32> to vector<1x64xf32>
    %370 = tpu.reciprocal %369 {approx = true} : vector<1x64xf32> -> vector<1x64xf32>
    %371 = vector.broadcast %370 : vector<1x64xf32> to vector<8x64xf32>
    %372 = arith.mulf %367, %371 : vector<8x64xf32>
    %cst_147 = arith.constant dense<0.000000e+00> : vector<8xf32>
    %373 = vector.multi_reduction <add>, %372, %cst_147 [1] : vector<8x64xf32> to vector<8xf32>
    %374 = vector.shape_cast %373 : vector<8xf32> to vector<8x1xf32>
    %cst_148 = arith.constant 9.99999971E-10 : f32
    %375 = vector.broadcast %cst_148 : f32 to vector<8x1xf32>
    %376 = arith.addf %375, %374 : vector<8x1xf32>
    %377 = tpu.reciprocal %376 {approx = true} : vector<8x1xf32> -> vector<8x1xf32>
    %378 = vector.broadcast %377 : vector<8x1xf32> to vector<8x64xf32>
    %379 = arith.mulf %372, %378 : vector<8x64xf32>
    %380 = vector.extract_strided_slice %361 {offsets = [8, 0], sizes = [8, 64], strides = [1, 1]} : vector<16x64xf32> to vector<8x64xf32>
    %cst_149 = arith.constant dense<0xFF800000> : vector<64xf32>
    %381 = vector.multi_reduction <maximumf>, %380, %cst_149 [0] : vector<8x64xf32> to vector<64xf32>
    %382 = vector.shape_cast %381 : vector<64xf32> to vector<1x64xf32>
    %383 = vector.broadcast %382 : vector<1x64xf32> to vector<8x64xf32>
    %384 = arith.subf %380, %383 : vector<8x64xf32>
    %385 = math.exp %384 : vector<8x64xf32>
    %cst_150 = arith.constant dense<0.000000e+00> : vector<64xf32>
    %386 = vector.multi_reduction <add>, %385, %cst_150 [0] : vector<8x64xf32> to vector<64xf32>
    %387 = vector.shape_cast %386 : vector<64xf32> to vector<1x64xf32>
    %388 = tpu.reciprocal %387 {approx = true} : vector<1x64xf32> -> vector<1x64xf32>
    %389 = vector.broadcast %388 : vector<1x64xf32> to vector<8x64xf32>
    %390 = arith.mulf %385, %389 : vector<8x64xf32>
    %cst_151 = arith.constant dense<0.000000e+00> : vector<8xf32>
    %391 = vector.multi_reduction <add>, %390, %cst_151 [1] : vector<8x64xf32> to vector<8xf32>
    %392 = vector.shape_cast %391 : vector<8xf32> to vector<8x1xf32>
    %cst_152 = arith.constant 9.99999971E-10 : f32
    %393 = vector.broadcast %cst_152 : f32 to vector<8x1xf32>
    %394 = arith.addf %393, %392 : vector<8x1xf32>
    %395 = tpu.reciprocal %394 {approx = true} : vector<8x1xf32> -> vector<8x1xf32>
    %396 = vector.broadcast %395 : vector<8x1xf32> to vector<8x64xf32>
    %397 = arith.mulf %390, %396 : vector<8x64xf32>
    %398 = tpu.concatenate %379, %397 in 0 : vector<8x64xf32>, vector<8x64xf32> -> vector<16x64xf32>
    %cst_153 = arith.constant dense<0.000000e+00> : vector<16x16xf32>
    %399 = tpu.matmul %398, %27, %cst_153 {dimension_numbers = #tpu.dot_dimension_numbers<[1], [0], [0], [1], [0, 0, 1, 1], [], []>} : vector<16x64xf32>, vector<64x16xf32>, vector<16x16xf32> -> vector<16x16xf32>
    %400 = vector.broadcast %28 : vector<1x16xf32> to vector<16x16xf32>
    %401 = arith.addf %399, %400 : vector<16x16xf32>
    %c6_154 = arith.constant 6 : index
    %c0_155 = arith.constant 0 : index
    %c0_156 = arith.constant 0 : index
    %402 = vector.load %arg9[%c6_154, %c0_155, %c0_156] : memref<8x16x32xf32, #tpu.memory_space<vmem>>, vector<1x16x32xf32>
    %403 = vector.shape_cast %402 : vector<1x16x32xf32> to vector<16x32xf32>
    %cst_157 = arith.constant dense<0.000000e+00> : vector<16x32xf32>
    %404 = tpu.matmul %401, %403, %cst_157 {dimension_numbers = #tpu.dot_dimension_numbers<[1], [0], [0], [1], [0, 0, 1, 1], [], []>} : vector<16x16xf32>, vector<16x32xf32>, vector<16x32xf32> -> vector<16x32xf32>
    %405 = arith.addf %351, %404 : vector<16x32xf32>
    %c7 = arith.constant 7 : index
    %c0_158 = arith.constant 0 : index
    %c0_159 = arith.constant 0 : index
    %406 = vector.load %arg3[%c7, %c0_158, %c0_159] : memref<8x32x16xf32, #tpu.memory_space<vmem>>, vector<1x32x16xf32>
    %407 = vector.shape_cast %406 : vector<1x32x16xf32> to vector<32x16xf32>
    %cst_160 = arith.constant dense<0.000000e+00> : vector<16x16xf32>
    %408 = tpu.matmul %24, %407, %cst_160 {dimension_numbers = #tpu.dot_dimension_numbers<[1], [0], [0], [1], [0, 0, 1, 1], [], []>} : vector<16x32xf32>, vector<32x16xf32>, vector<16x16xf32> -> vector<16x16xf32>
    %c7_161 = arith.constant 7 : index
    %c0_162 = arith.constant 0 : index
    %c0_163 = arith.constant 0 : index
    %409 = vector.load %arg4[%c7_161, %c0_162, %c0_163] : memref<8x1x16xf32, #tpu.memory_space<vmem>>, vector<1x1x16xf32>
    %410 = vector.shape_cast %409 : vector<1x1x16xf32> to vector<1x16xf32>
    %411 = vector.broadcast %410 : vector<1x16xf32> to vector<16x16xf32>
    %412 = arith.addf %408, %411 : vector<16x16xf32>
    %cst_164 = arith.constant dense<0.000000e+00> : vector<16x64xf32>
    %413 = tpu.matmul %412, %25, %cst_164 {dimension_numbers = #tpu.dot_dimension_numbers<[1], [0], [0], [1], [0, 0, 1, 1], [], []>} : vector<16x16xf32>, vector<16x64xf32>, vector<16x64xf32> -> vector<16x64xf32>
    %414 = vector.broadcast %26 : vector<1x64xf32> to vector<16x64xf32>
    %415 = arith.addf %413, %414 : vector<16x64xf32>
    %416 = vector.extract_strided_slice %415 {offsets = [0, 0], sizes = [8, 64], strides = [1, 1]} : vector<16x64xf32> to vector<8x64xf32>
    %cst_165 = arith.constant dense<0xFF800000> : vector<64xf32>
    %417 = vector.multi_reduction <maximumf>, %416, %cst_165 [0] : vector<8x64xf32> to vector<64xf32>
    %418 = vector.shape_cast %417 : vector<64xf32> to vector<1x64xf32>
    %419 = vector.broadcast %418 : vector<1x64xf32> to vector<8x64xf32>
    %420 = arith.subf %416, %419 : vector<8x64xf32>
    %421 = math.exp %420 : vector<8x64xf32>
    %cst_166 = arith.constant dense<0.000000e+00> : vector<64xf32>
    %422 = vector.multi_reduction <add>, %421, %cst_166 [0] : vector<8x64xf32> to vector<64xf32>
    %423 = vector.shape_cast %422 : vector<64xf32> to vector<1x64xf32>
    %424 = tpu.reciprocal %423 {approx = true} : vector<1x64xf32> -> vector<1x64xf32>
    %425 = vector.broadcast %424 : vector<1x64xf32> to vector<8x64xf32>
    %426 = arith.mulf %421, %425 : vector<8x64xf32>
    %cst_167 = arith.constant dense<0.000000e+00> : vector<8xf32>
    %427 = vector.multi_reduction <add>, %426, %cst_167 [1] : vector<8x64xf32> to vector<8xf32>
    %428 = vector.shape_cast %427 : vector<8xf32> to vector<8x1xf32>
    %cst_168 = arith.constant 9.99999971E-10 : f32
    %429 = vector.broadcast %cst_168 : f32 to vector<8x1xf32>
    %430 = arith.addf %429, %428 : vector<8x1xf32>
    %431 = tpu.reciprocal %430 {approx = true} : vector<8x1xf32> -> vector<8x1xf32>
    %432 = vector.broadcast %431 : vector<8x1xf32> to vector<8x64xf32>
    %433 = arith.mulf %426, %432 : vector<8x64xf32>
    %434 = vector.extract_strided_slice %415 {offsets = [8, 0], sizes = [8, 64], strides = [1, 1]} : vector<16x64xf32> to vector<8x64xf32>
    %cst_169 = arith.constant dense<0xFF800000> : vector<64xf32>
    %435 = vector.multi_reduction <maximumf>, %434, %cst_169 [0] : vector<8x64xf32> to vector<64xf32>
    %436 = vector.shape_cast %435 : vector<64xf32> to vector<1x64xf32>
    %437 = vector.broadcast %436 : vector<1x64xf32> to vector<8x64xf32>
    %438 = arith.subf %434, %437 : vector<8x64xf32>
    %439 = math.exp %438 : vector<8x64xf32>
    %cst_170 = arith.constant dense<0.000000e+00> : vector<64xf32>
    %440 = vector.multi_reduction <add>, %439, %cst_170 [0] : vector<8x64xf32> to vector<64xf32>
    %441 = vector.shape_cast %440 : vector<64xf32> to vector<1x64xf32>
    %442 = tpu.reciprocal %441 {approx = true} : vector<1x64xf32> -> vector<1x64xf32>
    %443 = vector.broadcast %442 : vector<1x64xf32> to vector<8x64xf32>
    %444 = arith.mulf %439, %443 : vector<8x64xf32>
    %cst_171 = arith.constant dense<0.000000e+00> : vector<8xf32>
    %445 = vector.multi_reduction <add>, %444, %cst_171 [1] : vector<8x64xf32> to vector<8xf32>
    %446 = vector.shape_cast %445 : vector<8xf32> to vector<8x1xf32>
    %cst_172 = arith.constant 9.99999971E-10 : f32
    %447 = vector.broadcast %cst_172 : f32 to vector<8x1xf32>
    %448 = arith.addf %447, %446 : vector<8x1xf32>
    %449 = tpu.reciprocal %448 {approx = true} : vector<8x1xf32> -> vector<8x1xf32>
    %450 = vector.broadcast %449 : vector<8x1xf32> to vector<8x64xf32>
    %451 = arith.mulf %444, %450 : vector<8x64xf32>
    %452 = tpu.concatenate %433, %451 in 0 : vector<8x64xf32>, vector<8x64xf32> -> vector<16x64xf32>
    %cst_173 = arith.constant dense<0.000000e+00> : vector<16x16xf32>
    %453 = tpu.matmul %452, %27, %cst_173 {dimension_numbers = #tpu.dot_dimension_numbers<[1], [0], [0], [1], [0, 0, 1, 1], [], []>} : vector<16x64xf32>, vector<64x16xf32>, vector<16x16xf32> -> vector<16x16xf32>
    %454 = vector.broadcast %28 : vector<1x16xf32> to vector<16x16xf32>
    %455 = arith.addf %453, %454 : vector<16x16xf32>
    %c7_174 = arith.constant 7 : index
    %c0_175 = arith.constant 0 : index
    %c0_176 = arith.constant 0 : index
    %456 = vector.load %arg9[%c7_174, %c0_175, %c0_176] : memref<8x16x32xf32, #tpu.memory_space<vmem>>, vector<1x16x32xf32>
    %457 = vector.shape_cast %456 : vector<1x16x32xf32> to vector<16x32xf32>
    %cst_177 = arith.constant dense<0.000000e+00> : vector<16x32xf32>
    %458 = tpu.matmul %455, %457, %cst_177 {dimension_numbers = #tpu.dot_dimension_numbers<[1], [0], [0], [1], [0, 0, 1, 1], [], []>} : vector<16x16xf32>, vector<16x32xf32>, vector<16x32xf32> -> vector<16x32xf32>
    %459 = arith.addf %405, %458 : vector<16x32xf32>
    %c0_178 = arith.constant 0 : index
    %c0_179 = arith.constant 0 : index
    %460 = vector.load %arg10[%c0_178, %c0_179] : memref<1x32xf32, #tpu.memory_space<vmem>>, vector<1x32xf32>
    %461 = vector.broadcast %460 : vector<1x32xf32> to vector<16x32xf32>
    %462 = arith.addf %459, %461 : vector<16x32xf32>
    %463 = arith.addf %0, %462 : vector<16x32xf32>
    %c0_180 = arith.constant 0 : index
    %c0_181 = arith.constant 0 : index
    %464 = vector.load %arg11[%c0_180, %c0_181] : memref<1x32xf32, #tpu.memory_space<vmem>>, vector<1x32xf32>
    %c0_182 = arith.constant 0 : index
    %c0_183 = arith.constant 0 : index
    %465 = vector.load %arg12[%c0_182, %c0_183] : memref<1x32xf32, #tpu.memory_space<vmem>>, vector<1x32xf32>
    %cst_184 = arith.constant dense<0.000000e+00> : vector<16xf32>
    %466 = vector.multi_reduction <add>, %463, %cst_184 [1] : vector<16x32xf32> to vector<16xf32>
    %467 = vector.shape_cast %466 : vector<16xf32> to vector<16x1xf32>
    %cst_185 = arith.constant 3.200000e+01 : f32
    %468 = vector.broadcast %cst_185 : f32 to vector<16x1xf32>
    %469 = arith.divf %467, %468 : vector<16x1xf32>
    %470 = vector.broadcast %469 : vector<16x1xf32> to vector<16x32xf32>
    %471 = arith.subf %463, %470 : vector<16x32xf32>
    %472 = arith.mulf %471, %471 : vector<16x32xf32>
    %cst_186 = arith.constant dense<0.000000e+00> : vector<16xf32>
    %473 = vector.multi_reduction <add>, %472, %cst_186 [1] : vector<16x32xf32> to vector<16xf32>
    %474 = vector.shape_cast %473 : vector<16xf32> to vector<16x1xf32>
    %cst_187 = arith.constant 3.200000e+01 : f32
    %475 = vector.broadcast %cst_187 : f32 to vector<16x1xf32>
    %476 = arith.divf %474, %475 : vector<16x1xf32>
    %477 = vector.broadcast %469 : vector<16x1xf32> to vector<16x32xf32>
    %478 = arith.subf %463, %477 : vector<16x32xf32>
    %cst_188 = arith.constant 9.99999974E-6 : f32
    %479 = vector.broadcast %cst_188 : f32 to vector<16x1xf32>
    %480 = arith.addf %476, %479 : vector<16x1xf32>
    %481 = math.rsqrt %480 : vector<16x1xf32>
    %482 = vector.broadcast %481 : vector<16x1xf32> to vector<16x32xf32>
    %483 = arith.mulf %478, %482 : vector<16x32xf32>
    %484 = vector.broadcast %464 : vector<1x32xf32> to vector<16x32xf32>
    %485 = arith.mulf %483, %484 : vector<16x32xf32>
    %486 = vector.broadcast %465 : vector<1x32xf32> to vector<16x32xf32>
    %487 = arith.addf %485, %486 : vector<16x32xf32>
    %c0_189 = arith.constant 0 : index
    %c0_190 = arith.constant 0 : index
    %488 = vector.load %arg13[%c0_189, %c0_190] : memref<32x128xf32, #tpu.memory_space<vmem>>, vector<32x128xf32>
    %cst_191 = arith.constant dense<0.000000e+00> : vector<16x128xf32>
    %489 = tpu.matmul %487, %488, %cst_191 {dimension_numbers = #tpu.dot_dimension_numbers<[1], [0], [0], [1], [0, 0, 1, 1], [], []>} : vector<16x32xf32>, vector<32x128xf32>, vector<16x128xf32> -> vector<16x128xf32>
    %c0_192 = arith.constant 0 : index
    %c0_193 = arith.constant 0 : index
    %490 = vector.load %arg14[%c0_192, %c0_193] : memref<1x128xf32, #tpu.memory_space<vmem>>, vector<1x128xf32>
    %491 = vector.broadcast %490 : vector<1x128xf32> to vector<16x128xf32>
    %492 = arith.addf %489, %491 : vector<16x128xf32>
    %cst_194 = arith.constant 5.000000e-01 : f32
    %493 = vector.broadcast %cst_194 : f32 to vector<16x128xf32>
    %494 = arith.mulf %493, %492 : vector<16x128xf32>
    %cst_195 = arith.constant 4.471500e-02 : f32
    %495 = vector.broadcast %cst_195 : f32 to vector<16x128xf32>
    %496 = arith.mulf %495, %492 : vector<16x128xf32>
    %497 = arith.mulf %496, %492 : vector<16x128xf32>
    %498 = arith.mulf %497, %492 : vector<16x128xf32>
    %499 = arith.addf %492, %498 : vector<16x128xf32>
    %cst_196 = arith.constant 0.797884583 : f32
    %500 = vector.broadcast %cst_196 : f32 to vector<16x128xf32>
    %501 = arith.mulf %500, %499 : vector<16x128xf32>
    %502 = math.tanh %501 : vector<16x128xf32>
    %cst_197 = arith.constant 1.000000e+00 : f32
    %503 = vector.broadcast %cst_197 : f32 to vector<16x128xf32>
    %504 = arith.addf %503, %502 : vector<16x128xf32>
    %505 = arith.mulf %494, %504 : vector<16x128xf32>
    %c0_198 = arith.constant 0 : index
    %c0_199 = arith.constant 0 : index
    %506 = vector.load %arg15[%c0_198, %c0_199] : memref<128x32xf32, #tpu.memory_space<vmem>>, vector<128x32xf32>
    %cst_200 = arith.constant dense<0.000000e+00> : vector<16x32xf32>
    %507 = tpu.matmul %505, %506, %cst_200 {dimension_numbers = #tpu.dot_dimension_numbers<[1], [0], [0], [1], [0, 0, 1, 1], [], []>} : vector<16x128xf32>, vector<128x32xf32>, vector<16x32xf32> -> vector<16x32xf32>
    %c0_201 = arith.constant 0 : index
    %c0_202 = arith.constant 0 : index
    %508 = vector.load %arg16[%c0_201, %c0_202] : memref<1x32xf32, #tpu.memory_space<vmem>>, vector<1x32xf32>
    %509 = vector.broadcast %508 : vector<1x32xf32> to vector<16x32xf32>
    %510 = arith.addf %507, %509 : vector<16x32xf32>
    %511 = arith.addf %463, %510 : vector<16x32xf32>
    %c0_203 = arith.constant 0 : index
    %c0_204 = arith.constant 0 : index
    %512 = vector.load %arg17[%c0_203, %c0_204] : memref<16x32xf32, #tpu.memory_space<vmem>>, vector<16x32xf32>
    tpu.vector_store %arg17[%c0_203, %c0_204], %511 {strides = array<i32>} : memref<16x32xf32, #tpu.memory_space<vmem>>, vector<16x32xf32>,
    return
  }
}

</mosaic_0001>

<llo_original>
// kernel: tpu_custom_call.1
$region0: #{tpu_custom_call.1}
  #allocation0 [shape = 'u32[]', space=smem, size = 0x4, offset = 0x4, fixed_abs, tag = 'smem constant byte address 0x4 - core index']
  #allocation1 [shape = 'u32[144,128]{1,0:T(1,128)}', space=vmem, size = 0x12000, scoped, tag = 'internal scratch']
  %s0 = inlined_call_operand.vmem [shape: f32[16,32], index: 0, kind: input, shape index: {}]
  %s1 = inlined_call_operand.vmem [shape: f32[1,32], index: 1, kind: input, shape index: {}]
  %s2 = inlined_call_operand.vmem [shape: f32[1,32], index: 2, kind: input, shape index: {}]
  %s3 = inlined_call_operand.vmem [shape: f32[8,32,16], index: 3, kind: input, shape index: {}]
  %s4 = inlined_call_operand.vmem [shape: f32[8,1,16], index: 4, kind: input, shape index: {}]
  %s5 = inlined_call_operand.vmem [shape: f32[16,64], index: 5, kind: input, shape index: {}]
  %s6 = inlined_call_operand.vmem [shape: f32[1,64], index: 6, kind: input, shape index: {}]
  %s7 = inlined_call_operand.vmem [shape: f32[64,16], index: 7, kind: input, shape index: {}]
  %s8 = inlined_call_operand.vmem [shape: f32[1,16], index: 8, kind: input, shape index: {}]
  %s9 = inlined_call_operand.vmem [shape: f32[8,16,32], index: 9, kind: input, shape index: {}]
  %s10 = inlined_call_operand.vmem [shape: f32[1,32], index: 10, kind: input, shape index: {}]
  %s11 = inlined_call_operand.vmem [shape: f32[1,32], index: 11, kind: input, shape index: {}]
  %s12 = inlined_call_operand.vmem [shape: f32[1,32], index: 12, kind: input, shape index: {}]
  %s13 = inlined_call_operand.vmem [shape: f32[32,128], index: 13, kind: input, shape index: {}]
  %s14 = inlined_call_operand.vmem [shape: f32[1,128], index: 14, kind: input, shape index: {}]
  %s15 = inlined_call_operand.vmem [shape: f32[128,32], index: 15, kind: input, shape index: {}]
  %s16 = inlined_call_operand.vmem [shape: f32[1,32], index: 16, kind: input, shape index: {}]
  %s17 = inlined_call_operand.hbm [shape: f32[16,32], index: 17, kind: output, shape index: {}]
  %s18 = sld [smem:[#allocation0]]
  $region78: #{tpu_custom_call.1} parent=0
    _
  %s20 = ssub.s32 1, %s18
  %s21 = scalar_select 0, %s20, %s18
  $region1: #{tpu_custom_call.1} parent=0
    #allocation2 [shape = 'u8[8192]{0}', space=vmem, size = 0x2000, scoped, tag = 'output window, operand 0, single buffered']
    #allocation3 [shape = 's32[1]{0}', space=sflag, size = 0x4, scoped, tag = 'scoped memory for tpu_custom_call.1']
    %22 = vsyncpa [#allocation3], 0
    // Predicated region
    $region2: #{tpu_custom_call.1} parent=1 // pred_check
      _
    $region3: #{tpu_custom_call.1} parent=1 // pred_check_branch
      %24 = sbr.rel (0) target = $region5
    $region4: #{tpu_custom_call.1} parent=1 // pred_region
      _
    $region5: #{tpu_custom_call.1} parent=1 // pred_fallthru
      _
    // Predicated region
    $region6: #{tpu_custom_call.1} parent=1 // pred_check
      _
    $region7: #{tpu_custom_call.1} parent=1 // pred_check_branch
      %26 = sbr.rel (0) target = $region9
    $region8: #{tpu_custom_call.1} parent=1 // pred_region
      _
    $region9: #{tpu_custom_call.1} parent=1 // pred_fallthru
      _
    // Predicated region
    $region10: #{tpu_custom_call.1} parent=1 // pred_check
      _
    $region11: #{tpu_custom_call.1} parent=1 // pred_check_branch
      %28 = sbr.rel (0) target = $region13
    $region12: #{tpu_custom_call.1} parent=1 // pred_region
      _
    $region13: #{tpu_custom_call.1} parent=1 // pred_fallthru
      _
    // Predicated region
    $region14: #{tpu_custom_call.1} parent=1 // pred_check
      _
    $region15: #{tpu_custom_call.1} parent=1 // pred_check_branch
      %30 = sbr.rel (0) target = $region17
    $region16: #{tpu_custom_call.1} parent=1 // pred_region
      _
    $region17: #{tpu_custom_call.1} parent=1 // pred_fallthru
      _
    // Predicated region
    $region18: #{tpu_custom_call.1} parent=1 // pred_check
      _
    $region19: #{tpu_custom_call.1} parent=1 // pred_check_branch
      %32 = sbr.rel (0) target = $region21
    $region20: #{tpu_custom_call.1} parent=1 // pred_region
      _
    $region21: #{tpu_custom_call.1} parent=1 // pred_fallthru
      _
    // Predicated region
    $region22: #{tpu_custom_call.1} parent=1 // pred_check
      _
    $region23: #{tpu_custom_call.1} parent=1 // pred_check_branch
      %34 = sbr.rel (0) target = $region25
    $region24: #{tpu_custom_call.1} parent=1 // pred_region
      _
    $region25: #{tpu_custom_call.1} parent=1 // pred_fallthru
      _
    // Predicated region
    $region26: #{tpu_custom_call.1} parent=1 // pred_check
      _
    $region27: #{tpu_custom_call.1} parent=1 // pred_check_branch
      %36 = sbr.rel (0) target = $region29
    $region28: #{tpu_custom_call.1} parent=1 // pred_region
      _
    $region29: #{tpu_custom_call.1} parent=1 // pred_fallthru
      _
    // Predicated region
    $region30: #{tpu_custom_call.1} parent=1 // pred_check
      _
    $region31: #{tpu_custom_call.1} parent=1 // pred_check_branch
      %38 = sbr.rel (0) target = $region33
    $region32: #{tpu_custom_call.1} parent=1 // pred_region
      _
    $region33: #{tpu_custom_call.1} parent=1 // pred_fallthru
      _
    // Predicated region
    $region34: #{tpu_custom_call.1} parent=1 // pred_check
      _
    $region35: #{tpu_custom_call.1} parent=1 // pred_check_branch
      %40 = sbr.rel (0) target = $region37
    $region36: #{tpu_custom_call.1} parent=1 // pred_region
      _
    $region37: #{tpu_custom_call.1} parent=1 // pred_fallthru
      _
    // Predicated region
    $region38: #{tpu_custom_call.1} parent=1 // pred_check
      _
    $region39: #{tpu_custom_call.1} parent=1 // pred_check_branch
      %42 = sbr.rel (0) target = $region41
    $region40: #{tpu_custom_call.1} parent=1 // pred_region
      _
    $region41: #{tpu_custom_call.1} parent=1 // pred_fallthru
      _
    // Predicated region
    $region42: #{tpu_custom_call.1} parent=1 // pred_check
      _
    $region43: #{tpu_custom_call.1} parent=1 // pred_check_branch
      %44 = sbr.rel (0) target = $region45
    $region44: #{tpu_custom_call.1} parent=1 // pred_region
      _
    $region45: #{tpu_custom_call.1} parent=1 // pred_fallthru
      _
    // Predicated region
    $region46: #{tpu_custom_call.1} parent=1 // pred_check
      _
    $region47: #{tpu_custom_call.1} parent=1 // pred_check_branch
      %46 = sbr.rel (0) target = $region49
    $region48: #{tpu_custom_call.1} parent=1 // pred_region
      _
    $region49: #{tpu_custom_call.1} parent=1 // pred_fallthru
      _
    // Predicated region
    $region50: #{tpu_custom_call.1} parent=1 // pred_check
      _
    $region51: #{tpu_custom_call.1} parent=1 // pred_check_branch
      %48 = sbr.rel (0) target = $region53
    $region52: #{tpu_custom_call.1} parent=1 // pred_region
      _
    $region53: #{tpu_custom_call.1} parent=1 // pred_fallthru
      _
    // Predicated region
    $region54: #{tpu_custom_call.1} parent=1 // pred_check
      _
    $region55: #{tpu_custom_call.1} parent=1 // pred_check_branch
      %50 = sbr.rel (0) target = $region57
    $region56: #{tpu_custom_call.1} parent=1 // pred_region
      _
    $region57: #{tpu_custom_call.1} parent=1 // pred_fallthru
      _
    // Predicated region
    $region58: #{tpu_custom_call.1} parent=1 // pred_check
      _
    $region59: #{tpu_custom_call.1} parent=1 // pred_check_branch
      %52 = sbr.rel (0) target = $region61
    $region60: #{tpu_custom_call.1} parent=1 // pred_region
      _
    $region61: #{tpu_custom_call.1} parent=1 // pred_fallthru
      _
    // Predicated region
    $region62: #{tpu_custom_call.1} parent=1 // pred_check
      _
    $region63: #{tpu_custom_call.1} parent=1 // pred_check_branch
      %54 = sbr.rel (0) target = $region65
    $region64: #{tpu_custom_call.1} parent=1 // pred_region
      _
    $region65: #{tpu_custom_call.1} parent=1 // pred_fallthru
      _
    // Predicated region
    $region66: #{tpu_custom_call.1} parent=1 // pred_check
      _
    $region67: #{tpu_custom_call.1} parent=1 // pred_check_branch
      %56 = sbr.rel (0) target = $region69
    $region68: #{tpu_custom_call.1} parent=1 // pred_region
      _
    $region69: #{tpu_custom_call.1} parent=1 // pred_fallthru
      _
    %v57 = vld [vmem:[%s0] sm:$0xff]
    %v58 = vld [vmem:[%s0 + $0x8] sm:$0xff]
    %v59 = vld [vmem:[%s1] sm:$0x1]
    %v60 = vld [vmem:[%s2] sm:$0x1]
    %vm61 = vcmask 261120
    %v62 = vsel %vm61, %v57, 0.0
    %63 = vadd.xlane.f32.xlu0 %v62
    %v64 = vpop.xlane.xlu0 %63
    %v65 = vsel %vm61, %v58, 0.0
    %66 = vadd.xlane.f32.xlu0 %v65
    %v67 = vpop.xlane.xlu0 %66
    %v68 = vrcp.pop 32.0
    %v69 = vmul.f32 %v64, %v68
    %v70 = vmul.f32 %v67, %v68
    %v71 = vsub.f32 %v57, %v69
    %v72 = vsub.f32 %v58, %v70
    %v73 = vmul.f32 %v71, %v71
    %v74 = vmul.f32 %v72, %v72
    %v75 = vsel %vm61, %v73, 0.0
    %76 = vadd.xlane.f32.xlu0 %v75
    %v77 = vpop.xlane.xlu0 %76
    %v78 = vsel %vm61, %v74, 0.0
    %79 = vadd.xlane.f32.xlu0 %v78
    %v80 = vpop.xlane.xlu0 %79
    %v81 = vmul.f32 %v77, %v68
    %v82 = vmul.f32 %v80, %v68
    %v83 = vadd.f32 %v81, 1e-05
    %v84 = vadd.f32 %v82, 1e-05
    %v85 = vrsqrt.pop %v83
    %v86 = vrsqrt.pop %v84
    %v87 = vmul.f32 %v71, %v85
    %v88 = vmul.f32 %v72, %v86
    %v90 = vlaneseq
    %v91 = vshrl.u32 %v90, 7
    %v92 = vsub.s32 0, %v91
    %v93 = vrot.slane %v59, %v92
    %v95 = vmul.f32 %v87, %v93
    %v96 = vmul.f32 %v88, %v93
    %v98 = vlaneseq
    %v99 = vshrl.u32 %v98, 7
    %v100 = vsub.s32 0, %v99
    %v101 = vrot.slane %v60, %v100
    %v103 = vadd.f32 %v95, %v101
    %v104 = vadd.f32 %v96, %v101
    %v105 = vld [vmem:[%s5] sm:$0xff]
    %v106 = vld [vmem:[%s5 + $0x8] sm:$0xff]
    %v107 = vld [vmem:[%s6] sm:$0x1]
    %v108 = vld [vmem:[%s7] sm:$0xff]
    %v109 = vld [vmem:[%s7 + $0x8] sm:$0xff]
    %v110 = vld [vmem:[%s7 + $0x10] sm:$0xff]
    %v111 = vld [vmem:[%s7 + $0x18] sm:$0xff]
    %v112 = vld [vmem:[%s7 + $0x20] sm:$0xff]
    %v113 = vld [vmem:[%s7 + $0x28] sm:$0xff]
    %v114 = vld [vmem:[%s7 + $0x30] sm:$0xff]
    %v115 = vld [vmem:[%s7 + $0x38] sm:$0xff]
    %v116 = vld [vmem:[%s8] sm:$0x1]
    %v117 = vld [vmem:[%s3] sm:$0xff]
    %v118 = vld [vmem:[%s3 + $0x8] sm:$0xff]
    %v119 = vld [vmem:[%s3 + $0x10] sm:$0xff]
    %v120 = vld [vmem:[%s3 + $0x18] sm:$0xff]
    %v121 = vld [vmem:[%s4] sm:$0x1]
    %v123 = vlaneseq
    %v124 = vshrl.u32 %v123, 7
    %v125 = vsub.s32 0, %v124
    %v126 = vrot.slane %v121, %v125
    %v129 = vsel %vm61, %v103, 0
    %v132 = vsel %vm61, %v104, 0
    %134 = vmatprep.subr.mxu0 0.0
    %135 = vmatpush1.msra.mxu0 %v117
    %136 = vmatprep.subr.mxu0 0.0
    %137 = vmatpush1.msra.mxu0 %v118
    %138 = vmatprep.subr.mxu0 0.0
    %139 = vmatpush1.msra.mxu0 %v119
    %140 = vmatprep.subr.mxu0 0.0
    %141 = vmatpush1.msra.mxu0 %v120
    %142 = vmatprep.subr.mxu0 0.0
    %143 = vmatpush1.msra.mxu0 0.0
    %144 = vmatprep.subr.mxu0 0.0
    %145 = vmatpush1.msra.mxu0 0.0
    %146 = vmatprep.subr.mxu0 0.0
    %147 = vmatpush1.msra.mxu0 0.0
    %148 = vmatprep.subr.mxu0 0.0
    %149 = vmatpush1.msra.mxu0 0.0
    %150 = vmatprep.subr.mxu0 0.0
    %151 = vmatpush1.msra.mxu0 0.0
    %152 = vmatprep.subr.mxu0 0.0
    %153 = vmatpush1.msra.mxu0 0.0
    %154 = vmatprep.subr.mxu0 0.0
    %155 = vmatpush1.msra.mxu0 0.0
    %156 = vmatprep.subr.mxu0 0.0
    %157 = vmatpush1.msra.mxu0 0.0
    %158 = vmatprep.subr.mxu0 0.0
    %159 = vmatpush1.msra.mxu0 0.0
    %160 = vmatprep.subr.mxu0 0.0
    %161 = vmatpush1.msra.mxu0 0.0
    %162 = vmatprep.subr.mxu0 0.0
    %163 = vmatpush1.msra.mxu0 0.0
    %164 = vmatprep.subr.mxu0 0.0
    %165 = vmatpush1.msra.mxu0 0.0
    %166 = vmatprep.subr.mxu0 0.0
    %167 = vmatpush1.msra.mxu0 0.0
    %168 = vmatprep.subr.mxu0 0.0
    %169 = vmatpush1.msra.mxu0 0.0
    %170 = vmatprep.subr.mxu0 0.0
    %171 = vmatpush1.msra.mxu0 0.0
    %172 = vmatprep.subr.mxu0 0.0
    %173 = vmatpush1.msra.mxu0 0.0
    %174 = vmatprep.subr.mxu0 0.0
    %175 = vmatpush1.msra.mxu0 0.0
    %176 = vmatprep.subr.mxu0 0.0
    %177 = vmatpush1.msra.mxu0 0.0
    %178 = vmatprep.subr.mxu0 0.0
    %179 = vmatpush1.msra.mxu0 0.0
    %180 = vmatprep.subr.mxu0 0.0
    %181 = vmatpush1.msra.mxu0 0.0
    %182 = vmatprep.subr.mxu0 0.0
    %183 = vmatpush1.msra.mxu0 0.0
    %184 = vmatprep.subr.mxu0 0.0
    %185 = vmatpush1.msra.mxu0 0.0
    %186 = vmatprep.subr.mxu0 0.0
    %187 = vmatpush1.msra.mxu0 0.0
    %188 = vmatprep.subr.mxu0 0.0
    %189 = vmatpush1.msra.mxu0 0.0
    %190 = vmatprep.subr.mxu0 0.0
    %191 = vmatpush1.msra.mxu0 0.0
    %192 = vmatprep.subr.mxu0 0.0
    %193 = vmatpush1.msra.mxu0 0.0
    %194 = vmatprep.subr.mxu0 0.0
    %195 = vmatpush1.msra.mxu0 0.0
    %196 = vmatprep.subr.mxu0 0.0
    %197 = vmatpush1.msra.mxu0 0.0
    %198 = vmatprep.mubr.f32.mxu0 0.0
    %199 = vmatmul.mubr.f32.gmra.mrb[0].mxu0 %v129
    %v200 = vpop.f32.mrb[0].mxu0
    %v201 = vadd.f32 %v126, %v200
    %v202 = vpop.f32.mrb[0].mxu0
    %203 = vmatprep.mubr.f32.mxu0 0.0
    %204 = vmatmul.mubr.f32.gmra.mrb[0].mxu0 %v132
    %v205 = vpop.f32.mrb[0].mxu0
    %v206 = vadd.f32 %v126, %v205
    %v207 = vpop.f32.mrb[0].mxu0
    %208 = vdwg.mxu0
    %v210 = vlaneseq
    %v211 = vshrl.u32 %v210, 7
    %v212 = vsub.s32 0, %v211
    %v213 = vrot.slane %v107, %v212
    %vm215 = vcmask 130048
    %v217 = vsel %vm215, %v201, 0
    %v220 = vsel %vm215, %v206, 0
    %222 = vmatprep.subr.mxu0 0.0
    %223 = vmatpush1.msra.mxu0 %v105
    %224 = vmatprep.subr.mxu0 0.0
    %225 = vmatpush1.msra.mxu0 %v106
    %226 = vmatprep.subr.mxu0 0.0
    %227 = vmatpush1.msra.mxu0 0.0
    %228 = vmatprep.subr.mxu0 0.0
    %229 = vmatpush1.msra.mxu0 0.0
    %230 = vmatprep.subr.mxu0 0.0
    %231 = vmatpush1.msra.mxu0 0.0
    %232 = vmatprep.subr.mxu0 0.0
    %233 = vmatpush1.msra.mxu0 0.0
    %234 = vmatprep.subr.mxu0 0.0
    %235 = vmatpush1.msra.mxu0 0.0
    %236 = vmatprep.subr.mxu0 0.0
    %237 = vmatpush1.msra.mxu0 0.0
    %238 = vmatprep.subr.mxu0 0.0
    %239 = vmatpush1.msra.mxu0 0.0
    %240 = vmatprep.subr.mxu0 0.0
    %241 = vmatpush1.msra.mxu0 0.0
    %242 = vmatprep.subr.mxu0 0.0
    %243 = vmatpush1.msra.mxu0 0.0
    %244 = vmatprep.subr.mxu0 0.0
    %245 = vmatpush1.msra.mxu0 0.0
    %246 = vmatprep.subr.mxu0 0.0
    %247 = vmatpush1.msra.mxu0 0.0
    %248 = vmatprep.subr.mxu0 0.0
    %249 = vmatpush1.msra.mxu0 0.0
    %250 = vmatprep.subr.mxu0 0.0
    %251 = vmatpush1.msra.mxu0 0.0
    %252 = vmatprep.subr.mxu0 0.0
    %253 = vmatpush1.msra.mxu0 0.0
    %254 = vmatprep.subr.mxu0 0.0
    %255 = vmatpush1.msra.mxu0 0.0
    %256 = vmatprep.subr.mxu0 0.0
    %257 = vmatpush1.msra.mxu0 0.0
    %258 = vmatprep.subr.mxu0 0.0
    %259 = vmatpush1.msra.mxu0 0.0
    %260 = vmatprep.subr.mxu0 0.0
    %261 = vmatpush1.msra.mxu0 0.0
    %262 = vmatprep.subr.mxu0 0.0
    %263 = vmatpush1.msra.mxu0 0.0
    %264 = vmatprep.subr.mxu0 0.0
    %265 = vmatpush1.msra.mxu0 0.0
    %266 = vmatprep.subr.mxu0 0.0
    %267 = vmatpush1.msra.mxu0 0.0
    %268 = vmatprep.subr.mxu0 0.0
    %269 = vmatpush1.msra.mxu0 0.0
    %270 = vmatprep.subr.mxu0 0.0
    %271 = vmatpush1.msra.mxu0 0.0
    %272 = vmatprep.subr.mxu0 0.0
    %273 = vmatpush1.msra.mxu0 0.0
    %274 = vmatprep.subr.mxu0 0.0
    %275 = vmatpush1.msra.mxu0 0.0
    %276 = vmatprep.subr.mxu0 0.0
    %277 = vmatpush1.msra.mxu0 0.0
    %278 = vmatprep.subr.mxu0 0.0
    %279 = vmatpush1.msra.mxu0 0.0
    %280 = vmatprep.subr.mxu0 0.0
    %281 = vmatpush1.msra.mxu0 0.0
    %282 = vmatprep.subr.mxu0 0.0
    %283 = vmatpush1.msra.mxu0 0.0
    %284 = vmatprep.subr.mxu0 0.0
    %285 = vmatpush1.msra.mxu0 0.0
    %286 = vmatprep.mubr.f32.mxu0 0.0
    %287 = vmatmul.mubr.f32.gmra.mrb[0].mxu0 %v217
    %v288 = vpop.f32.mrb[0].mxu0
    %v289 = vadd.f32 %v213, %v288
    %v290 = vpop.f32.mrb[0].mxu0
    %291 = vmatprep.mubr.f32.mxu0 0.0
    %292 = vmatmul.mubr.f32.gmra.mrb[0].mxu0 %v220
    %v293 = vpop.f32.mrb[0].mxu0
    %v294 = vadd.f32 %v213, %v293
    %v295 = vpop.f32.mrb[0].mxu0
    %296 = vdwg.mxu0
    %vm297 = vcmask 523264
    %v298 = vsel %vm297, %v289, -inf
    %v299 = vrot.slane %v298, 4
    %v300 = vmax.f32 %v298, %v299
    %v301 = vrot.slane %v300, 2
    %v302 = vmax.f32 %v300, %v301
    %v303 = vrot.slane %v302, 1
    %v304 = vmax.f32 %v302, %v303
    %v305 = vsub.f32 %v289, %v304
    %v306 = vmul.f32 %v305, 1.442695
    %v307 = vpow.pop %v306
    %v308 = vsel %vm297, %v307, 0.0
    %v309 = vrot.slane %v308, 4
    %v310 = vadd.f32 %v308, %v309
    %v311 = vrot.slane %v310, 2
    %v312 = vadd.f32 %v310, %v311
    %v313 = vrot.slane %v312, 1
    %v314 = vadd.f32 %v312, %v313
    %v315 = vrcp.pop %v314
    %v316 = vmul.f32 %v307, %v315
    %v317 = vsel %vm297, %v316, 0.0
    %318 = vadd.xlane.f32.xlu0 %v317
    %v319 = vpop.xlane.xlu0 %318
    %v320 = vadd.f32 %v319, 1e-09
    %v321 = vrcp.pop %v320
    %v322 = vmul.f32 %v316, %v321
    %v323 = vsel %vm297, %v294, -inf
    %v324 = vrot.slane %v323, 4
    %v325 = vmax.f32 %v323, %v324
    %v326 = vrot.slane %v325, 2
    %v327 = vmax.f32 %v325, %v326
    %v328 = vrot.slane %v327, 1
    %v329 = vmax.f32 %v327, %v328
    %v330 = vsub.f32 %v294, %v329
    %v331 = vmul.f32 %v330, 1.442695
    %v332 = vpow.pop %v331
    %v333 = vsel %vm297, %v332, 0.0
    %v334 = vrot.slane %v333, 4
    %v335 = vadd.f32 %v333, %v334
    %v336 = vrot.slane %v335, 2
    %v337 = vadd.f32 %v335, %v336
    %v338 = vrot.slane %v337, 1
    %v339 = vadd.f32 %v337, %v338
    %v340 = vrcp.pop %v339
    %v341 = vmul.f32 %v332, %v340
    %v342 = vsel %vm297, %v341, 0.0
    %343 = vadd.xlane.f32.xlu0 %v342
    %v344 = vpop.xlane.xlu0 %343
    %v345 = vadd.f32 %v344, 1e-09
    %v346 = vrcp.pop %v345
    %v347 = vmul.f32 %v341, %v346
    %v349 = vlaneseq
    %v350 = vshrl.u32 %v349, 7
    %v351 = vsub.s32 0, %v350
    %v352 = vrot.slane %v116, %v351
    %v355 = vsel %vm297, %v322, 0
    %v358 = vsel %vm297, %v347, 0
    %360 = vmatprep.subr.mxu0 0.0
    %361 = vmatpush1.msra.mxu0 %v108
    %362 = vmatprep.subr.mxu0 0.0
    %363 = vmatpush1.msra.mxu0 %v109
    %364 = vmatprep.subr.mxu0 0.0
    %365 = vmatpush1.msra.mxu0 %v110
    %366 = vmatprep.subr.mxu0 0.0
    %367 = vmatpush1.msra.mxu0 %v111
    %368 = vmatprep.subr.mxu0 0.0
    %369 = vmatpush1.msra.mxu0 %v112
    %370 = vmatprep.subr.mxu0 0.0
    %371 = vmatpush1.msra.mxu0 %v113
    %372 = vmatprep.subr.mxu0 0.0
    %373 = vmatpush1.msra.mxu0 %v114
    %374 = vmatprep.subr.mxu0 0.0
    %375 = vmatpush1.msra.mxu0 %v115
    %376 = vmatprep.subr.mxu0 0.0
    %377 = vmatpush1.msra.mxu0 0.0
    %378 = vmatprep.subr.mxu0 0.0
    %379 = vmatpush1.msra.mxu0 0.0
    %380 = vmatprep.subr.mxu0 0.0
    %381 = vmatpush1.msra.mxu0 0.0
    %382 = vmatprep.subr.mxu0 0.0
    %383 = vmatpush1.msra.mxu0 0.0
    %384 = vmatprep.subr.mxu0 0.0
    %385 = vmatpush1.msra.mxu0 0.0
    %386 = vmatprep.subr.mxu0 0.0
    %387 = vmatpush1.msra.mxu0 0.0
    %388 = vmatprep.subr.mxu0 0.0
    %389 = vmatpush1.msra.mxu0 0.0
    %390 = vmatprep.subr.mxu0 0.0
    %391 = vmatpush1.msra.mxu0 0.0
    %392 = vmatprep.subr.mxu0 0.0
    %393 = vmatpush1.msra.mxu0 0.0
    %394 = vmatprep.subr.mxu0 0.0
    %395 = vmatpush1.msra.mxu0 0.0
    %396 = vmatprep.subr.mxu0 0.0
    %397 = vmatpush1.msra.mxu0 0.0
    %398 = vmatprep.subr.mxu0 0.0
    %399 = vmatpush1.msra.mxu0 0.0
    %400 = vmatprep.subr.mxu0 0.0
    %401 = vmatpush1.msra.mxu0 0.0
    %402 = vmatprep.subr.mxu0 0.0
    %403 = vmatpush1.msra.mxu0 0.0
    %404 = vmatprep.subr.mxu0 0.0
    %405 = vmatpush1.msra.mxu0 0.0
    %406 = vmatprep.subr.mxu0 0.0
    %407 = vmatpush1.msra.mxu0 0.0
    %408 = vmatprep.subr.mxu0 0.0
    %409 = vmatpush1.msra.mxu0 0.0
    %410 = vmatprep.subr.mxu0 0.0
    %411 = vmatpush1.msra.mxu0 0.0
    %412 = vmatprep.subr.mxu0 0.0
    %413 = vmatpush1.msra.mxu0 0.0
    %414 = vmatprep.subr.mxu0 0.0
    %415 = vmatpush1.msra.mxu0 0.0
    %416 = vmatprep.subr.mxu0 0.0
    %417 = vmatpush1.msra.mxu0 0.0
    %418 = vmatprep.subr.mxu0 0.0
    %419 = vmatpush1.msra.mxu0 0.0
    %420 = vmatprep.subr.mxu0 0.0
    %421 = vmatpush1.msra.mxu0 0.0
    %422 = vmatprep.subr.mxu0 0.0
    %423 = vmatpush1.msra.mxu0 0.0
    %424 = vmatprep.mubr.f32.mxu0 0.0
    %425 = vmatmul.mubr.f32.gmra.mrb[0].mxu0 %v355
    %v426 = vpop.f32.mrb[0].mxu0
    %v427 = vadd.f32 %v352, %v426
    %v428 = vpop.f32.mrb[0].mxu0
    %429 = vmatprep.mubr.f32.mxu0 0.0
    %430 = vmatmul.mubr.f32.gmra.mrb[0].mxu0 %v358
    %v431 = vpop.f32.mrb[0].mxu0
    %v432 = vadd.f32 %v352, %v431
    %v433 = vpop.f32.mrb[0].mxu0
    %434 = vdwg.mxu0
    %v435 = vld [vmem:[%s9] sm:$0xff]
    %v436 = vld [vmem:[%s9 + $0x8] sm:$0xff]
    %s437 = scalar_lea.vmem %s3, 32
    %v438 = vld [vmem:[%s437] sm:$0xff]
    %v439 = vld [vmem:[%s437 + $0x8] sm:$0xff]
    %v440 = vld [vmem:[%s437 + $0x10] sm:$0xff]
    %v441 = vld [vmem:[%s437 + $0x18] sm:$0xff]
    %s442 = scalar_lea.vmem %s4, 1
    %v443 = vld [vmem:[%s442] sm:$0x1]
    %v445 = vlaneseq
    %v446 = vshrl.u32 %v445, 7
    %v447 = vsub.s32 0, %v446
    %v448 = vrot.slane %v443, %v447
    %450 = vmatprep.subr.mxu0 0.0
    %451 = vmatpush1.msra.mxu0 %v438
    %452 = vmatprep.subr.mxu0 0.0
    %453 = vmatpush1.msra.mxu0 %v439
    %454 = vmatprep.subr.mxu0 0.0
    %455 = vmatpush1.msra.mxu0 %v440
    %456 = vmatprep.subr.mxu0 0.0
    %457 = vmatpush1.msra.mxu0 %v441
    %458 = vmatprep.subr.mxu0 0.0
    %459 = vmatpush1.msra.mxu0 0.0
    %460 = vmatprep.subr.mxu0 0.0
    %461 = vmatpush1.msra.mxu0 0.0
    %462 = vmatprep.subr.mxu0 0.0
    %463 = vmatpush1.msra.mxu0 0.0
    %464 = vmatprep.subr.mxu0 0.0
    %465 = vmatpush1.msra.mxu0 0.0
    %466 = vmatprep.subr.mxu0 0.0
    %467 = vmatpush1.msra.mxu0 0.0
    %468 = vmatprep.subr.mxu0 0.0
    %469 = vmatpush1.msra.mxu0 0.0
    %470 = vmatprep.subr.mxu0 0.0
    %471 = vmatpush1.msra.mxu0 0.0
    %472 = vmatprep.subr.mxu0 0.0
    %473 = vmatpush1.msra.mxu0 0.0
    %474 = vmatprep.subr.mxu0 0.0
    %475 = vmatpush1.msra.mxu0 0.0
    %476 = vmatprep.subr.mxu0 0.0
    %477 = vmatpush1.msra.mxu0 0.0
    %478 = vmatprep.subr.mxu0 0.0
    %479 = vmatpush1.msra.mxu0 0.0
    %480 = vmatprep.subr.mxu0 0.0
    %481 = vmatpush1.msra.mxu0 0.0
    %482 = vmatprep.subr.mxu0 0.0
    %483 = vmatpush1.msra.mxu0 0.0
    %484 = vmatprep.subr.mxu0 0.0
    %485 = vmatpush1.msra.mxu0 0.0
    %486 = vmatprep.subr.mxu0 0.0
    %487 = vmatpush1.msra.mxu0 0.0
    %488 = vmatprep.subr.mxu0 0.0
    %489 = vmatpush1.msra.mxu0 0.0
    %490 = vmatprep.subr.mxu0 0.0
    %491 = vmatpush1.msra.mxu0 0.0
    %492 = vmatprep.subr.mxu0 0.0
    %493 = vmatpush1.msra.mxu0 0.0
    %494 = vmatprep.subr.mxu0 0.0
    %495 = vmatpush1.msra.mxu0 0.0
    %496 = vmatprep.subr.mxu0 0.0
    %497 = vmatpush1.msra.mxu0 0.0
    %498 = vmatprep.subr.mxu0 0.0
    %499 = vmatpush1.msra.mxu0 0.0
    %500 = vmatprep.subr.mxu0 0.0
    %501 = vmatpush1.msra.mxu0 0.0
    %502 = vmatprep.subr.mxu0 0.0
    %503 = vmatpush1.msra.mxu0 0.0
    %504 = vmatprep.subr.mxu0 0.0
    %505 = vmatpush1.msra.mxu0 0.0
    %506 = vmatprep.subr.mxu0 0.0
    %507 = vmatpush1.msra.mxu0 0.0
    %508 = vmatprep.subr.mxu0 0.0
    %509 = vmatpush1.msra.mxu0 0.0
    %510 = vmatprep.subr.mxu0 0.0
    %511 = vmatpush1.msra.mxu0 0.0
    %512 = vmatprep.subr.mxu0 0.0
    %513 = vmatpush1.msra.mxu0 0.0
    %514 = vmatprep.mubr.f32.mxu0 0.0
    %515 = vmatmul.mubr.f32.gmra.mrb[0].mxu0 %v129
    %v516 = vpop.f32.mrb[0].mxu0
    %v517 = vadd.f32 %v448, %v516
    %v518 = vpop.f32.mrb[0].mxu0
    %519 = vmatprep.mubr.f32.mxu0 0.0
    %520 = vmatmul.mubr.f32.gmra.mrb[0].mxu0 %v132
    %v521 = vpop.f32.mrb[0].mxu0
    %v522 = vadd.f32 %v448, %v521
    %v523 = vpop.f32.mrb[0].mxu0
    %524 = vdwg.mxu0
    %v526 = vsel %vm215, %v517, 0
    %v529 = vsel %vm215, %v522, 0
    %531 = vmatprep.subr.mxu0 0.0
    %532 = vmatpush1.msra.mxu0 %v105
    %533 = vmatprep.subr.mxu0 0.0
    %534 = vmatpush1.msra.mxu0 %v106
    %535 = vmatprep.subr.mxu0 0.0
    %536 = vmatpush1.msra.mxu0 0.0
    %537 = vmatprep.subr.mxu0 0.0
    %538 = vmatpush1.msra.mxu0 0.0
    %539 = vmatprep.subr.mxu0 0.0
    %540 = vmatpush1.msra.mxu0 0.0
    %541 = vmatprep.subr.mxu0 0.0
    %542 = vmatpush1.msra.mxu0 0.0
    %543 = vmatprep.subr.mxu0 0.0
    %544 = vmatpush1.msra.mxu0 0.0
    %545 = vmatprep.subr.mxu0 0.0
    %546 = vmatpush1.msra.mxu0 0.0
    %547 = vmatprep.subr.mxu0 0.0
    %548 = vmatpush1.msra.mxu0 0.0
    %549 = vmatprep.subr.mxu0 0.0
    %550 = vmatpush1.msra.mxu0 0.0
    %551 = vmatprep.subr.mxu0 0.0
    %552 = vmatpush1.msra.mxu0 0.0
    %553 = vmatprep.subr.mxu0 0.0
    %554 = vmatpush1.msra.mxu0 0.0
    %555 = vmatprep.subr.mxu0 0.0
    %556 = vmatpush1.msra.mxu0 0.0
    %557 = vmatprep.subr.mxu0 0.0
    %558 = vmatpush1.msra.mxu0 0.0
    %559 = vmatprep.subr.mxu0 0.0
    %560 = vmatpush1.msra.mxu0 0.0
    %561 = vmatprep.subr.mxu0 0.0
    %562 = vmatpush1.msra.mxu0 0.0
    %563 = vmatprep.subr.mxu0 0.0
    %564 = vmatpush1.msra.mxu0 0.0
    %565 = vmatprep.subr.mxu0 0.0
    %566 = vmatpush1.msra.mxu0 0.0
    %567 = vmatprep.subr.mxu0 0.0
    %568 = vmatpush1.msra.mxu0 0.0
    %569 = vmatprep.subr.mxu0 0.0
    %570 = vmatpush1.msra.mxu0 0.0
    %571 = vmatprep.subr.mxu0 0.0
    %572 = vmatpush1.msra.mxu0 0.0
    %573 = vmatprep.subr.mxu0 0.0
    %574 = vmatpush1.msra.mxu0 0.0
    %575 = vmatprep.subr.mxu0 0.0
    %576 = vmatpush1.msra.mxu0 0.0
    %577 = vmatprep.subr.mxu0 0.0
    %578 = vmatpush1.msra.mxu0 0.0
    %579 = vmatprep.subr.mxu0 0.0
    %580 = vmatpush1.msra.mxu0 0.0
    %581 = vmatprep.subr.mxu0 0.0
    %582 = vmatpush1.msra.mxu0 0.0
    %583 = vmatprep.subr.mxu0 0.0
    %584 = vmatpush1.msra.mxu0 0.0
    %585 = vmatprep.subr.mxu0 0.0
    %586 = vmatpush1.msra.mxu0 0.0
    %587 = vmatprep.subr.mxu0 0.0
    %588 = vmatpush1.msra.mxu0 0.0
    %589 = vmatprep.subr.mxu0 0.0
    %590 = vmatpush1.msra.mxu0 0.0
    %591 = vmatprep.subr.mxu0 0.0
    %592 = vmatpush1.msra.mxu0 0.0
    %593 = vmatprep.subr.mxu0 0.0
    %594 = vmatpush1.msra.mxu0 0.0
    %595 = vmatprep.mubr.f32.mxu0 0.0
    %596 = vmatmul.mubr.f32.gmra.mrb[0].mxu0 %v526
    %v597 = vpop.f32.mrb[0].mxu0
    %v598 = vadd.f32 %v213, %v597
    %v599 = vpop.f32.mrb[0].mxu0
    %600 = vmatprep.mubr.f32.mxu0 0.0
    %601 = vmatmul.mubr.f32.gmra.mrb[0].mxu0 %v529
    %v602 = vpop.f32.mrb[0].mxu0
    %v603 = vadd.f32 %v213, %v602
    %v604 = vpop.f32.mrb[0].mxu0
    %605 = vdwg.mxu0
    %v606 = vsel %vm297, %v598, -inf
    %v607 = vrot.slane %v606, 4
    %v608 = vmax.f32 %v606, %v607
    %v609 = vrot.slane %v608, 2
    %v610 = vmax.f32 %v608, %v609
    %v611 = vrot.slane %v610, 1
    %v612 = vmax.f32 %v610, %v611
    %v613 = vsub.f32 %v598, %v612
    %v614 = vmul.f32 %v613, 1.442695
    %v615 = vpow.pop %v614
    %v616 = vsel %vm297, %v615, 0.0
    %v617 = vrot.slane %v616, 4
    %v618 = vadd.f32 %v616, %v617
    %v619 = vrot.slane %v618, 2
    %v620 = vadd.f32 %v618, %v619
    %v621 = vrot.slane %v620, 1
    %v622 = vadd.f32 %v620, %v621
    %v623 = vrcp.pop %v622
    %v624 = vmul.f32 %v615, %v623
    %v625 = vsel %vm297, %v624, 0.0
    %626 = vadd.xlane.f32.xlu0 %v625
    %v627 = vpop.xlane.xlu0 %626
    %v628 = vadd.f32 %v627, 1e-09
    %v629 = vrcp.pop %v628
    %v630 = vmul.f32 %v624, %v629
    %v631 = vsel %vm297, %v603, -inf
    %v632 = vrot.slane %v631, 4
    %v633 = vmax.f32 %v631, %v632
    %v634 = vrot.slane %v633, 2
    %v635 = vmax.f32 %v633, %v634
    %v636 = vrot.slane %v635, 1
    %v637 = vmax.f32 %v635, %v636
    %v638 = vsub.f32 %v603, %v637
    %v639 = vmul.f32 %v638, 1.442695
    %v640 = vpow.pop %v639
    %v641 = vsel %vm297, %v640, 0.0
    %v642 = vrot.slane %v641, 4
    %v643 = vadd.f32 %v641, %v642
    %v644 = vrot.slane %v643, 2
    %v645 = vadd.f32 %v643, %v644
    %v646 = vrot.slane %v645, 1
    %v647 = vadd.f32 %v645, %v646
    %v648 = vrcp.pop %v647
    %v649 = vmul.f32 %v640, %v648
    %v650 = vsel %vm297, %v649, 0.0
    %651 = vadd.xlane.f32.xlu0 %v650
    %v652 = vpop.xlane.xlu0 %651
    %v653 = vadd.f32 %v652, 1e-09
    %v654 = vrcp.pop %v653
    %v655 = vmul.f32 %v649, %v654
    %v657 = vsel %vm297, %v630, 0
    %v660 = vsel %vm297, %v655, 0
    %662 = vmatprep.subr.mxu0 0.0
    %663 = vmatpush1.msra.mxu0 %v108
    %664 = vmatprep.subr.mxu0 0.0
    %665 = vmatpush1.msra.mxu0 %v109
    %666 = vmatprep.subr.mxu0 0.0
    %667 = vmatpush1.msra.mxu0 %v110
    %668 = vmatprep.subr.mxu0 0.0
    %669 = vmatpush1.msra.mxu0 %v111
    %670 = vmatprep.subr.mxu0 0.0
    %671 = vmatpush1.msra.mxu0 %v112
    %672 = vmatprep.subr.mxu0 0.0
    %673 = vmatpush1.msra.mxu0 %v113
    %674 = vmatprep.subr.mxu0 0.0
    %675 = vmatpush1.msra.mxu0 %v114
    %676 = vmatprep.subr.mxu0 0.0
    %677 = vmatpush1.msra.mxu0 %v115
    %678 = vmatprep.subr.mxu0 0.0
    %679 = vmatpush1.msra.mxu0 0.0
    %680 = vmatprep.subr.mxu0 0.0
    %681 = vmatpush1.msra.mxu0 0.0
    %682 = vmatprep.subr.mxu0 0.0
    %683 = vmatpush1.msra.mxu0 0.0
    %684 = vmatprep.subr.mxu0 0.0
    %685 = vmatpush1.msra.mxu0 0.0
    %686 = vmatprep.subr.mxu0 0.0
    %687 = vmatpush1.msra.mxu0 0.0
    %688 = vmatprep.subr.mxu0 0.0
    %689 = vmatpush1.msra.mxu0 0.0
    %690 = vmatprep.subr.mxu0 0.0
    %691 = vmatpush1.msra.mxu0 0.0
    %692 = vmatprep.subr.mxu0 0.0
    %693 = vmatpush1.msra.mxu0 0.0
    %694 = vmatprep.subr.mxu0 0.0
    %695 = vmatpush1.msra.mxu0 0.0
    %696 = vmatprep.subr.mxu0 0.0
    %697 = vmatpush1.msra.mxu0 0.0
    %698 = vmatprep.subr.mxu0 0.0
    %699 = vmatpush1.msra.mxu0 0.0
    %700 = vmatprep.subr.mxu0 0.0
    %701 = vmatpush1.msra.mxu0 0.0
    %702 = vmatprep.subr.mxu0 0.0
    %703 = vmatpush1.msra.mxu0 0.0
    %704 = vmatprep.subr.mxu0 0.0
    %705 = vmatpush1.msra.mxu0 0.0
    %706 = vmatprep.subr.mxu0 0.0
    %707 = vmatpush1.msra.mxu0 0.0
    %708 = vmatprep.subr.mxu0 0.0
    %709 = vmatpush1.msra.mxu0 0.0
    %710 = vmatprep.subr.mxu0 0.0
    %711 = vmatpush1.msra.mxu0 0.0
    %712 = vmatprep.subr.mxu0 0.0
    %713 = vmatpush1.msra.mxu0 0.0
    %714 = vmatprep.subr.mxu0 0.0
    %715 = vmatpush1.msra.mxu0 0.0
    %716 = vmatprep.subr.mxu0 0.0
    %717 = vmatpush1.msra.mxu0 0.0
    %718 = vmatprep.subr.mxu0 0.0
    %719 = vmatpush1.msra.mxu0 0.0
    %720 = vmatprep.subr.mxu0 0.0
    %721 = vmatpush1.msra.mxu0 0.0
    %722 = vmatprep.subr.mxu0 0.0
    %723 = vmatpush1.msra.mxu0 0.0
    %724 = vmatprep.subr.mxu0 0.0
    %725 = vmatpush1.msra.mxu0 0.0
    %726 = vmatprep.mubr.f32.mxu0 0.0
    %727 = vmatmul.mubr.f32.gmra.mrb[0].mxu0 %v657
    %v728 = vpop.f32.mrb[0].mxu0
    %v729 = vadd.f32 %v352, %v728
    %v730 = vpop.f32.mrb[0].mxu0
    %731 = vmatprep.mubr.f32.mxu0 0.0
    %732 = vmatmul.mubr.f32.gmra.mrb[0].mxu0 %v660
    %v733 = vpop.f32.mrb[0].mxu0
    %v734 = vadd.f32 %v352, %v733
    %v735 = vpop.f32.mrb[0].mxu0
    %736 = vdwg.mxu0
    %s737 = scalar_lea.vmem %s9, 16
    %v738 = vld [vmem:[%s737] sm:$0xff]
    %v739 = vld [vmem:[%s737 + $0x8] sm:$0xff]
    %v741 = vsel %vm215, %v729, 0
    %v744 = vsel %vm215, %v734, 0
    %746 = vmatprep.subr.mxu0 0.0
    %747 = vmatpush1.msra.mxu0 %v738
    %748 = vmatprep.subr.mxu0 0.0
    %749 = vmatpush1.msra.mxu0 %v739
    %750 = vmatprep.subr.mxu0 0.0
    %751 = vmatpush1.msra.mxu0 0.0
    %752 = vmatprep.subr.mxu0 0.0
    %753 = vmatpush1.msra.mxu0 0.0
    %754 = vmatprep.subr.mxu0 0.0
    %755 = vmatpush1.msra.mxu0 0.0
    %756 = vmatprep.subr.mxu0 0.0
    %757 = vmatpush1.msra.mxu0 0.0
    %758 = vmatprep.subr.mxu0 0.0
    %759 = vmatpush1.msra.mxu0 0.0
    %760 = vmatprep.subr.mxu0 0.0
    %761 = vmatpush1.msra.mxu0 0.0
    %762 = vmatprep.subr.mxu0 0.0
    %763 = vmatpush1.msra.mxu0 0.0
    %764 = vmatprep.subr.mxu0 0.0
    %765 = vmatpush1.msra.mxu0 0.0
    %766 = vmatprep.subr.mxu0 0.0
    %767 = vmatpush1.msra.mxu0 0.0
    %768 = vmatprep.subr.mxu0 0.0
    %769 = vmatpush1.msra.mxu0 0.0
    %770 = vmatprep.subr.mxu0 0.0
    %771 = vmatpush1.msra.mxu0 0.0
    %772 = vmatprep.subr.mxu0 0.0
    %773 = vmatpush1.msra.mxu0 0.0
    %774 = vmatprep.subr.mxu0 0.0
    %775 = vmatpush1.msra.mxu0 0.0
    %776 = vmatprep.subr.mxu0 0.0
    %777 = vmatpush1.msra.mxu0 0.0
    %778 = vmatprep.subr.mxu0 0.0
    %779 = vmatpush1.msra.mxu0 0.0
    %780 = vmatprep.subr.mxu0 0.0
    %781 = vmatpush1.msra.mxu0 0.0
    %782 = vmatprep.subr.mxu0 0.0
    %783 = vmatpush1.msra.mxu0 0.0
    %784 = vmatprep.subr.mxu0 0.0
    %785 = vmatpush1.msra.mxu0 0.0
    %786 = vmatprep.subr.mxu0 0.0
    %787 = vmatpush1.msra.mxu0 0.0
    %788 = vmatprep.subr.mxu0 0.0
    %789 = vmatpush1.msra.mxu0 0.0
    %790 = vmatprep.subr.mxu0 0.0
    %791 = vmatpush1.msra.mxu0 0.0
    %792 = vmatprep.subr.mxu0 0.0
    %793 = vmatpush1.msra.mxu0 0.0
    %794 = vmatprep.subr.mxu0 0.0
    %795 = vmatpush1.msra.mxu0 0.0
    %796 = vmatprep.subr.mxu0 0.0
    %797 = vmatpush1.msra.mxu0 0.0
    %798 = vmatprep.subr.mxu0 0.0
    %799 = vmatpush1.msra.mxu0 0.0
    %800 = vmatprep.subr.mxu0 0.0
    %801 = vmatpush1.msra.mxu0 0.0
    %802 = vmatprep.subr.mxu0 0.0
    %803 = vmatpush1.msra.mxu0 0.0
    %804 = vmatprep.subr.mxu0 0.0
    %805 = vmatpush1.msra.mxu0 0.0
    %806 = vmatprep.subr.mxu0 0.0
    %807 = vmatpush1.msra.mxu0 0.0
    %808 = vmatprep.subr.mxu0 0.0
    %809 = vmatpush1.msra.mxu0 0.0
    %810 = vmatprep.mubr.f32.mxu0 0.0
    %811 = vmatmul.mubr.f32.gmra.mrb[0].mxu0 %v741
    %v812 = vpop.f32.mrb[0].mxu0
    %v813 = vadd.f32 0.0, %v812
    %v814 = vpop.f32.mrb[0].mxu0
    %815 = vmatprep.mubr.f32.mxu0 0.0
    %816 = vmatmul.mubr.f32.gmra.mrb[0].mxu0 %v744
    %v817 = vpop.f32.mrb[0].mxu0
    %v818 = vadd.f32 0.0, %v817
    %v819 = vpop.f32.mrb[0].mxu0
    %820 = vdwg.mxu0
    %v822 = vsel %vm215, %v427, 0
    %v825 = vsel %vm215, %v432, 0
    %827 = vmatprep.subr.mxu0 0.0
    %828 = vmatpush1.msra.mxu0 %v435
    %829 = vmatprep.subr.mxu0 0.0
    %830 = vmatpush1.msra.mxu0 %v436
    %831 = vmatprep.subr.mxu0 0.0
    %832 = vmatpush1.msra.mxu0 0.0
    %833 = vmatprep.subr.mxu0 0.0
    %834 = vmatpush1.msra.mxu0 0.0
    %835 = vmatprep.subr.mxu0 0.0
    %836 = vmatpush1.msra.mxu0 0.0
    %837 = vmatprep.subr.mxu0 0.0
    %838 = vmatpush1.msra.mxu0 0.0
    %839 = vmatprep.subr.mxu0 0.0
    %840 = vmatpush1.msra.mxu0 0.0
    %841 = vmatprep.subr.mxu0 0.0
    %842 = vmatpush1.msra.mxu0 0.0
    %843 = vmatprep.subr.mxu0 0.0
    %844 = vmatpush1.msra.mxu0 0.0
    %845 = vmatprep.subr.mxu0 0.0
    %846 = vmatpush1.msra.mxu0 0.0
    %847 = vmatprep.subr.mxu0 0.0
    %848 = vmatpush1.msra.mxu0 0.0
    %849 = vmatprep.subr.mxu0 0.0
    %850 = vmatpush1.msra.mxu0 0.0
    %851 = vmatprep.subr.mxu0 0.0
    %852 = vmatpush1.msra.mxu0 0.0
    %853 = vmatprep.subr.mxu0 0.0
    %854 = vmatpush1.msra.mxu0 0.0
    %855 = vmatprep.subr.mxu0 0.0
    %856 = vmatpush1.msra.mxu0 0.0
    %857 = vmatprep.subr.mxu0 0.0
    %858 = vmatpush1.msra.mxu0 0.0
    %859 = vmatprep.subr.mxu0 0.0
    %860 = vmatpush1.msra.mxu0 0.0
    %861 = vmatprep.subr.mxu0 0.0
    %862 = vmatpush1.msra.mxu0 0.0
    %863 = vmatprep.subr.mxu0 0.0
    %864 = vmatpush1.msra.mxu0 0.0
    %865 = vmatprep.subr.mxu0 0.0
    %866 = vmatpush1.msra.mxu0 0.0
    %867 = vmatprep.subr.mxu0 0.0
    %868 = vmatpush1.msra.mxu0 0.0
    %869 = vmatprep.subr.mxu0 0.0
    %870 = vmatpush1.msra.mxu0 0.0
    %871 = vmatprep.subr.mxu0 0.0
    %872 = vmatpush1.msra.mxu0 0.0
    %873 = vmatprep.subr.mxu0 0.0
    %874 = vmatpush1.msra.mxu0 0.0
    %875 = vmatprep.subr.mxu0 0.0
    %876 = vmatpush1.msra.mxu0 0.0
    %877 = vmatprep.subr.mxu0 0.0
    %878 = vmatpush1.msra.mxu0 0.0
    %879 = vmatprep.subr.mxu0 0.0
    %880 = vmatpush1.msra.mxu0 0.0
    %881 = vmatprep.subr.mxu0 0.0
    %882 = vmatpush1.msra.mxu0 0.0
    %883 = vmatprep.subr.mxu0 0.0
    %884 = vmatpush1.msra.mxu0 0.0
    %885 = vmatprep.subr.mxu0 0.0
    %886 = vmatpush1.msra.mxu0 0.0
    %887 = vmatprep.subr.mxu0 0.0
    %888 = vmatpush1.msra.mxu0 0.0
    %889 = vmatprep.subr.mxu0 0.0
    %890 = vmatpush1.msra.mxu0 0.0
    %891 = vmatprep.mubr.f32.mxu0 0.0
    %892 = vmatmul.mubr.f32.gmra.mrb[0].mxu0 %v822
    %v893 = vpop.f32.mrb[0].mxu0
    %v894 = vadd.f32 %v813, %v893
    %v895 = vpop.f32.mrb[0].mxu0
    %896 = vmatprep.mubr.f32.mxu0 0.0
    %897 = vmatmul.mubr.f32.gmra.mrb[0].mxu0 %v825
    %v898 = vpop.f32.mrb[0].mxu0
    %v899 = vadd.f32 %v818, %v898
    %v900 = vpop.f32.mrb[0].mxu0
    %901 = vdwg.mxu0
    %s902 = scalar_lea.vmem %s3, 64
    %v903 = vld [vmem:[%s902] sm:$0xff]
    %v904 = vld [vmem:[%s902 + $0x8] sm:$0xff]
    %v905 = vld [vmem:[%s902 + $0x10] sm:$0xff]
    %v906 = vld [vmem:[%s902 + $0x18] sm:$0xff]
    %s907 = scalar_lea.vmem %s4, 2
    %v908 = vld [vmem:[%s907] sm:$0x1]
    %v910 = vlaneseq
    %v911 = vshrl.u32 %v910, 7
    %v912 = vsub.s32 0, %v911
    %v913 = vrot.slane %v908, %v912
    %915 = vmatprep.subr.mxu0 0.0
    %916 = vmatpush1.msra.mxu0 %v903
    %917 = vmatprep.subr.mxu0 0.0
    %918 = vmatpush1.msra.mxu0 %v904
    %919 = vmatprep.subr.mxu0 0.0
    %920 = vmatpush1.msra.mxu0 %v905
    %921 = vmatprep.subr.mxu0 0.0
    %922 = vmatpush1.msra.mxu0 %v906
    %923 = vmatprep.subr.mxu0 0.0
    %924 = vmatpush1.msra.mxu0 0.0
    %925 = vmatprep.subr.mxu0 0.0
    %926 = vmatpush1.msra.mxu0 0.0
    %927 = vmatprep.subr.mxu0 0.0
    %928 = vmatpush1.msra.mxu0 0.0
    %929 = vmatprep.subr.mxu0 0.0
    %930 = vmatpush1.msra.mxu0 0.0
    %931 = vmatprep.subr.mxu0 0.0
    %932 = vmatpush1.msra.mxu0 0.0
    %933 = vmatprep.subr.mxu0 0.0
    %934 = vmatpush1.msra.mxu0 0.0
    %935 = vmatprep.subr.mxu0 0.0
    %936 = vmatpush1.msra.mxu0 0.0
    %937 = vmatprep.subr.mxu0 0.0
    %938 = vmatpush1.msra.mxu0 0.0
    %939 = vmatprep.subr.mxu0 0.0
    %940 = vmatpush1.msra.mxu0 0.0
    %941 = vmatprep.subr.mxu0 0.0
    %942 = vmatpush1.msra.mxu0 0.0
    %943 = vmatprep.subr.mxu0 0.0
    %944 = vmatpush1.msra.mxu0 0.0
    %945 = vmatprep.subr.mxu0 0.0
    %946 = vmatpush1.msra.mxu0 0.0
    %947 = vmatprep.subr.mxu0 0.0
    %948 = vmatpush1.msra.mxu0 0.0
    %949 = vmatprep.subr.mxu0 0.0
    %950 = vmatpush1.msra.mxu0 0.0
    %951 = vmatprep.subr.mxu0 0.0
    %952 = vmatpush1.msra.mxu0 0.0
    %953 = vmatprep.subr.mxu0 0.0
    %954 = vmatpush1.msra.mxu0 0.0
    %955 = vmatprep.subr.mxu0 0.0
    %956 = vmatpush1.msra.mxu0 0.0
    %957 = vmatprep.subr.mxu0 0.0
    %958 = vmatpush1.msra.mxu0 0.0
    %959 = vmatprep.subr.mxu0 0.0
    %960 = vmatpush1.msra.mxu0 0.0
    %961 = vmatprep.subr.mxu0 0.0
    %962 = vmatpush1.msra.mxu0 0.0
    %963 = vmatprep.subr.mxu0 0.0
    %964 = vmatpush1.msra.mxu0 0.0
    %965 = vmatprep.subr.mxu0 0.0
    %966 = vmatpush1.msra.mxu0 0.0
    %967 = vmatprep.subr.mxu0 0.0
    %968 = vmatpush1.msra.mxu0 0.0
    %969 = vmatprep.subr.mxu0 0.0
    %970 = vmatpush1.msra.mxu0 0.0
    %971 = vmatprep.subr.mxu0 0.0
    %972 = vmatpush1.msra.mxu0 0.0
    %973 = vmatprep.subr.mxu0 0.0
    %974 = vmatpush1.msra.mxu0 0.0
    %975 = vmatprep.subr.mxu0 0.0
    %976 = vmatpush1.msra.mxu0 0.0
    %977 = vmatprep.subr.mxu0 0.0
    %978 = vmatpush1.msra.mxu0 0.0
    %979 = vmatprep.mubr.f32.mxu0 0.0
    %980 = vmatmul.mubr.f32.gmra.mrb[0].mxu0 %v129
    %v981 = vpop.f32.mrb[0].mxu0
    %v982 = vadd.f32 %v913, %v981
    %v983 = vpop.f32.mrb[0].mxu0
    %984 = vmatprep.mubr.f32.mxu0 0.0
    %985 = vmatmul.mubr.f32.gmra.mrb[0].mxu0 %v132
    %v986 = vpop.f32.mrb[0].mxu0
    %v987 = vadd.f32 %v913, %v986
    %v988 = vpop.f32.mrb[0].mxu0
    %989 = vdwg.mxu0
    %v991 = vsel %vm215, %v982, 0
    %v994 = vsel %vm215, %v987, 0
    %996 = vmatprep.subr.mxu0 0.0
    %997 = vmatpush1.msra.mxu0 %v105
    %998 = vmatprep.subr.mxu0 0.0
    %999 = vmatpush1.msra.mxu0 %v106
    %1000 = vmatprep.subr.mxu0 0.0
    %1001 = vmatpush1.msra.mxu0 0.0
    %1002 = vmatprep.subr.mxu0 0.0
    %1003 = vmatpush1.msra.mxu0 0.0
    %1004 = vmatprep.subr.mxu0 0.0
    %1005 = vmatpush1.msra.mxu0 0.0
    %1006 = vmatprep.subr.mxu0 0.0
    %1007 = vmatpush1.msra.mxu0 0.0
    %1008 = vmatprep.subr.mxu0 0.0
    %1009 = vmatpush1.msra.mxu0 0.0
    %1010 = vmatprep.subr.mxu0 0.0
    %1011 = vmatpush1.msra.mxu0 0.0
    %1012 = vmatprep.subr.mxu0 0.0
    %1013 = vmatpush1.msra.mxu0 0.0
    %1014 = vmatprep.subr.mxu0 0.0
    %1015 = vmatpush1.msra.mxu0 0.0
    %1016 = vmatprep.subr.mxu0 0.0
    %1017 = vmatpush1.msra.mxu0 0.0
    %1018 = vmatprep.subr.mxu0 0.0
    %1019 = vmatpush1.msra.mxu0 0.0
    %1020 = vmatprep.subr.mxu0 0.0
    %1021 = vmatpush1.msra.mxu0 0.0
    %1022 = vmatprep.subr.mxu0 0.0
    %1023 = vmatpush1.msra.mxu0 0.0
    %1024 = vmatprep.subr.mxu0 0.0
    %1025 = vmatpush1.msra.mxu0 0.0
    %1026 = vmatprep.subr.mxu0 0.0
    %1027 = vmatpush1.msra.mxu0 0.0
    %1028 = vmatprep.subr.mxu0 0.0
    %1029 = vmatpush1.msra.mxu0 0.0
    %1030 = vmatprep.subr.mxu0 0.0
    %1031 = vmatpush1.msra.mxu0 0.0
    %1032 = vmatprep.subr.mxu0 0.0
    %1033 = vmatpush1.msra.mxu0 0.0
    %1034 = vmatprep.subr.mxu0 0.0
    %1035 = vmatpush1.msra.mxu0 0.0
    %1036 = vmatprep.subr.mxu0 0.0
    %1037 = vmatpush1.msra.mxu0 0.0
    %1038 = vmatprep.subr.mxu0 0.0
    %1039 = vmatpush1.msra.mxu0 0.0
    %1040 = vmatprep.subr.mxu0 0.0
    %1041 = vmatpush1.msra.mxu0 0.0
    %1042 = vmatprep.subr.mxu0 0.0
    %1043 = vmatpush1.msra.mxu0 0.0
    %1044 = vmatprep.subr.mxu0 0.0
    %1045 = vmatpush1.msra.mxu0 0.0
    %1046 = vmatprep.subr.mxu0 0.0
    %1047 = vmatpush1.msra.mxu0 0.0
    %1048 = vmatprep.subr.mxu0 0.0
    %1049 = vmatpush1.msra.mxu0 0.0
    %1050 = vmatprep.subr.mxu0 0.0
    %1051 = vmatpush1.msra.mxu0 0.0
    %1052 = vmatprep.subr.mxu0 0.0
    %1053 = vmatpush1.msra.mxu0 0.0
    %1054 = vmatprep.subr.mxu0 0.0
    %1055 = vmatpush1.msra.mxu0 0.0
    %1056 = vmatprep.subr.mxu0 0.0
    %1057 = vmatpush1.msra.mxu0 0.0
    %1058 = vmatprep.subr.mxu0 0.0
    %1059 = vmatpush1.msra.mxu0 0.0
    %1060 = vmatprep.mubr.f32.mxu0 0.0
    %1061 = vmatmul.mubr.f32.gmra.mrb[0].mxu0 %v991
    %v1062 = vpop.f32.mrb[0].mxu0
    %v1063 = vadd.f32 %v213, %v1062
    %v1064 = vpop.f32.mrb[0].mxu0
    %1065 = vmatprep.mubr.f32.mxu0 0.0
    %1066 = vmatmul.mubr.f32.gmra.mrb[0].mxu0 %v994
    %v1067 = vpop.f32.mrb[0].mxu0
    %v1068 = vadd.f32 %v213, %v1067
    %v1069 = vpop.f32.mrb[0].mxu0
    %1070 = vdwg.mxu0
    %v1071 = vsel %vm297, %v1063, -inf
    %v1072 = vrot.slane %v1071, 4
    %v1073 = vmax.f32 %v1071, %v1072
    %v1074 = vrot.slane %v1073, 2
    %v1075 = vmax.f32 %v1073, %v1074
    %v1076 = vrot.slane %v1075, 1
    %v1077 = vmax.f32 %v1075, %v1076
    %v1078 = vsub.f32 %v1063, %v1077
    %v1079 = vmul.f32 %v1078, 1.442695
    %v1080 = vpow.pop %v1079
    %v1081 = vsel %vm297, %v1080, 0.0
    %v1082 = vrot.slane %v1081, 4
    %v1083 = vadd.f32 %v1081, %v1082
    %v1084 = vrot.slane %v1083, 2
    %v1085 = vadd.f32 %v1083, %v1084
    %v1086 = vrot.slane %v1085, 1
    %v1087 = vadd.f32 %v1085, %v1086
    %v1088 = vrcp.pop %v1087
    %v1089 = vmul.f32 %v1080, %v1088
    %v1090 = vsel %vm297, %v1089, 0.0
    %1091 = vadd.xlane.f32.xlu0 %v1090
    %v1092 = vpop.xlane.xlu0 %1091
    %v1093 = vadd.f32 %v1092, 1e-09
    %v1094 = vrcp.pop %v1093
    %v1095 = vmul.f32 %v1089, %v1094
    %v1096 = vsel %vm297, %v1068, -inf
    %v1097 = vrot.slane %v1096, 4
    %v1098 = vmax.f32 %v1096, %v1097
    %v1099 = vrot.slane %v1098, 2
    %v1100 = vmax.f32 %v1098, %v1099
    %v1101 = vrot.slane %v1100, 1
    %v1102 = vmax.f32 %v1100, %v1101
    %v1103 = vsub.f32 %v1068, %v1102
    %v1104 = vmul.f32 %v1103, 1.442695
    %v1105 = vpow.pop %v1104
    %v1106 = vsel %vm297, %v1105, 0.0
    %v1107 = vrot.slane %v1106, 4
    %v1108 = vadd.f32 %v1106, %v1107
    %v1109 = vrot.slane %v1108, 2
    %v1110 = vadd.f32 %v1108, %v1109
    %v1111 = vrot.slane %v1110, 1
    %v1112 = vadd.f32 %v1110, %v1111
    %v1113 = vrcp.pop %v1112
    %v1114 = vmul.f32 %v1105, %v1113
    %v1115 = vsel %vm297, %v1114, 0.0
    %1116 = vadd.xlane.f32.xlu0 %v1115
    %v1117 = vpop.xlane.xlu0 %1116
    %v1118 = vadd.f32 %v1117, 1e-09
    %v1119 = vrcp.pop %v1118
    %v1120 = vmul.f32 %v1114, %v1119
    %v1122 = vsel %vm297, %v1095, 0
    %v1125 = vsel %vm297, %v1120, 0
    %1127 = vmatprep.subr.mxu0 0.0
    %1128 = vmatpush1.msra.mxu0 %v108
    %1129 = vmatprep.subr.mxu0 0.0
    %1130 = vmatpush1.msra.mxu0 %v109
    %1131 = vmatprep.subr.mxu0 0.0
    %1132 = vmatpush1.msra.mxu0 %v110
    %1133 = vmatprep.subr.mxu0 0.0
    %1134 = vmatpush1.msra.mxu0 %v111
    %1135 = vmatprep.subr.mxu0 0.0
    %1136 = vmatpush1.msra.mxu0 %v112
    %1137 = vmatprep.subr.mxu0 0.0
    %1138 = vmatpush1.msra.mxu0 %v113
    %1139 = vmatprep.subr.mxu0 0.0
    %1140 = vmatpush1.msra.mxu0 %v114
    %1141 = vmatprep.subr.mxu0 0.0
    %1142 = vmatpush1.msra.mxu0 %v115
    %1143 = vmatprep.subr.mxu0 0.0
    %1144 = vmatpush1.msra.mxu0 0.0
    %1145 = vmatprep.subr.mxu0 0.0
    %1146 = vmatpush1.msra.mxu0 0.0
    %1147 = vmatprep.subr.mxu0 0.0
    %1148 = vmatpush1.msra.mxu0 0.0
    %1149 = vmatprep.subr.mxu0 0.0
    %1150 = vmatpush1.msra.mxu0 0.0
    %1151 = vmatprep.subr.mxu0 0.0
    %1152 = vmatpush1.msra.mxu0 0.0
    %1153 = vmatprep.subr.mxu0 0.0
    %1154 = vmatpush1.msra.mxu0 0.0
    %1155 = vmatprep.subr.mxu0 0.0
    %1156 = vmatpush1.msra.mxu0 0.0
    %1157 = vmatprep.subr.mxu0 0.0
    %1158 = vmatpush1.msra.mxu0 0.0
    %1159 = vmatprep.subr.mxu0 0.0
    %1160 = vmatpush1.msra.mxu0 0.0
    %1161 = vmatprep.subr.mxu0 0.0
    %1162 = vmatpush1.msra.mxu0 0.0
    %1163 = vmatprep.subr.mxu0 0.0
    %1164 = vmatpush1.msra.mxu0 0.0
    %1165 = vmatprep.subr.mxu0 0.0
    %1166 = vmatpush1.msra.mxu0 0.0
    %1167 = vmatprep.subr.mxu0 0.0
    %1168 = vmatpush1.msra.mxu0 0.0
    %1169 = vmatprep.subr.mxu0 0.0
    %1170 = vmatpush1.msra.mxu0 0.0
    %1171 = vmatprep.subr.mxu0 0.0
    %1172 = vmatpush1.msra.mxu0 0.0
    %1173 = vmatprep.subr.mxu0 0.0
    %1174 = vmatpush1.msra.mxu0 0.0
    %1175 = vmatprep.subr.mxu0 0.0
    %1176 = vmatpush1.msra.mxu0 0.0
    %1177 = vmatprep.subr.mxu0 0.0
    %1178 = vmatpush1.msra.mxu0 0.0
    %1179 = vmatprep.subr.mxu0 0.0
    %1180 = vmatpush1.msra.mxu0 0.0
    %1181 = vmatprep.subr.mxu0 0.0
    %1182 = vmatpush1.msra.mxu0 0.0
    %1183 = vmatprep.subr.mxu0 0.0
    %1184 = vmatpush1.msra.mxu0 0.0
    %1185 = vmatprep.subr.mxu0 0.0
    %1186 = vmatpush1.msra.mxu0 0.0
    %1187 = vmatprep.subr.mxu0 0.0
    %1188 = vmatpush1.msra.mxu0 0.0
    %1189 = vmatprep.subr.mxu0 0.0
    %1190 = vmatpush1.msra.mxu0 0.0
    %1191 = vmatprep.mubr.f32.mxu0 0.0
    %1192 = vmatmul.mubr.f32.gmra.mrb[0].mxu0 %v1122
    %v1193 = vpop.f32.mrb[0].mxu0
    %v1194 = vadd.f32 %v352, %v1193
    %v1195 = vpop.f32.mrb[0].mxu0
    %1196 = vmatprep.mubr.f32.mxu0 0.0
    %1197 = vmatmul.mubr.f32.gmra.mrb[0].mxu0 %v1125
    %v1198 = vpop.f32.mrb[0].mxu0
    %v1199 = vadd.f32 %v352, %v1198
    %v1200 = vpop.f32.mrb[0].mxu0
    %1201 = vdwg.mxu0
    %s1202 = scalar_lea.vmem %s9, 32
    %v1203 = vld [vmem:[%s1202] sm:$0xff]
    %v1204 = vld [vmem:[%s1202 + $0x8] sm:$0xff]
    %v1206 = vsel %vm215, %v1194, 0
    %v1209 = vsel %vm215, %v1199, 0
    %1211 = vmatprep.subr.mxu0 0.0
    %1212 = vmatpush1.msra.mxu0 %v1203
    %1213 = vmatprep.subr.mxu0 0.0
    %1214 = vmatpush1.msra.mxu0 %v1204
    %1215 = vmatprep.subr.mxu0 0.0
    %1216 = vmatpush1.msra.mxu0 0.0
    %1217 = vmatprep.subr.mxu0 0.0
    %1218 = vmatpush1.msra.mxu0 0.0
    %1219 = vmatprep.subr.mxu0 0.0
    %1220 = vmatpush1.msra.mxu0 0.0
    %1221 = vmatprep.subr.mxu0 0.0
    %1222 = vmatpush1.msra.mxu0 0.0
    %1223 = vmatprep.subr.mxu0 0.0
    %1224 = vmatpush1.msra.mxu0 0.0
    %1225 = vmatprep.subr.mxu0 0.0
    %1226 = vmatpush1.msra.mxu0 0.0
    %1227 = vmatprep.subr.mxu0 0.0
    %1228 = vmatpush1.msra.mxu0 0.0
    %1229 = vmatprep.subr.mxu0 0.0
    %1230 = vmatpush1.msra.mxu0 0.0
    %1231 = vmatprep.subr.mxu0 0.0
    %1232 = vmatpush1.msra.mxu0 0.0
    %1233 = vmatprep.subr.mxu0 0.0
    %1234 = vmatpush1.msra.mxu0 0.0
    %1235 = vmatprep.subr.mxu0 0.0
    %1236 = vmatpush1.msra.mxu0 0.0
    %1237 = vmatprep.subr.mxu0 0.0
    %1238 = vmatpush1.msra.mxu0 0.0
    %1239 = vmatprep.subr.mxu0 0.0
    %1240 = vmatpush1.msra.mxu0 0.0
    %1241 = vmatprep.subr.mxu0 0.0
    %1242 = vmatpush1.msra.mxu0 0.0
    %1243 = vmatprep.subr.mxu0 0.0
    %1244 = vmatpush1.msra.mxu0 0.0
    %1245 = vmatprep.subr.mxu0 0.0
    %1246 = vmatpush1.msra.mxu0 0.0
    %1247 = vmatprep.subr.mxu0 0.0
    %1248 = vmatpush1.msra.mxu0 0.0
    %1249 = vmatprep.subr.mxu0 0.0
    %1250 = vmatpush1.msra.mxu0 0.0
    %1251 = vmatprep.subr.mxu0 0.0
    %1252 = vmatpush1.msra.mxu0 0.0
    %1253 = vmatprep.subr.mxu0 0.0
    %1254 = vmatpush1.msra.mxu0 0.0
    %1255 = vmatprep.subr.mxu0 0.0
    %1256 = vmatpush1.msra.mxu0 0.0
    %1257 = vmatprep.subr.mxu0 0.0
    %1258 = vmatpush1.msra.mxu0 0.0
    %1259 = vmatprep.subr.mxu0 0.0
    %1260 = vmatpush1.msra.mxu0 0.0
    %1261 = vmatprep.subr.mxu0 0.0
    %1262 = vmatpush1.msra.mxu0 0.0
    %1263 = vmatprep.subr.mxu0 0.0
    %1264 = vmatpush1.msra.mxu0 0.0
    %1265 = vmatprep.subr.mxu0 0.0
    %1266 = vmatpush1.msra.mxu0 0.0
    %1267 = vmatprep.subr.mxu0 0.0
    %1268 = vmatpush1.msra.mxu0 0.0
    %1269 = vmatprep.subr.mxu0 0.0
    %1270 = vmatpush1.msra.mxu0 0.0
    %1271 = vmatprep.subr.mxu0 0.0
    %1272 = vmatpush1.msra.mxu0 0.0
    %1273 = vmatprep.subr.mxu0 0.0
    %1274 = vmatpush1.msra.mxu0 0.0
    %1275 = vmatprep.mubr.f32.mxu0 0.0
    %1276 = vmatmul.mubr.f32.gmra.mrb[0].mxu0 %v1206
    %v1277 = vpop.f32.mrb[0].mxu0
    %v1278 = vadd.f32 0.0, %v1277
    %v1279 = vpop.f32.mrb[0].mxu0
    %1280 = vmatprep.mubr.f32.mxu0 0.0
    %1281 = vmatmul.mubr.f32.gmra.mrb[0].mxu0 %v1209
    %v1282 = vpop.f32.mrb[0].mxu0
    %v1283 = vadd.f32 0.0, %v1282
    %v1284 = vpop.f32.mrb[0].mxu0
    %1285 = vdwg.mxu0
    %v1286 = vadd.f32 %v894, %v1278
    %v1287 = vadd.f32 %v899, %v1283
    %s1288 = scalar_lea.vmem %s3, 96
    %v1289 = vld [vmem:[%s1288] sm:$0xff]
    %v1290 = vld [vmem:[%s1288 + $0x8] sm:$0xff]
    %v1291 = vld [vmem:[%s1288 + $0x10] sm:$0xff]
    %v1292 = vld [vmem:[%s1288 + $0x18] sm:$0xff]
    %s1293 = scalar_lea.vmem %s4, 3
    %v1294 = vld [vmem:[%s1293] sm:$0x1]
    %v1296 = vlaneseq
    %v1297 = vshrl.u32 %v1296, 7
    %v1298 = vsub.s32 0, %v1297
    %v1299 = vrot.slane %v1294, %v1298
    %1301 = vmatprep.subr.mxu0 0.0
    %1302 = vmatpush1.msra.mxu0 %v1289
    %1303 = vmatprep.subr.mxu0 0.0
    %1304 = vmatpush1.msra.mxu0 %v1290
    %1305 = vmatprep.subr.mxu0 0.0
    %1306 = vmatpush1.msra.mxu0 %v1291
    %1307 = vmatprep.subr.mxu0 0.0
    %1308 = vmatpush1.msra.mxu0 %v1292
    %1309 = vmatprep.subr.mxu0 0.0
    %1310 = vmatpush1.msra.mxu0 0.0
    %1311 = vmatprep.subr.mxu0 0.0
    %1312 = vmatpush1.msra.mxu0 0.0
    %1313 = vmatprep.subr.mxu0 0.0
    %1314 = vmatpush1.msra.mxu0 0.0
    %1315 = vmatprep.subr.mxu0 0.0
    %1316 = vmatpush1.msra.mxu0 0.0
    %1317 = vmatprep.subr.mxu0 0.0
    %1318 = vmatpush1.msra.mxu0 0.0
    %1319 = vmatprep.subr.mxu0 0.0
    %1320 = vmatpush1.msra.mxu0 0.0
    %1321 = vmatprep.subr.mxu0 0.0
    %1322 = vmatpush1.msra.mxu0 0.0
    %1323 = vmatprep.subr.mxu0 0.0
    %1324 = vmatpush1.msra.mxu0 0.0
    %1325 = vmatprep.subr.mxu0 0.0
    %1326 = vmatpush1.msra.mxu0 0.0
    %1327 = vmatprep.subr.mxu0 0.0
    %1328 = vmatpush1.msra.mxu0 0.0
    %1329 = vmatprep.subr.mxu0 0.0
    %1330 = vmatpush1.msra.mxu0 0.0
    %1331 = vmatprep.subr.mxu0 0.0
    %1332 = vmatpush1.msra.mxu0 0.0
    %1333 = vmatprep.subr.mxu0 0.0
    %1334 = vmatpush1.msra.mxu0 0.0
    %1335 = vmatprep.subr.mxu0 0.0
    %1336 = vmatpush1.msra.mxu0 0.0
    %1337 = vmatprep.subr.mxu0 0.0
    %1338 = vmatpush1.msra.mxu0 0.0
    %1339 = vmatprep.subr.mxu0 0.0
    %1340 = vmatpush1.msra.mxu0 0.0
    %1341 = vmatprep.subr.mxu0 0.0
    %1342 = vmatpush1.msra.mxu0 0.0
    %1343 = vmatprep.subr.mxu0 0.0
    %1344 = vmatpush1.msra.mxu0 0.0
    %1345 = vmatprep.subr.mxu0 0.0
    %1346 = vmatpush1.msra.mxu0 0.0
    %1347 = vmatprep.subr.mxu0 0.0
    %1348 = vmatpush1.msra.mxu0 0.0
    %1349 = vmatprep.subr.mxu0 0.0
    %1350 = vmatpush1.msra.mxu0 0.0
    %1351 = vmatprep.subr.mxu0 0.0
    %1352 = vmatpush1.msra.mxu0 0.0
    %1353 = vmatprep.subr.mxu0 0.0
    %1354 = vmatpush1.msra.mxu0 0.0
    %1355 = vmatprep.subr.mxu0 0.0
    %1356 = vmatpush1.msra.mxu0 0.0
    %1357 = vmatprep.subr.mxu0 0.0
    %1358 = vmatpush1.msra.mxu0 0.0
    %1359 = vmatprep.subr.mxu0 0.0
    %1360 = vmatpush1.msra.mxu0 0.0
    %1361 = vmatprep.subr.mxu0 0.0
    %1362 = vmatpush1.msra.mxu0 0.0
    %1363 = vmatprep.subr.mxu0 0.0
    %1364 = vmatpush1.msra.mxu0 0.0
    %1365 = vmatprep.mubr.f32.mxu0 0.0
    %1366 = vmatmul.mubr.f32.gmra.mrb[0].mxu0 %v129
    %v1367 = vpop.f32.mrb[0].mxu0
    %v1368 = vadd.f32 %v1299, %v1367
    %v1369 = vpop.f32.mrb[0].mxu0
    %1370 = vmatprep.mubr.f32.mxu0 0.0
    %1371 = vmatmul.mubr.f32.gmra.mrb[0].mxu0 %v132
    %v1372 = vpop.f32.mrb[0].mxu0
    %v1373 = vadd.f32 %v1299, %v1372
    %v1374 = vpop.f32.mrb[0].mxu0
    %1375 = vdwg.mxu0
    %v1377 = vsel %vm215, %v1368, 0
    %v1380 = vsel %vm215, %v1373, 0
    %1382 = vmatprep.subr.mxu0 0.0
    %1383 = vmatpush1.msra.mxu0 %v105
    %1384 = vmatprep.subr.mxu0 0.0
    %1385 = vmatpush1.msra.mxu0 %v106
    %1386 = vmatprep.subr.mxu0 0.0
    %1387 = vmatpush1.msra.mxu0 0.0
    %1388 = vmatprep.subr.mxu0 0.0
    %1389 = vmatpush1.msra.mxu0 0.0
    %1390 = vmatprep.subr.mxu0 0.0
    %1391 = vmatpush1.msra.mxu0 0.0
    %1392 = vmatprep.subr.mxu0 0.0
    %1393 = vmatpush1.msra.mxu0 0.0
    %1394 = vmatprep.subr.mxu0 0.0
    %1395 = vmatpush1.msra.mxu0 0.0
    %1396 = vmatprep.subr.mxu0 0.0
    %1397 = vmatpush1.msra.mxu0 0.0
    %1398 = vmatprep.subr.mxu0 0.0
    %1399 = vmatpush1.msra.mxu0 0.0
    %1400 = vmatprep.subr.mxu0 0.0
    %1401 = vmatpush1.msra.mxu0 0.0
    %1402 = vmatprep.subr.mxu0 0.0
    %1403 = vmatpush1.msra.mxu0 0.0
    %1404 = vmatprep.subr.mxu0 0.0
    %1405 = vmatpush1.msra.mxu0 0.0
    %1406 = vmatprep.subr.mxu0 0.0
    %1407 = vmatpush1.msra.mxu0 0.0
    %1408 = vmatprep.subr.mxu0 0.0
    %1409 = vmatpush1.msra.mxu0 0.0
    %1410 = vmatprep.subr.mxu0 0.0
    %1411 = vmatpush1.msra.mxu0 0.0
    %1412 = vmatprep.subr.mxu0 0.0
    %1413 = vmatpush1.msra.mxu0 0.0
    %1414 = vmatprep.subr.mxu0 0.0
    %1415 = vmatpush1.msra.mxu0 0.0
    %1416 = vmatprep.subr.mxu0 0.0
    %1417 = vmatpush1.msra.mxu0 0.0
    %1418 = vmatprep.subr.mxu0 0.0
    %1419 = vmatpush1.msra.mxu0 0.0
    %1420 = vmatprep.subr.mxu0 0.0
    %1421 = vmatpush1.msra.mxu0 0.0
    %1422 = vmatprep.subr.mxu0 0.0
    %1423 = vmatpush1.msra.mxu0 0.0
    %1424 = vmatprep.subr.mxu0 0.0
    %1425 = vmatpush1.msra.mxu0 0.0
    %1426 = vmatprep.subr.mxu0 0.0
    %1427 = vmatpush1.msra.mxu0 0.0
    %1428 = vmatprep.subr.mxu0 0.0
    %1429 = vmatpush1.msra.mxu0 0.0
    %1430 = vmatprep.subr.mxu0 0.0
    %1431 = vmatpush1.msra.mxu0 0.0
    %1432 = vmatprep.subr.mxu0 0.0
    %1433 = vmatpush1.msra.mxu0 0.0
    %1434 = vmatprep.subr.mxu0 0.0
    %1435 = vmatpush1.msra.mxu0 0.0
    %1436 = vmatprep.subr.mxu0 0.0
    %1437 = vmatpush1.msra.mxu0 0.0
    %1438 = vmatprep.subr.mxu0 0.0
    %1439 = vmatpush1.msra.mxu0 0.0
    %1440 = vmatprep.subr.mxu0 0.0
    %1441 = vmatpush1.msra.mxu0 0.0
    %1442 = vmatprep.subr.mxu0 0.0
    %1443 = vmatpush1.msra.mxu0 0.0
    %1444 = vmatprep.subr.mxu0 0.0
    %1445 = vmatpush1.msra.mxu0 0.0
    %1446 = vmatprep.mubr.f32.mxu0 0.0
    %1447 = vmatmul.mubr.f32.gmra.mrb[0].mxu0 %v1377
    %v1448 = vpop.f32.mrb[0].mxu0
    %v1449 = vadd.f32 %v213, %v1448
    %v1450 = vpop.f32.mrb[0].mxu0
    %1451 = vmatprep.mubr.f32.mxu0 0.0
    %1452 = vmatmul.mubr.f32.gmra.mrb[0].mxu0 %v1380
    %v1453 = vpop.f32.mrb[0].mxu0
    %v1454 = vadd.f32 %v213, %v1453
    %v1455 = vpop.f32.mrb[0].mxu0
    %1456 = vdwg.mxu0
    %v1457 = vsel %vm297, %v1449, -inf
    %v1458 = vrot.slane %v1457, 4
    %v1459 = vmax.f32 %v1457, %v1458
    %v1460 = vrot.slane %v1459, 2
    %v1461 = vmax.f32 %v1459, %v1460
    %v1462 = vrot.slane %v1461, 1
    %v1463 = vmax.f32 %v1461, %v1462
    %v1464 = vsub.f32 %v1449, %v1463
    %v1465 = vmul.f32 %v1464, 1.442695
    %v1466 = vpow.pop %v1465
    %v1467 = vsel %vm297, %v1466, 0.0
    %v1468 = vrot.slane %v1467, 4
    %v1469 = vadd.f32 %v1467, %v1468
    %v1470 = vrot.slane %v1469, 2
    %v1471 = vadd.f32 %v1469, %v1470
    %v1472 = vrot.slane %v1471, 1
    %v1473 = vadd.f32 %v1471, %v1472
    %v1474 = vrcp.pop %v1473
    %v1475 = vmul.f32 %v1466, %v1474
    %v1476 = vsel %vm297, %v1475, 0.0
    %1477 = vadd.xlane.f32.xlu0 %v1476
    %v1478 = vpop.xlane.xlu0 %1477
    %v1479 = vadd.f32 %v1478, 1e-09
    %v1480 = vrcp.pop %v1479
    %v1481 = vmul.f32 %v1475, %v1480
    %v1482 = vsel %vm297, %v1454, -inf
    %v1483 = vrot.slane %v1482, 4
    %v1484 = vmax.f32 %v1482, %v1483
    %v1485 = vrot.slane %v1484, 2
    %v1486 = vmax.f32 %v1484, %v1485
    %v1487 = vrot.slane %v1486, 1
    %v1488 = vmax.f32 %v1486, %v1487
    %v1489 = vsub.f32 %v1454, %v1488
    %v1490 = vmul.f32 %v1489, 1.442695
    %v1491 = vpow.pop %v1490
    %v1492 = vsel %vm297, %v1491, 0.0
    %v1493 = vrot.slane %v1492, 4
    %v1494 = vadd.f32 %v1492, %v1493
    %v1495 = vrot.slane %v1494, 2
    %v1496 = vadd.f32 %v1494, %v1495
    %v1497 = vrot.slane %v1496, 1
    %v1498 = vadd.f32 %v1496, %v1497
    %v1499 = vrcp.pop %v1498
    %v1500 = vmul.f32 %v1491, %v1499
    %v1501 = vsel %vm297, %v1500, 0.0
    %1502 = vadd.xlane.f32.xlu0 %v1501
    %v1503 = vpop.xlane.xlu0 %1502
    %v1504 = vadd.f32 %v1503, 1e-09
    %v1505 = vrcp.pop %v1504
    %v1506 = vmul.f32 %v1500, %v1505
    %v1508 = vsel %vm297, %v1481, 0
    %v1511 = vsel %vm297, %v1506, 0
    %1513 = vmatprep.subr.mxu0 0.0
    %1514 = vmatpush1.msra.mxu0 %v108
    %1515 = vmatprep.subr.mxu0 0.0
    %1516 = vmatpush1.msra.mxu0 %v109
    %1517 = vmatprep.subr.mxu0 0.0
    %1518 = vmatpush1.msra.mxu0 %v110
    %1519 = vmatprep.subr.mxu0 0.0
    %1520 = vmatpush1.msra.mxu0 %v111
    %1521 = vmatprep.subr.mxu0 0.0
    %1522 = vmatpush1.msra.mxu0 %v112
    %1523 = vmatprep.subr.mxu0 0.0
    %1524 = vmatpush1.msra.mxu0 %v113
    %1525 = vmatprep.subr.mxu0 0.0
    %1526 = vmatpush1.msra.mxu0 %v114
    %1527 = vmatprep.subr.mxu0 0.0
    %1528 = vmatpush1.msra.mxu0 %v115
    %1529 = vmatprep.subr.mxu0 0.0
    %1530 = vmatpush1.msra.mxu0 0.0
    %1531 = vmatprep.subr.mxu0 0.0
    %1532 = vmatpush1.msra.mxu0 0.0
    %1533 = vmatprep.subr.mxu0 0.0
    %1534 = vmatpush1.msra.mxu0 0.0
    %1535 = vmatprep.subr.mxu0 0.0
    %1536 = vmatpush1.msra.mxu0 0.0
    %1537 = vmatprep.subr.mxu0 0.0
    %1538 = vmatpush1.msra.mxu0 0.0
    %1539 = vmatprep.subr.mxu0 0.0
    %1540 = vmatpush1.msra.mxu0 0.0
    %1541 = vmatprep.subr.mxu0 0.0
    %1542 = vmatpush1.msra.mxu0 0.0
    %1543 = vmatprep.subr.mxu0 0.0
    %1544 = vmatpush1.msra.mxu0 0.0
    %1545 = vmatprep.subr.mxu0 0.0
    %1546 = vmatpush1.msra.mxu0 0.0
    %1547 = vmatprep.subr.mxu0 0.0
    %1548 = vmatpush1.msra.mxu0 0.0
    %1549 = vmatprep.subr.mxu0 0.0
    %1550 = vmatpush1.msra.mxu0 0.0
    %1551 = vmatprep.subr.mxu0 0.0
    %1552 = vmatpush1.msra.mxu0 0.0
    %1553 = vmatprep.subr.mxu0 0.0
    %1554 = vmatpush1.msra.mxu0 0.0
    %1555 = vmatprep.subr.mxu0 0.0
    %1556 = vmatpush1.msra.mxu0 0.0
    %1557 = vmatprep.subr.mxu0 0.0
    %1558 = vmatpush1.msra.mxu0 0.0
    %1559 = vmatprep.subr.mxu0 0.0
    %1560 = vmatpush1.msra.mxu0 0.0
    %1561 = vmatprep.subr.mxu0 0.0
    %1562 = vmatpush1.msra.mxu0 0.0
    %1563 = vmatprep.subr.mxu0 0.0
    %1564 = vmatpush1.msra.mxu0 0.0
    %1565 = vmatprep.subr.mxu0 0.0
    %1566 = vmatpush1.msra.mxu0 0.0
    %1567 = vmatprep.subr.mxu0 0.0
    %1568 = vmatpush1.msra.mxu0 0.0
    %1569 = vmatprep.subr.mxu0 0.0
    %1570 = vmatpush1.msra.mxu0 0.0
    %1571 = vmatprep.subr.mxu0 0.0
    %1572 = vmatpush1.msra.mxu0 0.0
    %1573 = vmatprep.subr.mxu0 0.0
    %1574 = vmatpush1.msra.mxu0 0.0
    %1575 = vmatprep.subr.mxu0 0.0
    %1576 = vmatpush1.msra.mxu0 0.0
    %1577 = vmatprep.mubr.f32.mxu0 0.0
    %1578 = vmatmul.mubr.f32.gmra.mrb[0].mxu0 %v1508
    %v1579 = vpop.f32.mrb[0].mxu0
    %v1580 = vadd.f32 %v352, %v1579
    %v1581 = vpop.f32.mrb[0].mxu0
    %1582 = vmatprep.mubr.f32.mxu0 0.0
    %1583 = vmatmul.mubr.f32.gmra.mrb[0].mxu0 %v1511
    %v1584 = vpop.f32.mrb[0].mxu0
    %v1585 = vadd.f32 %v352, %v1584
    %v1586 = vpop.f32.mrb[0].mxu0
    %1587 = vdwg.mxu0
    %s1588 = scalar_lea.vmem %s9, 48
    %v1589 = vld [vmem:[%s1588] sm:$0xff]
    %v1590 = vld [vmem:[%s1588 + $0x8] sm:$0xff]
    %v1592 = vsel %vm215, %v1580, 0
    %v1595 = vsel %vm215, %v1585, 0
    %1597 = vmatprep.subr.mxu0 0.0
    %1598 = vmatpush1.msra.mxu0 %v1589
    %1599 = vmatprep.subr.mxu0 0.0
    %1600 = vmatpush1.msra.mxu0 %v1590
    %1601 = vmatprep.subr.mxu0 0.0
    %1602 = vmatpush1.msra.mxu0 0.0
    %1603 = vmatprep.subr.mxu0 0.0
    %1604 = vmatpush1.msra.mxu0 0.0
    %1605 = vmatprep.subr.mxu0 0.0
    %1606 = vmatpush1.msra.mxu0 0.0
    %1607 = vmatprep.subr.mxu0 0.0
    %1608 = vmatpush1.msra.mxu0 0.0
    %1609 = vmatprep.subr.mxu0 0.0
    %1610 = vmatpush1.msra.mxu0 0.0
    %1611 = vmatprep.subr.mxu0 0.0
    %1612 = vmatpush1.msra.mxu0 0.0
    %1613 = vmatprep.subr.mxu0 0.0
    %1614 = vmatpush1.msra.mxu0 0.0
    %1615 = vmatprep.subr.mxu0 0.0
    %1616 = vmatpush1.msra.mxu0 0.0
    %1617 = vmatprep.subr.mxu0 0.0
    %1618 = vmatpush1.msra.mxu0 0.0
    %1619 = vmatprep.subr.mxu0 0.0
    %1620 = vmatpush1.msra.mxu0 0.0
    %1621 = vmatprep.subr.mxu0 0.0
    %1622 = vmatpush1.msra.mxu0 0.0
    %1623 = vmatprep.subr.mxu0 0.0
    %1624 = vmatpush1.msra.mxu0 0.0
    %1625 = vmatprep.subr.mxu0 0.0
    %1626 = vmatpush1.msra.mxu0 0.0
    %1627 = vmatprep.subr.mxu0 0.0
    %1628 = vmatpush1.msra.mxu0 0.0
    %1629 = vmatprep.subr.mxu0 0.0
    %1630 = vmatpush1.msra.mxu0 0.0
    %1631 = vmatprep.subr.mxu0 0.0
    %1632 = vmatpush1.msra.mxu0 0.0
    %1633 = vmatprep.subr.mxu0 0.0
    %1634 = vmatpush1.msra.mxu0 0.0
    %1635 = vmatprep.subr.mxu0 0.0
    %1636 = vmatpush1.msra.mxu0 0.0
    %1637 = vmatprep.subr.mxu0 0.0
    %1638 = vmatpush1.msra.mxu0 0.0
    %1639 = vmatprep.subr.mxu0 0.0
    %1640 = vmatpush1.msra.mxu0 0.0
    %1641 = vmatprep.subr.mxu0 0.0
    %1642 = vmatpush1.msra.mxu0 0.0
    %1643 = vmatprep.subr.mxu0 0.0
    %1644 = vmatpush1.msra.mxu0 0.0
    %1645 = vmatprep.subr.mxu0 0.0
    %1646 = vmatpush1.msra.mxu0 0.0
    %1647 = vmatprep.subr.mxu0 0.0
    %1648 = vmatpush1.msra.mxu0 0.0
    %1649 = vmatprep.subr.mxu0 0.0
    %1650 = vmatpush1.msra.mxu0 0.0
    %1651 = vmatprep.subr.mxu0 0.0
    %1652 = vmatpush1.msra.mxu0 0.0
    %1653 = vmatprep.subr.mxu0 0.0
    %1654 = vmatpush1.msra.mxu0 0.0
    %1655 = vmatprep.subr.mxu0 0.0
    %1656 = vmatpush1.msra.mxu0 0.0
    %1657 = vmatprep.subr.mxu0 0.0
    %1658 = vmatpush1.msra.mxu0 0.0
    %1659 = vmatprep.subr.mxu0 0.0
    %1660 = vmatpush1.msra.mxu0 0.0
    %1661 = vmatprep.mubr.f32.mxu0 0.0
    %1662 = vmatmul.mubr.f32.gmra.mrb[0].mxu0 %v1592
    %v1663 = vpop.f32.mrb[0].mxu0
    %v1664 = vadd.f32 0.0, %v1663
    %v1665 = vpop.f32.mrb[0].mxu0
    %1666 = vmatprep.mubr.f32.mxu0 0.0
    %1667 = vmatmul.mubr.f32.gmra.mrb[0].mxu0 %v1595
    %v1668 = vpop.f32.mrb[0].mxu0
    %v1669 = vadd.f32 0.0, %v1668
    %v1670 = vpop.f32.mrb[0].mxu0
    %1671 = vdwg.mxu0
    %v1672 = vadd.f32 %v1286, %v1664
    %v1673 = vadd.f32 %v1287, %v1669
    %s1674 = scalar_lea.vmem %s3, 128
    %v1675 = vld [vmem:[%s1674] sm:$0xff]
    %v1676 = vld [vmem:[%s1674 + $0x8] sm:$0xff]
    %v1677 = vld [vmem:[%s1674 + $0x10] sm:$0xff]
    %v1678 = vld [vmem:[%s1674 + $0x18] sm:$0xff]
    %s1679 = scalar_lea.vmem %s4, 4
    %v1680 = vld [vmem:[%s1679] sm:$0x1]
    %v1682 = vlaneseq
    %v1683 = vshrl.u32 %v1682, 7
    %v1684 = vsub.s32 0, %v1683
    %v1685 = vrot.slane %v1680, %v1684
    %1687 = vmatprep.subr.mxu0 0.0
    %1688 = vmatpush1.msra.mxu0 %v1675
    %1689 = vmatprep.subr.mxu0 0.0
    %1690 = vmatpush1.msra.mxu0 %v1676
    %1691 = vmatprep.subr.mxu0 0.0
    %1692 = vmatpush1.msra.mxu0 %v1677
    %1693 = vmatprep.subr.mxu0 0.0
    %1694 = vmatpush1.msra.mxu0 %v1678
    %1695 = vmatprep.subr.mxu0 0.0
    %1696 = vmatpush1.msra.mxu0 0.0
    %1697 = vmatprep.subr.mxu0 0.0
    %1698 = vmatpush1.msra.mxu0 0.0
    %1699 = vmatprep.subr.mxu0 0.0
    %1700 = vmatpush1.msra.mxu0 0.0
    %1701 = vmatprep.subr.mxu0 0.0
    %1702 = vmatpush1.msra.mxu0 0.0
    %1703 = vmatprep.subr.mxu0 0.0
    %1704 = vmatpush1.msra.mxu0 0.0
    %1705 = vmatprep.subr.mxu0 0.0
    %1706 = vmatpush1.msra.mxu0 0.0
    %1707 = vmatprep.subr.mxu0 0.0
    %1708 = vmatpush1.msra.mxu0 0.0
    %1709 = vmatprep.subr.mxu0 0.0
    %1710 = vmatpush1.msra.mxu0 0.0
    %1711 = vmatprep.subr.mxu0 0.0
    %1712 = vmatpush1.msra.mxu0 0.0
    %1713 = vmatprep.subr.mxu0 0.0
    %1714 = vmatpush1.msra.mxu0 0.0
    %1715 = vmatprep.subr.mxu0 0.0
    %1716 = vmatpush1.msra.mxu0 0.0
    %1717 = vmatprep.subr.mxu0 0.0
    %1718 = vmatpush1.msra.mxu0 0.0
    %1719 = vmatprep.subr.mxu0 0.0
    %1720 = vmatpush1.msra.mxu0 0.0
    %1721 = vmatprep.subr.mxu0 0.0
    %1722 = vmatpush1.msra.mxu0 0.0
    %1723 = vmatprep.subr.mxu0 0.0
    %1724 = vmatpush1.msra.mxu0 0.0
    %1725 = vmatprep.subr.mxu0 0.0
    %1726 = vmatpush1.msra.mxu0 0.0
    %1727 = vmatprep.subr.mxu0 0.0
    %1728 = vmatpush1.msra.mxu0 0.0
    %1729 = vmatprep.subr.mxu0 0.0
    %1730 = vmatpush1.msra.mxu0 0.0
    %1731 = vmatprep.subr.mxu0 0.0
    %1732 = vmatpush1.msra.mxu0 0.0
    %1733 = vmatprep.subr.mxu0 0.0
    %1734 = vmatpush1.msra.mxu0 0.0
    %1735 = vmatprep.subr.mxu0 0.0
    %1736 = vmatpush1.msra.mxu0 0.0
    %1737 = vmatprep.subr.mxu0 0.0
    %1738 = vmatpush1.msra.mxu0 0.0
    %1739 = vmatprep.subr.mxu0 0.0
    %1740 = vmatpush1.msra.mxu0 0.0
    %1741 = vmatprep.subr.mxu0 0.0
    %1742 = vmatpush1.msra.mxu0 0.0
    %1743 = vmatprep.subr.mxu0 0.0
    %1744 = vmatpush1.msra.mxu0 0.0
    %1745 = vmatprep.subr.mxu0 0.0
    %1746 = vmatpush1.msra.mxu0 0.0
    %1747 = vmatprep.subr.mxu0 0.0
    %1748 = vmatpush1.msra.mxu0 0.0
    %1749 = vmatprep.subr.mxu0 0.0
    %1750 = vmatpush1.msra.mxu0 0.0
    %1751 = vmatprep.mubr.f32.mxu0 0.0
    %1752 = vmatmul.mubr.f32.gmra.mrb[0].mxu0 %v129
    %v1753 = vpop.f32.mrb[0].mxu0
    %v1754 = vadd.f32 %v1685, %v1753
    %v1755 = vpop.f32.mrb[0].mxu0
    %1756 = vmatprep.mubr.f32.mxu0 0.0
    %1757 = vmatmul.mubr.f32.gmra.mrb[0].mxu0 %v132
    %v1758 = vpop.f32.mrb[0].mxu0
    %v1759 = vadd.f32 %v1685, %v1758
    %v1760 = vpop.f32.mrb[0].mxu0
    %1761 = vdwg.mxu0
    %v1763 = vsel %vm215, %v1754, 0
    %v1766 = vsel %vm215, %v1759, 0
    %1768 = vmatprep.subr.mxu0 0.0
    %1769 = vmatpush1.msra.mxu0 %v105
    %1770 = vmatprep.subr.mxu0 0.0
    %1771 = vmatpush1.msra.mxu0 %v106
    %1772 = vmatprep.subr.mxu0 0.0
    %1773 = vmatpush1.msra.mxu0 0.0
    %1774 = vmatprep.subr.mxu0 0.0
    %1775 = vmatpush1.msra.mxu0 0.0
    %1776 = vmatprep.subr.mxu0 0.0
    %1777 = vmatpush1.msra.mxu0 0.0
    %1778 = vmatprep.subr.mxu0 0.0
    %1779 = vmatpush1.msra.mxu0 0.0
    %1780 = vmatprep.subr.mxu0 0.0
    %1781 = vmatpush1.msra.mxu0 0.0
    %1782 = vmatprep.subr.mxu0 0.0
    %1783 = vmatpush1.msra.mxu0 0.0
    %1784 = vmatprep.subr.mxu0 0.0
    %1785 = vmatpush1.msra.mxu0 0.0
    %1786 = vmatprep.subr.mxu0 0.0
    %1787 = vmatpush1.msra.mxu0 0.0
    %1788 = vmatprep.subr.mxu0 0.0
    %1789 = vmatpush1.msra.mxu0 0.0
    %1790 = vmatprep.subr.mxu0 0.0
    %1791 = vmatpush1.msra.mxu0 0.0
    %1792 = vmatprep.subr.mxu0 0.0
    %1793 = vmatpush1.msra.mxu0 0.0
    %1794 = vmatprep.subr.mxu0 0.0
    %1795 = vmatpush1.msra.mxu0 0.0
    %1796 = vmatprep.subr.mxu0 0.0
    %1797 = vmatpush1.msra.mxu0 0.0
    %1798 = vmatprep.subr.mxu0 0.0
    %1799 = vmatpush1.msra.mxu0 0.0
    %1800 = vmatprep.subr.mxu0 0.0
    %1801 = vmatpush1.msra.mxu0 0.0
    %1802 = vmatprep.subr.mxu0 0.0
    %1803 = vmatpush1.msra.mxu0 0.0
    %1804 = vmatprep.subr.mxu0 0.0
    %1805 = vmatpush1.msra.mxu0 0.0
    %1806 = vmatprep.subr.mxu0 0.0
    %1807 = vmatpush1.msra.mxu0 0.0
    %1808 = vmatprep.subr.mxu0 0.0
    %1809 = vmatpush1.msra.mxu0 0.0
    %1810 = vmatprep.subr.mxu0 0.0
    %1811 = vmatpush1.msra.mxu0 0.0
    %1812 = vmatprep.subr.mxu0 0.0
    %1813 = vmatpush1.msra.mxu0 0.0
    %1814 = vmatprep.subr.mxu0 0.0
    %1815 = vmatpush1.msra.mxu0 0.0
    %1816 = vmatprep.subr.mxu0 0.0
    %1817 = vmatpush1.msra.mxu0 0.0
    %1818 = vmatprep.subr.mxu0 0.0
    %1819 = vmatpush1.msra.mxu0 0.0
    %1820 = vmatprep.subr.mxu0 0.0
    %1821 = vmatpush1.msra.mxu0 0.0
    %1822 = vmatprep.subr.mxu0 0.0
    %1823 = vmatpush1.msra.mxu0 0.0
    %1824 = vmatprep.subr.mxu0 0.0
    %1825 = vmatpush1.msra.mxu0 0.0
    %1826 = vmatprep.subr.mxu0 0.0
    %1827 = vmatpush1.msra.mxu0 0.0
    %1828 = vmatprep.subr.mxu0 0.0
    %1829 = vmatpush1.msra.mxu0 0.0
    %1830 = vmatprep.subr.mxu0 0.0
    %1831 = vmatpush1.msra.mxu0 0.0
    %1832 = vmatprep.mubr.f32.mxu0 0.0
    %1833 = vmatmul.mubr.f32.gmra.mrb[0].mxu0 %v1763
    %v1834 = vpop.f32.mrb[0].mxu0
    %v1835 = vadd.f32 %v213, %v1834
    %v1836 = vpop.f32.mrb[0].mxu0
    %1837 = vmatprep.mubr.f32.mxu0 0.0
    %1838 = vmatmul.mubr.f32.gmra.mrb[0].mxu0 %v1766
    %v1839 = vpop.f32.mrb[0].mxu0
    %v1840 = vadd.f32 %v213, %v1839
    %v1841 = vpop.f32.mrb[0].mxu0
    %1842 = vdwg.mxu0
    %v1843 = vsel %vm297, %v1835, -inf
    %v1844 = vrot.slane %v1843, 4
    %v1845 = vmax.f32 %v1843, %v1844
    %v1846 = vrot.slane %v1845, 2
    %v1847 = vmax.f32 %v1845, %v1846
    %v1848 = vrot.slane %v1847, 1
    %v1849 = vmax.f32 %v1847, %v1848
    %v1850 = vsub.f32 %v1835, %v1849
    %v1851 = vmul.f32 %v1850, 1.442695
    %v1852 = vpow.pop %v1851
    %v1853 = vsel %vm297, %v1852, 0.0
    %v1854 = vrot.slane %v1853, 4
    %v1855 = vadd.f32 %v1853, %v1854
    %v1856 = vrot.slane %v1855, 2
    %v1857 = vadd.f32 %v1855, %v1856
    %v1858 = vrot.slane %v1857, 1
    %v1859 = vadd.f32 %v1857, %v1858
    %v1860 = vrcp.pop %v1859
    %v1861 = vmul.f32 %v1852, %v1860
    %v1862 = vsel %vm297, %v1861, 0.0
    %1863 = vadd.xlane.f32.xlu0 %v1862
    %v1864 = vpop.xlane.xlu0 %1863
    %v1865 = vadd.f32 %v1864, 1e-09
    %v1866 = vrcp.pop %v1865
    %v1867 = vmul.f32 %v1861, %v1866
    %v1868 = vsel %vm297, %v1840, -inf
    %v1869 = vrot.slane %v1868, 4
    %v1870 = vmax.f32 %v1868, %v1869
    %v1871 = vrot.slane %v1870, 2
    %v1872 = vmax.f32 %v1870, %v1871
    %v1873 = vrot.slane %v1872, 1
    %v1874 = vmax.f32 %v1872, %v1873
    %v1875 = vsub.f32 %v1840, %v1874
    %v1876 = vmul.f32 %v1875, 1.442695
    %v1877 = vpow.pop %v1876
    %v1878 = vsel %vm297, %v1877, 0.0
    %v1879 = vrot.slane %v1878, 4
    %v1880 = vadd.f32 %v1878, %v1879
    %v1881 = vrot.slane %v1880, 2
    %v1882 = vadd.f32 %v1880, %v1881
    %v1883 = vrot.slane %v1882, 1
    %v1884 = vadd.f32 %v1882, %v1883
    %v1885 = vrcp.pop %v1884
    %v1886 = vmul.f32 %v1877, %v1885
    %v1887 = vsel %vm297, %v1886, 0.0
    %1888 = vadd.xlane.f32.xlu0 %v1887
    %v1889 = vpop.xlane.xlu0 %1888
    %v1890 = vadd.f32 %v1889, 1e-09
    %v1891 = vrcp.pop %v1890
    %v1892 = vmul.f32 %v1886, %v1891
    %v1894 = vsel %vm297, %v1867, 0
    %v1897 = vsel %vm297, %v1892, 0
    %1899 = vmatprep.subr.mxu0 0.0
    %1900 = vmatpush1.msra.mxu0 %v108
    %1901 = vmatprep.subr.mxu0 0.0
    %1902 = vmatpush1.msra.mxu0 %v109
    %1903 = vmatprep.subr.mxu0 0.0
    %1904 = vmatpush1.msra.mxu0 %v110
    %1905 = vmatprep.subr.mxu0 0.0
    %1906 = vmatpush1.msra.mxu0 %v111
    %1907 = vmatprep.subr.mxu0 0.0
    %1908 = vmatpush1.msra.mxu0 %v112
    %1909 = vmatprep.subr.mxu0 0.0
    %1910 = vmatpush1.msra.mxu0 %v113
    %1911 = vmatprep.subr.mxu0 0.0
    %1912 = vmatpush1.msra.mxu0 %v114
    %1913 = vmatprep.subr.mxu0 0.0
    %1914 = vmatpush1.msra.mxu0 %v115
    %1915 = vmatprep.subr.mxu0 0.0
    %1916 = vmatpush1.msra.mxu0 0.0
    %1917 = vmatprep.subr.mxu0 0.0
    %1918 = vmatpush1.msra.mxu0 0.0
    %1919 = vmatprep.subr.mxu0 0.0
    %1920 = vmatpush1.msra.mxu0 0.0
    %1921 = vmatprep.subr.mxu0 0.0
    %1922 = vmatpush1.msra.mxu0 0.0
    %1923 = vmatprep.subr.mxu0 0.0
    %1924 = vmatpush1.msra.mxu0 0.0
    %1925 = vmatprep.subr.mxu0 0.0
    %1926 = vmatpush1.msra.mxu0 0.0
    %1927 = vmatprep.subr.mxu0 0.0
    %1928 = vmatpush1.msra.mxu0 0.0
    %1929 = vmatprep.subr.mxu0 0.0
    %1930 = vmatpush1.msra.mxu0 0.0
    %1931 = vmatprep.subr.mxu0 0.0
    %1932 = vmatpush1.msra.mxu0 0.0
    %1933 = vmatprep.subr.mxu0 0.0
    %1934 = vmatpush1.msra.mxu0 0.0
    %1935 = vmatprep.subr.mxu0 0.0
    %1936 = vmatpush1.msra.mxu0 0.0
    %1937 = vmatprep.subr.mxu0 0.0
    %1938 = vmatpush1.msra.mxu0 0.0
    %1939 = vmatprep.subr.mxu0 0.0
    %1940 = vmatpush1.msra.mxu0 0.0
    %1941 = vmatprep.subr.mxu0 0.0
    %1942 = vmatpush1.msra.mxu0 0.0
    %1943 = vmatprep.subr.mxu0 0.0
    %1944 = vmatpush1.msra.mxu0 0.0
    %1945 = vmatprep.subr.mxu0 0.0
    %1946 = vmatpush1.msra.mxu0 0.0
    %1947 = vmatprep.subr.mxu0 0.0
    %1948 = vmatpush1.msra.mxu0 0.0
    %1949 = vmatprep.subr.mxu0 0.0
    %1950 = vmatpush1.msra.mxu0 0.0
    %1951 = vmatprep.subr.mxu0 0.0
    %1952 = vmatpush1.msra.mxu0 0.0
    %1953 = vmatprep.subr.mxu0 0.0
    %1954 = vmatpush1.msra.mxu0 0.0
    %1955 = vmatprep.subr.mxu0 0.0
    %1956 = vmatpush1.msra.mxu0 0.0
    %1957 = vmatprep.subr.mxu0 0.0
    %1958 = vmatpush1.msra.mxu0 0.0
    %1959 = vmatprep.subr.mxu0 0.0
    %1960 = vmatpush1.msra.mxu0 0.0
    %1961 = vmatprep.subr.mxu0 0.0
    %1962 = vmatpush1.msra.mxu0 0.0
    %1963 = vmatprep.mubr.f32.mxu0 0.0
    %1964 = vmatmul.mubr.f32.gmra.mrb[0].mxu0 %v1894
    %v1965 = vpop.f32.mrb[0].mxu0
    %v1966 = vadd.f32 %v352, %v1965
    %v1967 = vpop.f32.mrb[0].mxu0
    %1968 = vmatprep.mubr.f32.mxu0 0.0
    %1969 = vmatmul.mubr.f32.gmra.mrb[0].mxu0 %v1897
    %v1970 = vpop.f32.mrb[0].mxu0
    %v1971 = vadd.f32 %v352, %v1970
    %v1972 = vpop.f32.mrb[0].mxu0
    %1973 = vdwg.mxu0
    %s1974 = scalar_lea.vmem %s9, 64
    %v1975 = vld [vmem:[%s1974] sm:$0xff]
    %v1976 = vld [vmem:[%s1974 + $0x8] sm:$0xff]
    %v1978 = vsel %vm215, %v1966, 0
    %v1981 = vsel %vm215, %v1971, 0
    %1983 = vmatprep.subr.mxu0 0.0
    %1984 = vmatpush1.msra.mxu0 %v1975
    %1985 = vmatprep.subr.mxu0 0.0
    %1986 = vmatpush1.msra.mxu0 %v1976
    %1987 = vmatprep.subr.mxu0 0.0
    %1988 = vmatpush1.msra.mxu0 0.0
    %1989 = vmatprep.subr.mxu0 0.0
    %1990 = vmatpush1.msra.mxu0 0.0
    %1991 = vmatprep.subr.mxu0 0.0
    %1992 = vmatpush1.msra.mxu0 0.0
    %1993 = vmatprep.subr.mxu0 0.0
    %1994 = vmatpush1.msra.mxu0 0.0
    %1995 = vmatprep.subr.mxu0 0.0
    %1996 = vmatpush1.msra.mxu0 0.0
    %1997 = vmatprep.subr.mxu0 0.0
    %1998 = vmatpush1.msra.mxu0 0.0
    %1999 = vmatprep.subr.mxu0 0.0
    %2000 = vmatpush1.msra.mxu0 0.0
    %2001 = vmatprep.subr.mxu0 0.0
    %2002 = vmatpush1.msra.mxu0 0.0
    %2003 = vmatprep.subr.mxu0 0.0
    %2004 = vmatpush1.msra.mxu0 0.0
    %2005 = vmatprep.subr.mxu0 0.0
    %2006 = vmatpush1.msra.mxu0 0.0
    %2007 = vmatprep.subr.mxu0 0.0
    %2008 = vmatpush1.msra.mxu0 0.0
    %2009 = vmatprep.subr.mxu0 0.0
    %2010 = vmatpush1.msra.mxu0 0.0
    %2011 = vmatprep.subr.mxu0 0.0
    %2012 = vmatpush1.msra.mxu0 0.0
    %2013 = vmatprep.subr.mxu0 0.0
    %2014 = vmatpush1.msra.mxu0 0.0
    %2015 = vmatprep.subr.mxu0 0.0
    %2016 = vmatpush1.msra.mxu0 0.0
    %2017 = vmatprep.subr.mxu0 0.0
    %2018 = vmatpush1.msra.mxu0 0.0
    %2019 = vmatprep.subr.mxu0 0.0
    %2020 = vmatpush1.msra.mxu0 0.0
    %2021 = vmatprep.subr.mxu0 0.0
    %2022 = vmatpush1.msra.mxu0 0.0
    %2023 = vmatprep.subr.mxu0 0.0
    %2024 = vmatpush1.msra.mxu0 0.0
    %2025 = vmatprep.subr.mxu0 0.0
    %2026 = vmatpush1.msra.mxu0 0.0
    %2027 = vmatprep.subr.mxu0 0.0
    %2028 = vmatpush1.msra.mxu0 0.0
    %2029 = vmatprep.subr.mxu0 0.0
    %2030 = vmatpush1.msra.mxu0 0.0
    %2031 = vmatprep.subr.mxu0 0.0
    %2032 = vmatpush1.msra.mxu0 0.0
    %2033 = vmatprep.subr.mxu0 0.0
    %2034 = vmatpush1.msra.mxu0 0.0
    %2035 = vmatprep.subr.mxu0 0.0
    %2036 = vmatpush1.msra.mxu0 0.0
    %2037 = vmatprep.subr.mxu0 0.0
    %2038 = vmatpush1.msra.mxu0 0.0
    %2039 = vmatprep.subr.mxu0 0.0
    %2040 = vmatpush1.msra.mxu0 0.0
    %2041 = vmatprep.subr.mxu0 0.0
    %2042 = vmatpush1.msra.mxu0 0.0
    %2043 = vmatprep.subr.mxu0 0.0
    %2044 = vmatpush1.msra.mxu0 0.0
    %2045 = vmatprep.subr.mxu0 0.0
    %2046 = vmatpush1.msra.mxu0 0.0
    %2047 = vmatprep.mubr.f32.mxu0 0.0
    %2048 = vmatmul.mubr.f32.gmra.mrb[0].mxu0 %v1978
    %v2049 = vpop.f32.mrb[0].mxu0
    %v2050 = vadd.f32 0.0, %v2049
    %v2051 = vpop.f32.mrb[0].mxu0
    %2052 = vmatprep.mubr.f32.mxu0 0.0
    %2053 = vmatmul.mubr.f32.gmra.mrb[0].mxu0 %v1981
    %v2054 = vpop.f32.mrb[0].mxu0
    %v2055 = vadd.f32 0.0, %v2054
    %v2056 = vpop.f32.mrb[0].mxu0
    %2057 = vdwg.mxu0
    %v2058 = vadd.f32 %v1672, %v2050
    %v2059 = vadd.f32 %v1673, %v2055
    %s2060 = scalar_lea.vmem %s3, 160
    %v2061 = vld [vmem:[%s2060] sm:$0xff]
    %v2062 = vld [vmem:[%s2060 + $0x8] sm:$0xff]
    %v2063 = vld [vmem:[%s2060 + $0x10] sm:$0xff]
    %v2064 = vld [vmem:[%s2060 + $0x18] sm:$0xff]
    %s2065 = scalar_lea.vmem %s4, 5
    %v2066 = vld [vmem:[%s2065] sm:$0x1]
    %v2068 = vlaneseq
    %v2069 = vshrl.u32 %v2068, 7
    %v2070 = vsub.s32 0, %v2069
    %v2071 = vrot.slane %v2066, %v2070
    %2073 = vmatprep.subr.mxu0 0.0
    %2074 = vmatpush1.msra.mxu0 %v2061
    %2075 = vmatprep.subr.mxu0 0.0
    %2076 = vmatpush1.msra.mxu0 %v2062
    %2077 = vmatprep.subr.mxu0 0.0
    %2078 = vmatpush1.msra.mxu0 %v2063
    %2079 = vmatprep.subr.mxu0 0.0
    %2080 = vmatpush1.msra.mxu0 %v2064
    %2081 = vmatprep.subr.mxu0 0.0
    %2082 = vmatpush1.msra.mxu0 0.0
    %2083 = vmatprep.subr.mxu0 0.0
    %2084 = vmatpush1.msra.mxu0 0.0
    %2085 = vmatprep.subr.mxu0 0.0
    %2086 = vmatpush1.msra.mxu0 0.0
    %2087 = vmatprep.subr.mxu0 0.0
    %2088 = vmatpush1.msra.mxu0 0.0
    %2089 = vmatprep.subr.mxu0 0.0
    %2090 = vmatpush1.msra.mxu0 0.0
    %2091 = vmatprep.subr.mxu0 0.0
    %2092 = vmatpush1.msra.mxu0 0.0
    %2093 = vmatprep.subr.mxu0 0.0
    %2094 = vmatpush1.msra.mxu0 0.0
    %2095 = vmatprep.subr.mxu0 0.0
    %2096 = vmatpush1.msra.mxu0 0.0
    %2097 = vmatprep.subr.mxu0 0.0
    %2098 = vmatpush1.msra.mxu0 0.0
    %2099 = vmatprep.subr.mxu0 0.0
    %2100 = vmatpush1.msra.mxu0 0.0
    %2101 = vmatprep.subr.mxu0 0.0
    %2102 = vmatpush1.msra.mxu0 0.0
    %2103 = vmatprep.subr.mxu0 0.0
    %2104 = vmatpush1.msra.mxu0 0.0
    %2105 = vmatprep.subr.mxu0 0.0
    %2106 = vmatpush1.msra.mxu0 0.0
    %2107 = vmatprep.subr.mxu0 0.0
    %2108 = vmatpush1.msra.mxu0 0.0
    %2109 = vmatprep.subr.mxu0 0.0
    %2110 = vmatpush1.msra.mxu0 0.0
    %2111 = vmatprep.subr.mxu0 0.0
    %2112 = vmatpush1.msra.mxu0 0.0
    %2113 = vmatprep.subr.mxu0 0.0
    %2114 = vmatpush1.msra.mxu0 0.0
    %2115 = vmatprep.subr.mxu0 0.0
    %2116 = vmatpush1.msra.mxu0 0.0
    %2117 = vmatprep.subr.mxu0 0.0
    %2118 = vmatpush1.msra.mxu0 0.0
    %2119 = vmatprep.subr.mxu0 0.0
    %2120 = vmatpush1.msra.mxu0 0.0
    %2121 = vmatprep.subr.mxu0 0.0
    %2122 = vmatpush1.msra.mxu0 0.0
    %2123 = vmatprep.subr.mxu0 0.0
    %2124 = vmatpush1.msra.mxu0 0.0
    %2125 = vmatprep.subr.mxu0 0.0
    %2126 = vmatpush1.msra.mxu0 0.0
    %2127 = vmatprep.subr.mxu0 0.0
    %2128 = vmatpush1.msra.mxu0 0.0
    %2129 = vmatprep.subr.mxu0 0.0
    %2130 = vmatpush1.msra.mxu0 0.0
    %2131 = vmatprep.subr.mxu0 0.0
    %2132 = vmatpush1.msra.mxu0 0.0
    %2133 = vmatprep.subr.mxu0 0.0
    %2134 = vmatpush1.msra.mxu0 0.0
    %2135 = vmatprep.subr.mxu0 0.0
    %2136 = vmatpush1.msra.mxu0 0.0
    %2137 = vmatprep.mubr.f32.mxu0 0.0
    %2138 = vmatmul.mubr.f32.gmra.mrb[0].mxu0 %v129
    %v2139 = vpop.f32.mrb[0].mxu0
    %v2140 = vadd.f32 %v2071, %v2139
    %v2141 = vpop.f32.mrb[0].mxu0
    %2142 = vmatprep.mubr.f32.mxu0 0.0
    %2143 = vmatmul.mubr.f32.gmra.mrb[0].mxu0 %v132
    %v2144 = vpop.f32.mrb[0].mxu0
    %v2145 = vadd.f32 %v2071, %v2144
    %v2146 = vpop.f32.mrb[0].mxu0
    %2147 = vdwg.mxu0
    %v2149 = vsel %vm215, %v2140, 0
    %v2152 = vsel %vm215, %v2145, 0
    %2154 = vmatprep.subr.mxu0 0.0
    %2155 = vmatpush1.msra.mxu0 %v105
    %2156 = vmatprep.subr.mxu0 0.0
    %2157 = vmatpush1.msra.mxu0 %v106
    %2158 = vmatprep.subr.mxu0 0.0
    %2159 = vmatpush1.msra.mxu0 0.0
    %2160 = vmatprep.subr.mxu0 0.0
    %2161 = vmatpush1.msra.mxu0 0.0
    %2162 = vmatprep.subr.mxu0 0.0
    %2163 = vmatpush1.msra.mxu0 0.0
    %2164 = vmatprep.subr.mxu0 0.0
    %2165 = vmatpush1.msra.mxu0 0.0
    %2166 = vmatprep.subr.mxu0 0.0
    %2167 = vmatpush1.msra.mxu0 0.0
    %2168 = vmatprep.subr.mxu0 0.0
    %2169 = vmatpush1.msra.mxu0 0.0
    %2170 = vmatprep.subr.mxu0 0.0
    %2171 = vmatpush1.msra.mxu0 0.0
    %2172 = vmatprep.subr.mxu0 0.0
    %2173 = vmatpush1.msra.mxu0 0.0
    %2174 = vmatprep.subr.mxu0 0.0
    %2175 = vmatpush1.msra.mxu0 0.0
    %2176 = vmatprep.subr.mxu0 0.0
    %2177 = vmatpush1.msra.mxu0 0.0
    %2178 = vmatprep.subr.mxu0 0.0
    %2179 = vmatpush1.msra.mxu0 0.0
    %2180 = vmatprep.subr.mxu0 0.0
    %2181 = vmatpush1.msra.mxu0 0.0
    %2182 = vmatprep.subr.mxu0 0.0
    %2183 = vmatpush1.msra.mxu0 0.0
    %2184 = vmatprep.subr.mxu0 0.0
    %2185 = vmatpush1.msra.mxu0 0.0
    %2186 = vmatprep.subr.mxu0 0.0
    %2187 = vmatpush1.msra.mxu0 0.0
    %2188 = vmatprep.subr.mxu0 0.0
    %2189 = vmatpush1.msra.mxu0 0.0
    %2190 = vmatprep.subr.mxu0 0.0
    %2191 = vmatpush1.msra.mxu0 0.0
    %2192 = vmatprep.subr.mxu0 0.0
    %2193 = vmatpush1.msra.mxu0 0.0
    %2194 = vmatprep.subr.mxu0 0.0
    %2195 = vmatpush1.msra.mxu0 0.0
    %2196 = vmatprep.subr.mxu0 0.0
    %2197 = vmatpush1.msra.mxu0 0.0
    %2198 = vmatprep.subr.mxu0 0.0
    %2199 = vmatpush1.msra.mxu0 0.0
    %2200 = vmatprep.subr.mxu0 0.0
    %2201 = vmatpush1.msra.mxu0 0.0
    %2202 = vmatprep.subr.mxu0 0.0
    %2203 = vmatpush1.msra.mxu0 0.0
    %2204 = vmatprep.subr.mxu0 0.0
    %2205 = vmatpush1.msra.mxu0 0.0
    %2206 = vmatprep.subr.mxu0 0.0
    %2207 = vmatpush1.msra.mxu0 0.0
    %2208 = vmatprep.subr.mxu0 0.0
    %2209 = vmatpush1.msra.mxu0 0.0
    %2210 = vmatprep.subr.mxu0 0.0
    %2211 = vmatpush1.msra.mxu0 0.0
    %2212 = vmatprep.subr.mxu0 0.0
    %2213 = vmatpush1.msra.mxu0 0.0
    %2214 = vmatprep.subr.mxu0 0.0
    %2215 = vmatpush1.msra.mxu0 0.0
    %2216 = vmatprep.subr.mxu0 0.0
    %2217 = vmatpush1.msra.mxu0 0.0
    %2218 = vmatprep.mubr.f32.mxu0 0.0
    %2219 = vmatmul.mubr.f32.gmra.mrb[0].mxu0 %v2149
    %v2220 = vpop.f32.mrb[0].mxu0
    %v2221 = vadd.f32 %v213, %v2220
    %v2222 = vpop.f32.mrb[0].mxu0
    %2223 = vmatprep.mubr.f32.mxu0 0.0
    %2224 = vmatmul.mubr.f32.gmra.mrb[0].mxu0 %v2152
    %v2225 = vpop.f32.mrb[0].mxu0
    %v2226 = vadd.f32 %v213, %v2225
    %v2227 = vpop.f32.mrb[0].mxu0
    %2228 = vdwg.mxu0
    %v2229 = vsel %vm297, %v2221, -inf
    %v2230 = vrot.slane %v2229, 4
    %v2231 = vmax.f32 %v2229, %v2230
    %v2232 = vrot.slane %v2231, 2
    %v2233 = vmax.f32 %v2231, %v2232
    %v2234 = vrot.slane %v2233, 1
    %v2235 = vmax.f32 %v2233, %v2234
    %v2236 = vsub.f32 %v2221, %v2235
    %v2237 = vmul.f32 %v2236, 1.442695
    %v2238 = vpow.pop %v2237
    %v2239 = vsel %vm297, %v2238, 0.0
    %v2240 = vrot.slane %v2239, 4
    %v2241 = vadd.f32 %v2239, %v2240
    %v2242 = vrot.slane %v2241, 2
    %v2243 = vadd.f32 %v2241, %v2242
    %v2244 = vrot.slane %v2243, 1
    %v2245 = vadd.f32 %v2243, %v2244
    %v2246 = vrcp.pop %v2245
    %v2247 = vmul.f32 %v2238, %v2246
    %v2248 = vsel %vm297, %v2247, 0.0
    %2249 = vadd.xlane.f32.xlu0 %v2248
    %v2250 = vpop.xlane.xlu0 %2249
    %v2251 = vadd.f32 %v2250, 1e-09
    %v2252 = vrcp.pop %v2251
    %v2253 = vmul.f32 %v2247, %v2252
    %v2254 = vsel %vm297, %v2226, -inf
    %v2255 = vrot.slane %v2254, 4
    %v2256 = vmax.f32 %v2254, %v2255
    %v2257 = vrot.slane %v2256, 2
    %v2258 = vmax.f32 %v2256, %v2257
    %v2259 = vrot.slane %v2258, 1
    %v2260 = vmax.f32 %v2258, %v2259
    %v2261 = vsub.f32 %v2226, %v2260
    %v2262 = vmul.f32 %v2261, 1.442695
    %v2263 = vpow.pop %v2262
    %v2264 = vsel %vm297, %v2263, 0.0
    %v2265 = vrot.slane %v2264, 4
    %v2266 = vadd.f32 %v2264, %v2265
    %v2267 = vrot.slane %v2266, 2
    %v2268 = vadd.f32 %v2266, %v2267
    %v2269 = vrot.slane %v2268, 1
    %v2270 = vadd.f32 %v2268, %v2269
    %v2271 = vrcp.pop %v2270
    %v2272 = vmul.f32 %v2263, %v2271
    %v2273 = vsel %vm297, %v2272, 0.0
    %2274 = vadd.xlane.f32.xlu0 %v2273
    %v2275 = vpop.xlane.xlu0 %2274
    %v2276 = vadd.f32 %v2275, 1e-09
    %v2277 = vrcp.pop %v2276
    %v2278 = vmul.f32 %v2272, %v2277
    %v2280 = vsel %vm297, %v2253, 0
    %v2283 = vsel %vm297, %v2278, 0
    %2285 = vmatprep.subr.mxu0 0.0
    %2286 = vmatpush1.msra.mxu0 %v108
    %2287 = vmatprep.subr.mxu0 0.0
    %2288 = vmatpush1.msra.mxu0 %v109
    %2289 = vmatprep.subr.mxu0 0.0
    %2290 = vmatpush1.msra.mxu0 %v110
    %2291 = vmatprep.subr.mxu0 0.0
    %2292 = vmatpush1.msra.mxu0 %v111
    %2293 = vmatprep.subr.mxu0 0.0
    %2294 = vmatpush1.msra.mxu0 %v112
    %2295 = vmatprep.subr.mxu0 0.0
    %2296 = vmatpush1.msra.mxu0 %v113
    %2297 = vmatprep.subr.mxu0 0.0
    %2298 = vmatpush1.msra.mxu0 %v114
    %2299 = vmatprep.subr.mxu0 0.0
    %2300 = vmatpush1.msra.mxu0 %v115
    %2301 = vmatprep.subr.mxu0 0.0
    %2302 = vmatpush1.msra.mxu0 0.0
    %2303 = vmatprep.subr.mxu0 0.0
    %2304 = vmatpush1.msra.mxu0 0.0
    %2305 = vmatprep.subr.mxu0 0.0
    %2306 = vmatpush1.msra.mxu0 0.0
    %2307 = vmatprep.subr.mxu0 0.0
    %2308 = vmatpush1.msra.mxu0 0.0
    %2309 = vmatprep.subr.mxu0 0.0
    %2310 = vmatpush1.msra.mxu0 0.0
    %2311 = vmatprep.subr.mxu0 0.0
    %2312 = vmatpush1.msra.mxu0 0.0
    %2313 = vmatprep.subr.mxu0 0.0
    %2314 = vmatpush1.msra.mxu0 0.0
    %2315 = vmatprep.subr.mxu0 0.0
    %2316 = vmatpush1.msra.mxu0 0.0
    %2317 = vmatprep.subr.mxu0 0.0
    %2318 = vmatpush1.msra.mxu0 0.0
    %2319 = vmatprep.subr.mxu0 0.0
    %2320 = vmatpush1.msra.mxu0 0.0
    %2321 = vmatprep.subr.mxu0 0.0
    %2322 = vmatpush1.msra.mxu0 0.0
    %2323 = vmatprep.subr.mxu0 0.0
    %2324 = vmatpush1.msra.mxu0 0.0
    %2325 = vmatprep.subr.mxu0 0.0
    %2326 = vmatpush1.msra.mxu0 0.0
    %2327 = vmatprep.subr.mxu0 0.0
    %2328 = vmatpush1.msra.mxu0 0.0
    %2329 = vmatprep.subr.mxu0 0.0
    %2330 = vmatpush1.msra.mxu0 0.0
    %2331 = vmatprep.subr.mxu0 0.0
    %2332 = vmatpush1.msra.mxu0 0.0
    %2333 = vmatprep.subr.mxu0 0.0
    %2334 = vmatpush1.msra.mxu0 0.0
    %2335 = vmatprep.subr.mxu0 0.0
    %2336 = vmatpush1.msra.mxu0 0.0
    %2337 = vmatprep.subr.mxu0 0.0
    %2338 = vmatpush1.msra.mxu0 0.0
    %2339 = vmatprep.subr.mxu0 0.0
    %2340 = vmatpush1.msra.mxu0 0.0
    %2341 = vmatprep.subr.mxu0 0.0
    %2342 = vmatpush1.msra.mxu0 0.0
    %2343 = vmatprep.subr.mxu0 0.0
    %2344 = vmatpush1.msra.mxu0 0.0
    %2345 = vmatprep.subr.mxu0 0.0
    %2346 = vmatpush1.msra.mxu0 0.0
    %2347 = vmatprep.subr.mxu0 0.0
    %2348 = vmatpush1.msra.mxu0 0.0
    %2349 = vmatprep.mubr.f32.mxu0 0.0
    %2350 = vmatmul.mubr.f32.gmra.mrb[0].mxu0 %v2280
    %v2351 = vpop.f32.mrb[0].mxu0
    %v2352 = vadd.f32 %v352, %v2351
    %v2353 = vpop.f32.mrb[0].mxu0
    %2354 = vmatprep.mubr.f32.mxu0 0.0
    %2355 = vmatmul.mubr.f32.gmra.mrb[0].mxu0 %v2283
    %v2356 = vpop.f32.mrb[0].mxu0
    %v2357 = vadd.f32 %v352, %v2356
    %v2358 = vpop.f32.mrb[0].mxu0
    %2359 = vdwg.mxu0
    %s2360 = scalar_lea.vmem %s9, 80
    %v2361 = vld [vmem:[%s2360] sm:$0xff]
    %v2362 = vld [vmem:[%s2360 + $0x8] sm:$0xff]
    %v2364 = vsel %vm215, %v2352, 0
    %v2367 = vsel %vm215, %v2357, 0
    %2369 = vmatprep.subr.mxu0 0.0
    %2370 = vmatpush1.msra.mxu0 %v2361
    %2371 = vmatprep.subr.mxu0 0.0
    %2372 = vmatpush1.msra.mxu0 %v2362
    %2373 = vmatprep.subr.mxu0 0.0
    %2374 = vmatpush1.msra.mxu0 0.0
    %2375 = vmatprep.subr.mxu0 0.0
    %2376 = vmatpush1.msra.mxu0 0.0
    %2377 = vmatprep.subr.mxu0 0.0
    %2378 = vmatpush1.msra.mxu0 0.0
    %2379 = vmatprep.subr.mxu0 0.0
    %2380 = vmatpush1.msra.mxu0 0.0
    %2381 = vmatprep.subr.mxu0 0.0
    %2382 = vmatpush1.msra.mxu0 0.0
    %2383 = vmatprep.subr.mxu0 0.0
    %2384 = vmatpush1.msra.mxu0 0.0
    %2385 = vmatprep.subr.mxu0 0.0
    %2386 = vmatpush1.msra.mxu0 0.0
    %2387 = vmatprep.subr.mxu0 0.0
    %2388 = vmatpush1.msra.mxu0 0.0
    %2389 = vmatprep.subr.mxu0 0.0
    %2390 = vmatpush1.msra.mxu0 0.0
    %2391 = vmatprep.subr.mxu0 0.0
    %2392 = vmatpush1.msra.mxu0 0.0
    %2393 = vmatprep.subr.mxu0 0.0
    %2394 = vmatpush1.msra.mxu0 0.0
    %2395 = vmatprep.subr.mxu0 0.0
    %2396 = vmatpush1.msra.mxu0 0.0
    %2397 = vmatprep.subr.mxu0 0.0
    %2398 = vmatpush1.msra.mxu0 0.0
    %2399 = vmatprep.subr.mxu0 0.0
    %2400 = vmatpush1.msra.mxu0 0.0
    %2401 = vmatprep.subr.mxu0 0.0
    %2402 = vmatpush1.msra.mxu0 0.0
    %2403 = vmatprep.subr.mxu0 0.0
    %2404 = vmatpush1.msra.mxu0 0.0
    %2405 = vmatprep.subr.mxu0 0.0
    %2406 = vmatpush1.msra.mxu0 0.0
    %2407 = vmatprep.subr.mxu0 0.0
    %2408 = vmatpush1.msra.mxu0 0.0
    %2409 = vmatprep.subr.mxu0 0.0
    %2410 = vmatpush1.msra.mxu0 0.0
    %2411 = vmatprep.subr.mxu0 0.0
    %2412 = vmatpush1.msra.mxu0 0.0
    %2413 = vmatprep.subr.mxu0 0.0
    %2414 = vmatpush1.msra.mxu0 0.0
    %2415 = vmatprep.subr.mxu0 0.0
    %2416 = vmatpush1.msra.mxu0 0.0
    %2417 = vmatprep.subr.mxu0 0.0
    %2418 = vmatpush1.msra.mxu0 0.0
    %2419 = vmatprep.subr.mxu0 0.0
    %2420 = vmatpush1.msra.mxu0 0.0
    %2421 = vmatprep.subr.mxu0 0.0
    %2422 = vmatpush1.msra.mxu0 0.0
    %2423 = vmatprep.subr.mxu0 0.0
    %2424 = vmatpush1.msra.mxu0 0.0
    %2425 = vmatprep.subr.mxu0 0.0
    %2426 = vmatpush1.msra.mxu0 0.0
    %2427 = vmatprep.subr.mxu0 0.0
    %2428 = vmatpush1.msra.mxu0 0.0
    %2429 = vmatprep.subr.mxu0 0.0
    %2430 = vmatpush1.msra.mxu0 0.0
    %2431 = vmatprep.subr.mxu0 0.0
    %2432 = vmatpush1.msra.mxu0 0.0
    %2433 = vmatprep.mubr.f32.mxu0 0.0
    %2434 = vmatmul.mubr.f32.gmra.mrb[0].mxu0 %v2364
    %v2435 = vpop.f32.mrb[0].mxu0
    %v2436 = vadd.f32 0.0, %v2435
    %v2437 = vpop.f32.mrb[0].mxu0
    %2438 = vmatprep.mubr.f32.mxu0 0.0
    %2439 = vmatmul.mubr.f32.gmra.mrb[0].mxu0 %v2367
    %v2440 = vpop.f32.mrb[0].mxu0
    %v2441 = vadd.f32 0.0, %v2440
    %v2442 = vpop.f32.mrb[0].mxu0
    %2443 = vdwg.mxu0
    %v2444 = vadd.f32 %v2058, %v2436
    %v2445 = vadd.f32 %v2059, %v2441
    %s2446 = scalar_lea.vmem %s3, 192
    %v2447 = vld [vmem:[%s2446] sm:$0xff]
    %v2448 = vld [vmem:[%s2446 + $0x8] sm:$0xff]
    %v2449 = vld [vmem:[%s2446 + $0x10] sm:$0xff]
    %v2450 = vld [vmem:[%s2446 + $0x18] sm:$0xff]
    %s2451 = scalar_lea.vmem %s4, 6
    %v2452 = vld [vmem:[%s2451] sm:$0x1]
    %v2454 = vlaneseq
    %v2455 = vshrl.u32 %v2454, 7
    %v2456 = vsub.s32 0, %v2455
    %v2457 = vrot.slane %v2452, %v2456
    %2459 = vmatprep.subr.mxu0 0.0
    %2460 = vmatpush1.msra.mxu0 %v2447
    %2461 = vmatprep.subr.mxu0 0.0
    %2462 = vmatpush1.msra.mxu0 %v2448
    %2463 = vmatprep.subr.mxu0 0.0
    %2464 = vmatpush1.msra.mxu0 %v2449
    %2465 = vmatprep.subr.mxu0 0.0
    %2466 = vmatpush1.msra.mxu0 %v2450
    %2467 = vmatprep.subr.mxu0 0.0
    %2468 = vmatpush1.msra.mxu0 0.0
    %2469 = vmatprep.subr.mxu0 0.0
    %2470 = vmatpush1.msra.mxu0 0.0
    %2471 = vmatprep.subr.mxu0 0.0
    %2472 = vmatpush1.msra.mxu0 0.0
    %2473 = vmatprep.subr.mxu0 0.0
    %2474 = vmatpush1.msra.mxu0 0.0
    %2475 = vmatprep.subr.mxu0 0.0
    %2476 = vmatpush1.msra.mxu0 0.0
    %2477 = vmatprep.subr.mxu0 0.0
    %2478 = vmatpush1.msra.mxu0 0.0
    %2479 = vmatprep.subr.mxu0 0.0
    %2480 = vmatpush1.msra.mxu0 0.0
    %2481 = vmatprep.subr.mxu0 0.0
    %2482 = vmatpush1.msra.mxu0 0.0
    %2483 = vmatprep.subr.mxu0 0.0
    %2484 = vmatpush1.msra.mxu0 0.0
    %2485 = vmatprep.subr.mxu0 0.0
    %2486 = vmatpush1.msra.mxu0 0.0
    %2487 = vmatprep.subr.mxu0 0.0
    %2488 = vmatpush1.msra.mxu0 0.0
    %2489 = vmatprep.subr.mxu0 0.0
    %2490 = vmatpush1.msra.mxu0 0.0
    %2491 = vmatprep.subr.mxu0 0.0
    %2492 = vmatpush1.msra.mxu0 0.0
    %2493 = vmatprep.subr.mxu0 0.0
    %2494 = vmatpush1.msra.mxu0 0.0
    %2495 = vmatprep.subr.mxu0 0.0
    %2496 = vmatpush1.msra.mxu0 0.0
    %2497 = vmatprep.subr.mxu0 0.0
    %2498 = vmatpush1.msra.mxu0 0.0
    %2499 = vmatprep.subr.mxu0 0.0
    %2500 = vmatpush1.msra.mxu0 0.0
    %2501 = vmatprep.subr.mxu0 0.0
    %2502 = vmatpush1.msra.mxu0 0.0
    %2503 = vmatprep.subr.mxu0 0.0
    %2504 = vmatpush1.msra.mxu0 0.0
    %2505 = vmatprep.subr.mxu0 0.0
    %2506 = vmatpush1.msra.mxu0 0.0
    %2507 = vmatprep.subr.mxu0 0.0
    %2508 = vmatpush1.msra.mxu0 0.0
    %2509 = vmatprep.subr.mxu0 0.0
    %2510 = vmatpush1.msra.mxu0 0.0
    %2511 = vmatprep.subr.mxu0 0.0
    %2512 = vmatpush1.msra.mxu0 0.0
    %2513 = vmatprep.subr.mxu0 0.0
    %2514 = vmatpush1.msra.mxu0 0.0
    %2515 = vmatprep.subr.mxu0 0.0
    %2516 = vmatpush1.msra.mxu0 0.0
    %2517 = vmatprep.subr.mxu0 0.0
    %2518 = vmatpush1.msra.mxu0 0.0
    %2519 = vmatprep.subr.mxu0 0.0
    %2520 = vmatpush1.msra.mxu0 0.0
    %2521 = vmatprep.subr.mxu0 0.0
    %2522 = vmatpush1.msra.mxu0 0.0
    %2523 = vmatprep.mubr.f32.mxu0 0.0
    %2524 = vmatmul.mubr.f32.gmra.mrb[0].mxu0 %v129
    %v2525 = vpop.f32.mrb[0].mxu0
    %v2526 = vadd.f32 %v2457, %v2525
    %v2527 = vpop.f32.mrb[0].mxu0
    %2528 = vmatprep.mubr.f32.mxu0 0.0
    %2529 = vmatmul.mubr.f32.gmra.mrb[0].mxu0 %v132
    %v2530 = vpop.f32.mrb[0].mxu0
    %v2531 = vadd.f32 %v2457, %v2530
    %v2532 = vpop.f32.mrb[0].mxu0
    %2533 = vdwg.mxu0
    %v2535 = vsel %vm215, %v2526, 0
    %v2538 = vsel %vm215, %v2531, 0
    %2540 = vmatprep.subr.mxu0 0.0
    %2541 = vmatpush1.msra.mxu0 %v105
    %2542 = vmatprep.subr.mxu0 0.0
    %2543 = vmatpush1.msra.mxu0 %v106
    %2544 = vmatprep.subr.mxu0 0.0
    %2545 = vmatpush1.msra.mxu0 0.0
    %2546 = vmatprep.subr.mxu0 0.0
    %2547 = vmatpush1.msra.mxu0 0.0
    %2548 = vmatprep.subr.mxu0 0.0
    %2549 = vmatpush1.msra.mxu0 0.0
    %2550 = vmatprep.subr.mxu0 0.0
    %2551 = vmatpush1.msra.mxu0 0.0
    %2552 = vmatprep.subr.mxu0 0.0
    %2553 = vmatpush1.msra.mxu0 0.0
    %2554 = vmatprep.subr.mxu0 0.0
    %2555 = vmatpush1.msra.mxu0 0.0
    %2556 = vmatprep.subr.mxu0 0.0
    %2557 = vmatpush1.msra.mxu0 0.0
    %2558 = vmatprep.subr.mxu0 0.0
    %2559 = vmatpush1.msra.mxu0 0.0
    %2560 = vmatprep.subr.mxu0 0.0
    %2561 = vmatpush1.msra.mxu0 0.0
    %2562 = vmatprep.subr.mxu0 0.0
    %2563 = vmatpush1.msra.mxu0 0.0
    %2564 = vmatprep.subr.mxu0 0.0
    %2565 = vmatpush1.msra.mxu0 0.0
    %2566 = vmatprep.subr.mxu0 0.0
    %2567 = vmatpush1.msra.mxu0 0.0
    %2568 = vmatprep.subr.mxu0 0.0
    %2569 = vmatpush1.msra.mxu0 0.0
    %2570 = vmatprep.subr.mxu0 0.0
    %2571 = vmatpush1.msra.mxu0 0.0
    %2572 = vmatprep.subr.mxu0 0.0
    %2573 = vmatpush1.msra.mxu0 0.0
    %2574 = vmatprep.subr.mxu0 0.0
    %2575 = vmatpush1.msra.mxu0 0.0
    %2576 = vmatprep.subr.mxu0 0.0
    %2577 = vmatpush1.msra.mxu0 0.0
    %2578 = vmatprep.subr.mxu0 0.0
    %2579 = vmatpush1.msra.mxu0 0.0
    %2580 = vmatprep.subr.mxu0 0.0
    %2581 = vmatpush1.msra.mxu0 0.0
    %2582 = vmatprep.subr.mxu0 0.0
    %2583 = vmatpush1.msra.mxu0 0.0
    %2584 = vmatprep.subr.mxu0 0.0
    %2585 = vmatpush1.msra.mxu0 0.0
    %2586 = vmatprep.subr.mxu0 0.0
    %2587 = vmatpush1.msra.mxu0 0.0
    %2588 = vmatprep.subr.mxu0 0.0
    %2589 = vmatpush1.msra.mxu0 0.0
    %2590 = vmatprep.subr.mxu0 0.0
    %2591 = vmatpush1.msra.mxu0 0.0
    %2592 = vmatprep.subr.mxu0 0.0
    %2593 = vmatpush1.msra.mxu0 0.0
    %2594 = vmatprep.subr.mxu0 0.0
    %2595 = vmatpush1.msra.mxu0 0.0
    %2596 = vmatprep.subr.mxu0 0.0
    %2597 = vmatpush1.msra.mxu0 0.0
    %2598 = vmatprep.subr.mxu0 0.0
    %2599 = vmatpush1.msra.mxu0 0.0
    %2600 = vmatprep.subr.mxu0 0.0
    %2601 = vmatpush1.msra.mxu0 0.0
    %2602 = vmatprep.subr.mxu0 0.0
    %2603 = vmatpush1.msra.mxu0 0.0
    %2604 = vmatprep.mubr.f32.mxu0 0.0
    %2605 = vmatmul.mubr.f32.gmra.mrb[0].mxu0 %v2535
    %v2606 = vpop.f32.mrb[0].mxu0
    %v2607 = vadd.f32 %v213, %v2606
    %v2608 = vpop.f32.mrb[0].mxu0
    %2609 = vmatprep.mubr.f32.mxu0 0.0
    %2610 = vmatmul.mubr.f32.gmra.mrb[0].mxu0 %v2538
    %v2611 = vpop.f32.mrb[0].mxu0
    %v2612 = vadd.f32 %v213, %v2611
    %v2613 = vpop.f32.mrb[0].mxu0
    %2614 = vdwg.mxu0
    %v2615 = vsel %vm297, %v2607, -inf
    %v2616 = vrot.slane %v2615, 4
    %v2617 = vmax.f32 %v2615, %v2616
    %v2618 = vrot.slane %v2617, 2
    %v2619 = vmax.f32 %v2617, %v2618
    %v2620 = vrot.slane %v2619, 1
    %v2621 = vmax.f32 %v2619, %v2620
    %v2622 = vsub.f32 %v2607, %v2621
    %v2623 = vmul.f32 %v2622, 1.442695
    %v2624 = vpow.pop %v2623
    %v2625 = vsel %vm297, %v2624, 0.0
    %v2626 = vrot.slane %v2625, 4
    %v2627 = vadd.f32 %v2625, %v2626
    %v2628 = vrot.slane %v2627, 2
    %v2629 = vadd.f32 %v2627, %v2628
    %v2630 = vrot.slane %v2629, 1
    %v2631 = vadd.f32 %v2629, %v2630
    %v2632 = vrcp.pop %v2631
    %v2633 = vmul.f32 %v2624, %v2632
    %v2634 = vsel %vm297, %v2633, 0.0
    %2635 = vadd.xlane.f32.xlu0 %v2634
    %v2636 = vpop.xlane.xlu0 %2635
    %v2637 = vadd.f32 %v2636, 1e-09
    %v2638 = vrcp.pop %v2637
    %v2639 = vmul.f32 %v2633, %v2638
    %v2640 = vsel %vm297, %v2612, -inf
    %v2641 = vrot.slane %v2640, 4
    %v2642 = vmax.f32 %v2640, %v2641
    %v2643 = vrot.slane %v2642, 2
    %v2644 = vmax.f32 %v2642, %v2643
    %v2645 = vrot.slane %v2644, 1
    %v2646 = vmax.f32 %v2644, %v2645
    %v2647 = vsub.f32 %v2612, %v2646
    %v2648 = vmul.f32 %v2647, 1.442695
    %v2649 = vpow.pop %v2648
    %v2650 = vsel %vm297, %v2649, 0.0
    %v2651 = vrot.slane %v2650, 4
    %v2652 = vadd.f32 %v2650, %v2651
    %v2653 = vrot.slane %v2652, 2
    %v2654 = vadd.f32 %v2652, %v2653
    %v2655 = vrot.slane %v2654, 1
    %v2656 = vadd.f32 %v2654, %v2655
    %v2657 = vrcp.pop %v2656
    %v2658 = vmul.f32 %v2649, %v2657
    %v2659 = vsel %vm297, %v2658, 0.0
    %2660 = vadd.xlane.f32.xlu0 %v2659
    %v2661 = vpop.xlane.xlu0 %2660
    %v2662 = vadd.f32 %v2661, 1e-09
    %v2663 = vrcp.pop %v2662
    %v2664 = vmul.f32 %v2658, %v2663
    %v2666 = vsel %vm297, %v2639, 0
    %v2669 = vsel %vm297, %v2664, 0
    %2671 = vmatprep.subr.mxu0 0.0
    %2672 = vmatpush1.msra.mxu0 %v108
    %2673 = vmatprep.subr.mxu0 0.0
    %2674 = vmatpush1.msra.mxu0 %v109
    %2675 = vmatprep.subr.mxu0 0.0
    %2676 = vmatpush1.msra.mxu0 %v110
    %2677 = vmatprep.subr.mxu0 0.0
    %2678 = vmatpush1.msra.mxu0 %v111
    %2679 = vmatprep.subr.mxu0 0.0
    %2680 = vmatpush1.msra.mxu0 %v112
    %2681 = vmatprep.subr.mxu0 0.0
    %2682 = vmatpush1.msra.mxu0 %v113
    %2683 = vmatprep.subr.mxu0 0.0
    %2684 = vmatpush1.msra.mxu0 %v114
    %2685 = vmatprep.subr.mxu0 0.0
    %2686 = vmatpush1.msra.mxu0 %v115
    %2687 = vmatprep.subr.mxu0 0.0
    %2688 = vmatpush1.msra.mxu0 0.0
    %2689 = vmatprep.subr.mxu0 0.0
    %2690 = vmatpush1.msra.mxu0 0.0
    %2691 = vmatprep.subr.mxu0 0.0
    %2692 = vmatpush1.msra.mxu0 0.0
    %2693 = vmatprep.subr.mxu0 0.0
    %2694 = vmatpush1.msra.mxu0 0.0
    %2695 = vmatprep.subr.mxu0 0.0
    %2696 = vmatpush1.msra.mxu0 0.0
    %2697 = vmatprep.subr.mxu0 0.0
    %2698 = vmatpush1.msra.mxu0 0.0
    %2699 = vmatprep.subr.mxu0 0.0
    %2700 = vmatpush1.msra.mxu0 0.0
    %2701 = vmatprep.subr.mxu0 0.0
    %2702 = vmatpush1.msra.mxu0 0.0
    %2703 = vmatprep.subr.mxu0 0.0
    %2704 = vmatpush1.msra.mxu0 0.0
    %2705 = vmatprep.subr.mxu0 0.0
    %2706 = vmatpush1.msra.mxu0 0.0
    %2707 = vmatprep.subr.mxu0 0.0
    %2708 = vmatpush1.msra.mxu0 0.0
    %2709 = vmatprep.subr.mxu0 0.0
    %2710 = vmatpush1.msra.mxu0 0.0
    %2711 = vmatprep.subr.mxu0 0.0
    %2712 = vmatpush1.msra.mxu0 0.0
    %2713 = vmatprep.subr.mxu0 0.0
    %2714 = vmatpush1.msra.mxu0 0.0
    %2715 = vmatprep.subr.mxu0 0.0
    %2716 = vmatpush1.msra.mxu0 0.0
    %2717 = vmatprep.subr.mxu0 0.0
    %2718 = vmatpush1.msra.mxu0 0.0
    %2719 = vmatprep.subr.mxu0 0.0
    %2720 = vmatpush1.msra.mxu0 0.0
    %2721 = vmatprep.subr.mxu0 0.0
    %2722 = vmatpush1.msra.mxu0 0.0
    %2723 = vmatprep.subr.mxu0 0.0
    %2724 = vmatpush1.msra.mxu0 0.0
    %2725 = vmatprep.subr.mxu0 0.0
    %2726 = vmatpush1.msra.mxu0 0.0
    %2727 = vmatprep.subr.mxu0 0.0
    %2728 = vmatpush1.msra.mxu0 0.0
    %2729 = vmatprep.subr.mxu0 0.0
    %2730 = vmatpush1.msra.mxu0 0.0
    %2731 = vmatprep.subr.mxu0 0.0
    %2732 = vmatpush1.msra.mxu0 0.0
    %2733 = vmatprep.subr.mxu0 0.0
    %2734 = vmatpush1.msra.mxu0 0.0
    %2735 = vmatprep.mubr.f32.mxu0 0.0
    %2736 = vmatmul.mubr.f32.gmra.mrb[0].mxu0 %v2666
    %v2737 = vpop.f32.mrb[0].mxu0
    %v2738 = vadd.f32 %v352, %v2737
    %v2739 = vpop.f32.mrb[0].mxu0
    %2740 = vmatprep.mubr.f32.mxu0 0.0
    %2741 = vmatmul.mubr.f32.gmra.mrb[0].mxu0 %v2669
    %v2742 = vpop.f32.mrb[0].mxu0
    %v2743 = vadd.f32 %v352, %v2742
    %v2744 = vpop.f32.mrb[0].mxu0
    %2745 = vdwg.mxu0
    %s2746 = scalar_lea.vmem %s9, 96
    %v2747 = vld [vmem:[%s2746] sm:$0xff]
    %v2748 = vld [vmem:[%s2746 + $0x8] sm:$0xff]
    %v2750 = vsel %vm215, %v2738, 0
    %v2753 = vsel %vm215, %v2743, 0
    %2755 = vmatprep.subr.mxu0 0.0
    %2756 = vmatpush1.msra.mxu0 %v2747
    %2757 = vmatprep.subr.mxu0 0.0
    %2758 = vmatpush1.msra.mxu0 %v2748
    %2759 = vmatprep.subr.mxu0 0.0
    %2760 = vmatpush1.msra.mxu0 0.0
    %2761 = vmatprep.subr.mxu0 0.0
    %2762 = vmatpush1.msra.mxu0 0.0
    %2763 = vmatprep.subr.mxu0 0.0
    %2764 = vmatpush1.msra.mxu0 0.0
    %2765 = vmatprep.subr.mxu0 0.0
    %2766 = vmatpush1.msra.mxu0 0.0
    %2767 = vmatprep.subr.mxu0 0.0
    %2768 = vmatpush1.msra.mxu0 0.0
    %2769 = vmatprep.subr.mxu0 0.0
    %2770 = vmatpush1.msra.mxu0 0.0
    %2771 = vmatprep.subr.mxu0 0.0
    %2772 = vmatpush1.msra.mxu0 0.0
    %2773 = vmatprep.subr.mxu0 0.0
    %2774 = vmatpush1.msra.mxu0 0.0
    %2775 = vmatprep.subr.mxu0 0.0
    %2776 = vmatpush1.msra.mxu0 0.0
    %2777 = vmatprep.subr.mxu0 0.0
    %2778 = vmatpush1.msra.mxu0 0.0
    %2779 = vmatprep.subr.mxu0 0.0
    %2780 = vmatpush1.msra.mxu0 0.0
    %2781 = vmatprep.subr.mxu0 0.0
    %2782 = vmatpush1.msra.mxu0 0.0
    %2783 = vmatprep.subr.mxu0 0.0
    %2784 = vmatpush1.msra.mxu0 0.0
    %2785 = vmatprep.subr.mxu0 0.0
    %2786 = vmatpush1.msra.mxu0 0.0
    %2787 = vmatprep.subr.mxu0 0.0
    %2788 = vmatpush1.msra.mxu0 0.0
    %2789 = vmatprep.subr.mxu0 0.0
    %2790 = vmatpush1.msra.mxu0 0.0
    %2791 = vmatprep.subr.mxu0 0.0
    %2792 = vmatpush1.msra.mxu0 0.0
    %2793 = vmatprep.subr.mxu0 0.0
    %2794 = vmatpush1.msra.mxu0 0.0
    %2795 = vmatprep.subr.mxu0 0.0
    %2796 = vmatpush1.msra.mxu0 0.0
    %2797 = vmatprep.subr.mxu0 0.0
    %2798 = vmatpush1.msra.mxu0 0.0
    %2799 = vmatprep.subr.mxu0 0.0
    %2800 = vmatpush1.msra.mxu0 0.0
    %2801 = vmatprep.subr.mxu0 0.0
    %2802 = vmatpush1.msra.mxu0 0.0
    %2803 = vmatprep.subr.mxu0 0.0
    %2804 = vmatpush1.msra.mxu0 0.0
    %2805 = vmatprep.subr.mxu0 0.0
    %2806 = vmatpush1.msra.mxu0 0.0
    %2807 = vmatprep.subr.mxu0 0.0
    %2808 = vmatpush1.msra.mxu0 0.0
    %2809 = vmatprep.subr.mxu0 0.0
    %2810 = vmatpush1.msra.mxu0 0.0
    %2811 = vmatprep.subr.mxu0 0.0
    %2812 = vmatpush1.msra.mxu0 0.0
    %2813 = vmatprep.subr.mxu0 0.0
    %2814 = vmatpush1.msra.mxu0 0.0
    %2815 = vmatprep.subr.mxu0 0.0
    %2816 = vmatpush1.msra.mxu0 0.0
    %2817 = vmatprep.subr.mxu0 0.0
    %2818 = vmatpush1.msra.mxu0 0.0
    %2819 = vmatprep.mubr.f32.mxu0 0.0
    %2820 = vmatmul.mubr.f32.gmra.mrb[0].mxu0 %v2750
    %v2821 = vpop.f32.mrb[0].mxu0
    %v2822 = vadd.f32 0.0, %v2821
    %v2823 = vpop.f32.mrb[0].mxu0
    %2824 = vmatprep.mubr.f32.mxu0 0.0
    %2825 = vmatmul.mubr.f32.gmra.mrb[0].mxu0 %v2753
    %v2826 = vpop.f32.mrb[0].mxu0
    %v2827 = vadd.f32 0.0, %v2826
    %v2828 = vpop.f32.mrb[0].mxu0
    %2829 = vdwg.mxu0
    %v2830 = vadd.f32 %v2444, %v2822
    %v2831 = vadd.f32 %v2445, %v2827
    %s2832 = scalar_lea.vmem %s3, 224
    %v2833 = vld [vmem:[%s2832] sm:$0xff]
    %v2834 = vld [vmem:[%s2832 + $0x8] sm:$0xff]
    %v2835 = vld [vmem:[%s2832 + $0x10] sm:$0xff]
    %v2836 = vld [vmem:[%s2832 + $0x18] sm:$0xff]
    %s2837 = scalar_lea.vmem %s4, 7
    %v2838 = vld [vmem:[%s2837] sm:$0x1]
    %v2840 = vlaneseq
    %v2841 = vshrl.u32 %v2840, 7
    %v2842 = vsub.s32 0, %v2841
    %v2843 = vrot.slane %v2838, %v2842
    %2845 = vmatprep.subr.mxu0 0.0
    %2846 = vmatpush1.msra.mxu0 %v2833
    %2847 = vmatprep.subr.mxu0 0.0
    %2848 = vmatpush1.msra.mxu0 %v2834
    %2849 = vmatprep.subr.mxu0 0.0
    %2850 = vmatpush1.msra.mxu0 %v2835
    %2851 = vmatprep.subr.mxu0 0.0
    %2852 = vmatpush1.msra.mxu0 %v2836
    %2853 = vmatprep.subr.mxu0 0.0
    %2854 = vmatpush1.msra.mxu0 0.0
    %2855 = vmatprep.subr.mxu0 0.0
    %2856 = vmatpush1.msra.mxu0 0.0
    %2857 = vmatprep.subr.mxu0 0.0
    %2858 = vmatpush1.msra.mxu0 0.0
    %2859 = vmatprep.subr.mxu0 0.0
    %2860 = vmatpush1.msra.mxu0 0.0
    %2861 = vmatprep.subr.mxu0 0.0
    %2862 = vmatpush1.msra.mxu0 0.0
    %2863 = vmatprep.subr.mxu0 0.0
    %2864 = vmatpush1.msra.mxu0 0.0
    %2865 = vmatprep.subr.mxu0 0.0
    %2866 = vmatpush1.msra.mxu0 0.0
    %2867 = vmatprep.subr.mxu0 0.0
    %2868 = vmatpush1.msra.mxu0 0.0
    %2869 = vmatprep.subr.mxu0 0.0
    %2870 = vmatpush1.msra.mxu0 0.0
    %2871 = vmatprep.subr.mxu0 0.0
    %2872 = vmatpush1.msra.mxu0 0.0
    %2873 = vmatprep.subr.mxu0 0.0
    %2874 = vmatpush1.msra.mxu0 0.0
    %2875 = vmatprep.subr.mxu0 0.0
    %2876 = vmatpush1.msra.mxu0 0.0
    %2877 = vmatprep.subr.mxu0 0.0
    %2878 = vmatpush1.msra.mxu0 0.0
    %2879 = vmatprep.subr.mxu0 0.0
    %2880 = vmatpush1.msra.mxu0 0.0
    %2881 = vmatprep.subr.mxu0 0.0
    %2882 = vmatpush1.msra.mxu0 0.0
    %2883 = vmatprep.subr.mxu0 0.0
    %2884 = vmatpush1.msra.mxu0 0.0
    %2885 = vmatprep.subr.mxu0 0.0
    %2886 = vmatpush1.msra.mxu0 0.0
    %2887 = vmatprep.subr.mxu0 0.0
    %2888 = vmatpush1.msra.mxu0 0.0
    %2889 = vmatprep.subr.mxu0 0.0
    %2890 = vmatpush1.msra.mxu0 0.0
    %2891 = vmatprep.subr.mxu0 0.0
    %2892 = vmatpush1.msra.mxu0 0.0
    %2893 = vmatprep.subr.mxu0 0.0
    %2894 = vmatpush1.msra.mxu0 0.0
    %2895 = vmatprep.subr.mxu0 0.0
    %2896 = vmatpush1.msra.mxu0 0.0
    %2897 = vmatprep.subr.mxu0 0.0
    %2898 = vmatpush1.msra.mxu0 0.0
    %2899 = vmatprep.subr.mxu0 0.0
    %2900 = vmatpush1.msra.mxu0 0.0
    %2901 = vmatprep.subr.mxu0 0.0
    %2902 = vmatpush1.msra.mxu0 0.0
    %2903 = vmatprep.subr.mxu0 0.0
    %2904 = vmatpush1.msra.mxu0 0.0
    %2905 = vmatprep.subr.mxu0 0.0
    %2906 = vmatpush1.msra.mxu0 0.0
    %2907 = vmatprep.subr.mxu0 0.0
    %2908 = vmatpush1.msra.mxu0 0.0
    %2909 = vmatprep.mubr.f32.mxu0 0.0
    %2910 = vmatmul.mubr.f32.gmra.mrb[0].mxu0 %v129
    %v2911 = vpop.f32.mrb[0].mxu0
    %v2912 = vadd.f32 %v2843, %v2911
    %v2913 = vpop.f32.mrb[0].mxu0
    %2914 = vmatprep.mubr.f32.mxu0 0.0
    %2915 = vmatmul.mubr.f32.gmra.mrb[0].mxu0 %v132
    %v2916 = vpop.f32.mrb[0].mxu0
    %v2917 = vadd.f32 %v2843, %v2916
    %v2918 = vpop.f32.mrb[0].mxu0
    %2919 = vdwg.mxu0
    %v2921 = vsel %vm215, %v2912, 0
    %v2924 = vsel %vm215, %v2917, 0
    %2926 = vmatprep.subr.mxu0 0.0
    %2927 = vmatpush1.msra.mxu0 %v105
    %2928 = vmatprep.subr.mxu0 0.0
    %2929 = vmatpush1.msra.mxu0 %v106
    %2930 = vmatprep.subr.mxu0 0.0
    %2931 = vmatpush1.msra.mxu0 0.0
    %2932 = vmatprep.subr.mxu0 0.0
    %2933 = vmatpush1.msra.mxu0 0.0
    %2934 = vmatprep.subr.mxu0 0.0
    %2935 = vmatpush1.msra.mxu0 0.0
    %2936 = vmatprep.subr.mxu0 0.0
    %2937 = vmatpush1.msra.mxu0 0.0
    %2938 = vmatprep.subr.mxu0 0.0
    %2939 = vmatpush1.msra.mxu0 0.0
    %2940 = vmatprep.subr.mxu0 0.0
    %2941 = vmatpush1.msra.mxu0 0.0
    %2942 = vmatprep.subr.mxu0 0.0
    %2943 = vmatpush1.msra.mxu0 0.0
    %2944 = vmatprep.subr.mxu0 0.0
    %2945 = vmatpush1.msra.mxu0 0.0
    %2946 = vmatprep.subr.mxu0 0.0
    %2947 = vmatpush1.msra.mxu0 0.0
    %2948 = vmatprep.subr.mxu0 0.0
    %2949 = vmatpush1.msra.mxu0 0.0
    %2950 = vmatprep.subr.mxu0 0.0
    %2951 = vmatpush1.msra.mxu0 0.0
    %2952 = vmatprep.subr.mxu0 0.0
    %2953 = vmatpush1.msra.mxu0 0.0
    %2954 = vmatprep.subr.mxu0 0.0
    %2955 = vmatpush1.msra.mxu0 0.0
    %2956 = vmatprep.subr.mxu0 0.0
    %2957 = vmatpush1.msra.mxu0 0.0
    %2958 = vmatprep.subr.mxu0 0.0
    %2959 = vmatpush1.msra.mxu0 0.0
    %2960 = vmatprep.subr.mxu0 0.0
    %2961 = vmatpush1.msra.mxu0 0.0
    %2962 = vmatprep.subr.mxu0 0.0
    %2963 = vmatpush1.msra.mxu0 0.0
    %2964 = vmatprep.subr.mxu0 0.0
    %2965 = vmatpush1.msra.mxu0 0.0
    %2966 = vmatprep.subr.mxu0 0.0
    %2967 = vmatpush1.msra.mxu0 0.0
    %2968 = vmatprep.subr.mxu0 0.0
    %2969 = vmatpush1.msra.mxu0 0.0
    %2970 = vmatprep.subr.mxu0 0.0
    %2971 = vmatpush1.msra.mxu0 0.0
    %2972 = vmatprep.subr.mxu0 0.0
    %2973 = vmatpush1.msra.mxu0 0.0
    %2974 = vmatprep.subr.mxu0 0.0
    %2975 = vmatpush1.msra.mxu0 0.0
    %2976 = vmatprep.subr.mxu0 0.0
    %2977 = vmatpush1.msra.mxu0 0.0
    %2978 = vmatprep.subr.mxu0 0.0
    %2979 = vmatpush1.msra.mxu0 0.0
    %2980 = vmatprep.subr.mxu0 0.0
    %2981 = vmatpush1.msra.mxu0 0.0
    %2982 = vmatprep.subr.mxu0 0.0
    %2983 = vmatpush1.msra.mxu0 0.0
    %2984 = vmatprep.subr.mxu0 0.0
    %2985 = vmatpush1.msra.mxu0 0.0
    %2986 = vmatprep.subr.mxu0 0.0
    %2987 = vmatpush1.msra.mxu0 0.0
    %2988 = vmatprep.subr.mxu0 0.0
    %2989 = vmatpush1.msra.mxu0 0.0
    %2990 = vmatprep.mubr.f32.mxu0 0.0
    %2991 = vmatmul.mubr.f32.gmra.mrb[0].mxu0 %v2921
    %v2992 = vpop.f32.mrb[0].mxu0
    %v2993 = vadd.f32 %v213, %v2992
    %v2994 = vpop.f32.mrb[0].mxu0
    %2995 = vmatprep.mubr.f32.mxu0 0.0
    %2996 = vmatmul.mubr.f32.gmra.mrb[0].mxu0 %v2924
    %v2997 = vpop.f32.mrb[0].mxu0
    %v2998 = vadd.f32 %v213, %v2997
    %v2999 = vpop.f32.mrb[0].mxu0
    %3000 = vdwg.mxu0
    %v3001 = vsel %vm297, %v2993, -inf
    %v3002 = vrot.slane %v3001, 4
    %v3003 = vmax.f32 %v3001, %v3002
    %v3004 = vrot.slane %v3003, 2
    %v3005 = vmax.f32 %v3003, %v3004
    %v3006 = vrot.slane %v3005, 1
    %v3007 = vmax.f32 %v3005, %v3006
    %v3008 = vsub.f32 %v2993, %v3007
    %v3009 = vmul.f32 %v3008, 1.442695
    %v3010 = vpow.pop %v3009
    %v3011 = vsel %vm297, %v3010, 0.0
    %v3012 = vrot.slane %v3011, 4
    %v3013 = vadd.f32 %v3011, %v3012
    %v3014 = vrot.slane %v3013, 2
    %v3015 = vadd.f32 %v3013, %v3014
    %v3016 = vrot.slane %v3015, 1
    %v3017 = vadd.f32 %v3015, %v3016
    %v3018 = vrcp.pop %v3017
    %v3019 = vmul.f32 %v3010, %v3018
    %v3020 = vsel %vm297, %v3019, 0.0
    %3021 = vadd.xlane.f32.xlu0 %v3020
    %v3022 = vpop.xlane.xlu0 %3021
    %v3023 = vadd.f32 %v3022, 1e-09
    %v3024 = vrcp.pop %v3023
    %v3025 = vmul.f32 %v3019, %v3024
    %v3026 = vsel %vm297, %v2998, -inf
    %v3027 = vrot.slane %v3026, 4
    %v3028 = vmax.f32 %v3026, %v3027
    %v3029 = vrot.slane %v3028, 2
    %v3030 = vmax.f32 %v3028, %v3029
    %v3031 = vrot.slane %v3030, 1
    %v3032 = vmax.f32 %v3030, %v3031
    %v3033 = vsub.f32 %v2998, %v3032
    %v3034 = vmul.f32 %v3033, 1.442695
    %v3035 = vpow.pop %v3034
    %v3036 = vsel %vm297, %v3035, 0.0
    %v3037 = vrot.slane %v3036, 4
    %v3038 = vadd.f32 %v3036, %v3037
    %v3039 = vrot.slane %v3038, 2
    %v3040 = vadd.f32 %v3038, %v3039
    %v3041 = vrot.slane %v3040, 1
    %v3042 = vadd.f32 %v3040, %v3041
    %v3043 = vrcp.pop %v3042
    %v3044 = vmul.f32 %v3035, %v3043
    %v3045 = vsel %vm297, %v3044, 0.0
    %3046 = vadd.xlane.f32.xlu0 %v3045
    %v3047 = vpop.xlane.xlu0 %3046
    %v3048 = vadd.f32 %v3047, 1e-09
    %v3049 = vrcp.pop %v3048
    %v3050 = vmul.f32 %v3044, %v3049
    %v3052 = vsel %vm297, %v3025, 0
    %v3055 = vsel %vm297, %v3050, 0
    %3057 = vmatprep.subr.mxu0 0.0
    %3058 = vmatpush1.msra.mxu0 %v108
    %3059 = vmatprep.subr.mxu0 0.0
    %3060 = vmatpush1.msra.mxu0 %v109
    %3061 = vmatprep.subr.mxu0 0.0
    %3062 = vmatpush1.msra.mxu0 %v110
    %3063 = vmatprep.subr.mxu0 0.0
    %3064 = vmatpush1.msra.mxu0 %v111
    %3065 = vmatprep.subr.mxu0 0.0
    %3066 = vmatpush1.msra.mxu0 %v112
    %3067 = vmatprep.subr.mxu0 0.0
    %3068 = vmatpush1.msra.mxu0 %v113
    %3069 = vmatprep.subr.mxu0 0.0
    %3070 = vmatpush1.msra.mxu0 %v114
    %3071 = vmatprep.subr.mxu0 0.0
    %3072 = vmatpush1.msra.mxu0 %v115
    %3073 = vmatprep.subr.mxu0 0.0
    %3074 = vmatpush1.msra.mxu0 0.0
    %3075 = vmatprep.subr.mxu0 0.0
    %3076 = vmatpush1.msra.mxu0 0.0
    %3077 = vmatprep.subr.mxu0 0.0
    %3078 = vmatpush1.msra.mxu0 0.0
    %3079 = vmatprep.subr.mxu0 0.0
    %3080 = vmatpush1.msra.mxu0 0.0
    %3081 = vmatprep.subr.mxu0 0.0
    %3082 = vmatpush1.msra.mxu0 0.0
    %3083 = vmatprep.subr.mxu0 0.0
    %3084 = vmatpush1.msra.mxu0 0.0
    %3085 = vmatprep.subr.mxu0 0.0
    %3086 = vmatpush1.msra.mxu0 0.0
    %3087 = vmatprep.subr.mxu0 0.0
    %3088 = vmatpush1.msra.mxu0 0.0
    %3089 = vmatprep.subr.mxu0 0.0
    %3090 = vmatpush1.msra.mxu0 0.0
    %3091 = vmatprep.subr.mxu0 0.0
    %3092 = vmatpush1.msra.mxu0 0.0
    %3093 = vmatprep.subr.mxu0 0.0
    %3094 = vmatpush1.msra.mxu0 0.0
    %3095 = vmatprep.subr.mxu0 0.0
    %3096 = vmatpush1.msra.mxu0 0.0
    %3097 = vmatprep.subr.mxu0 0.0
    %3098 = vmatpush1.msra.mxu0 0.0
    %3099 = vmatprep.subr.mxu0 0.0
    %3100 = vmatpush1.msra.mxu0 0.0
    %3101 = vmatprep.subr.mxu0 0.0
    %3102 = vmatpush1.msra.mxu0 0.0
    %3103 = vmatprep.subr.mxu0 0.0
    %3104 = vmatpush1.msra.mxu0 0.0
    %3105 = vmatprep.subr.mxu0 0.0
    %3106 = vmatpush1.msra.mxu0 0.0
    %3107 = vmatprep.subr.mxu0 0.0
    %3108 = vmatpush1.msra.mxu0 0.0
    %3109 = vmatprep.subr.mxu0 0.0
    %3110 = vmatpush1.msra.mxu0 0.0
    %3111 = vmatprep.subr.mxu0 0.0
    %3112 = vmatpush1.msra.mxu0 0.0
    %3113 = vmatprep.subr.mxu0 0.0
    %3114 = vmatpush1.msra.mxu0 0.0
    %3115 = vmatprep.subr.mxu0 0.0
    %3116 = vmatpush1.msra.mxu0 0.0
    %3117 = vmatprep.subr.mxu0 0.0
    %3118 = vmatpush1.msra.mxu0 0.0
    %3119 = vmatprep.subr.mxu0 0.0
    %3120 = vmatpush1.msra.mxu0 0.0
    %3121 = vmatprep.mubr.f32.mxu0 0.0
    %3122 = vmatmul.mubr.f32.gmra.mrb[0].mxu0 %v3052
    %v3123 = vpop.f32.mrb[0].mxu0
    %v3124 = vadd.f32 %v352, %v3123
    %v3125 = vpop.f32.mrb[0].mxu0
    %3126 = vmatprep.mubr.f32.mxu0 0.0
    %3127 = vmatmul.mubr.f32.gmra.mrb[0].mxu0 %v3055
    %v3128 = vpop.f32.mrb[0].mxu0
    %v3129 = vadd.f32 %v352, %v3128
    %v3130 = vpop.f32.mrb[0].mxu0
    %3131 = vdwg.mxu0
    %s3132 = scalar_lea.vmem %s9, 112
    %v3133 = vld [vmem:[%s3132] sm:$0xff]
    %v3134 = vld [vmem:[%s3132 + $0x8] sm:$0xff]
    %v3136 = vsel %vm215, %v3124, 0
    %v3139 = vsel %vm215, %v3129, 0
    %3141 = vmatprep.subr.mxu0 0.0
    %3142 = vmatpush1.msra.mxu0 %v3133
    %3143 = vmatprep.subr.mxu0 0.0
    %3144 = vmatpush1.msra.mxu0 %v3134
    %3145 = vmatprep.subr.mxu0 0.0
    %3146 = vmatpush1.msra.mxu0 0.0
    %3147 = vmatprep.subr.mxu0 0.0
    %3148 = vmatpush1.msra.mxu0 0.0
    %3149 = vmatprep.subr.mxu0 0.0
    %3150 = vmatpush1.msra.mxu0 0.0
    %3151 = vmatprep.subr.mxu0 0.0
    %3152 = vmatpush1.msra.mxu0 0.0
    %3153 = vmatprep.subr.mxu0 0.0
    %3154 = vmatpush1.msra.mxu0 0.0
    %3155 = vmatprep.subr.mxu0 0.0
    %3156 = vmatpush1.msra.mxu0 0.0
    %3157 = vmatprep.subr.mxu0 0.0
    %3158 = vmatpush1.msra.mxu0 0.0
    %3159 = vmatprep.subr.mxu0 0.0
    %3160 = vmatpush1.msra.mxu0 0.0
    %3161 = vmatprep.subr.mxu0 0.0
    %3162 = vmatpush1.msra.mxu0 0.0
    %3163 = vmatprep.subr.mxu0 0.0
    %3164 = vmatpush1.msra.mxu0 0.0
    %3165 = vmatprep.subr.mxu0 0.0
    %3166 = vmatpush1.msra.mxu0 0.0
    %3167 = vmatprep.subr.mxu0 0.0
    %3168 = vmatpush1.msra.mxu0 0.0
    %3169 = vmatprep.subr.mxu0 0.0
    %3170 = vmatpush1.msra.mxu0 0.0
    %3171 = vmatprep.subr.mxu0 0.0
    %3172 = vmatpush1.msra.mxu0 0.0
    %3173 = vmatprep.subr.mxu0 0.0
    %3174 = vmatpush1.msra.mxu0 0.0
    %3175 = vmatprep.subr.mxu0 0.0
    %3176 = vmatpush1.msra.mxu0 0.0
    %3177 = vmatprep.subr.mxu0 0.0
    %3178 = vmatpush1.msra.mxu0 0.0
    %3179 = vmatprep.subr.mxu0 0.0
    %3180 = vmatpush1.msra.mxu0 0.0
    %3181 = vmatprep.subr.mxu0 0.0
    %3182 = vmatpush1.msra.mxu0 0.0
    %3183 = vmatprep.subr.mxu0 0.0
    %3184 = vmatpush1.msra.mxu0 0.0
    %3185 = vmatprep.subr.mxu0 0.0
    %3186 = vmatpush1.msra.mxu0 0.0
    %3187 = vmatprep.subr.mxu0 0.0
    %3188 = vmatpush1.msra.mxu0 0.0
    %3189 = vmatprep.subr.mxu0 0.0
    %3190 = vmatpush1.msra.mxu0 0.0
    %3191 = vmatprep.subr.mxu0 0.0
    %3192 = vmatpush1.msra.mxu0 0.0
    %3193 = vmatprep.subr.mxu0 0.0
    %3194 = vmatpush1.msra.mxu0 0.0
    %3195 = vmatprep.subr.mxu0 0.0
    %3196 = vmatpush1.msra.mxu0 0.0
    %3197 = vmatprep.subr.mxu0 0.0
    %3198 = vmatpush1.msra.mxu0 0.0
    %3199 = vmatprep.subr.mxu0 0.0
    %3200 = vmatpush1.msra.mxu0 0.0
    %3201 = vmatprep.subr.mxu0 0.0
    %3202 = vmatpush1.msra.mxu0 0.0
    %3203 = vmatprep.subr.mxu0 0.0
    %3204 = vmatpush1.msra.mxu0 0.0
    %3205 = vmatprep.mubr.f32.mxu0 0.0
    %3206 = vmatmul.mubr.f32.gmra.mrb[0].mxu0 %v3136
    %v3207 = vpop.f32.mrb[0].mxu0
    %v3208 = vadd.f32 0.0, %v3207
    %v3209 = vpop.f32.mrb[0].mxu0
    %3210 = vmatprep.mubr.f32.mxu0 0.0
    %3211 = vmatmul.mubr.f32.gmra.mrb[0].mxu0 %v3139
    %v3212 = vpop.f32.mrb[0].mxu0
    %v3213 = vadd.f32 0.0, %v3212
    %v3214 = vpop.f32.mrb[0].mxu0
    %3215 = vdwg.mxu0
    %v3216 = vadd.f32 %v2830, %v3208
    %v3217 = vadd.f32 %v2831, %v3213
    %v3218 = vld [vmem:[%s10] sm:$0x1]
    %v3220 = vlaneseq
    %v3221 = vshrl.u32 %v3220, 7
    %v3222 = vsub.s32 0, %v3221
    %v3223 = vrot.slane %v3218, %v3222
    %v3225 = vadd.f32 %v3216, %v3223
    %v3226 = vadd.f32 %v3217, %v3223
    %v3227 = vadd.f32 %v57, %v3225
    %v3228 = vadd.f32 %v58, %v3226
    %v3229 = vld [vmem:[%s11] sm:$0x1]
    %v3230 = vld [vmem:[%s12] sm:$0x1]
    %v3231 = vsel %vm61, %v3227, 0.0
    %3232 = vadd.xlane.f32.xlu0 %v3231
    %v3233 = vpop.xlane.xlu0 %3232
    %v3234 = vsel %vm61, %v3228, 0.0
    %3235 = vadd.xlane.f32.xlu0 %v3234
    %v3236 = vpop.xlane.xlu0 %3235
    %v3237 = vmul.f32 %v3233, %v68
    %v3238 = vmul.f32 %v3236, %v68
    %v3239 = vsub.f32 %v3227, %v3237
    %v3240 = vsub.f32 %v3228, %v3238
    %v3241 = vmul.f32 %v3239, %v3239
    %v3242 = vmul.f32 %v3240, %v3240
    %v3243 = vsel %vm61, %v3241, 0.0
    %3244 = vadd.xlane.f32.xlu0 %v3243
    %v3245 = vpop.xlane.xlu0 %3244
    %v3246 = vsel %vm61, %v3242, 0.0
    %3247 = vadd.xlane.f32.xlu0 %v3246
    %v3248 = vpop.xlane.xlu0 %3247
    %v3249 = vmul.f32 %v3245, %v68
    %v3250 = vmul.f32 %v3248, %v68
    %v3251 = vadd.f32 %v3249, 1e-05
    %v3252 = vadd.f32 %v3250, 1e-05
    %v3253 = vrsqrt.pop %v3251
    %v3254 = vrsqrt.pop %v3252
    %v3255 = vmul.f32 %v3239, %v3253
    %v3256 = vmul.f32 %v3240, %v3254
    %v3258 = vlaneseq
    %v3259 = vshrl.u32 %v3258, 7
    %v3260 = vsub.s32 0, %v3259
    %v3261 = vrot.slane %v3229, %v3260
    %v3263 = vmul.f32 %v3255, %v3261
    %v3264 = vmul.f32 %v3256, %v3261
    %v3266 = vlaneseq
    %v3267 = vshrl.u32 %v3266, 7
    %v3268 = vsub.s32 0, %v3267
    %v3269 = vrot.slane %v3230, %v3268
    %v3271 = vadd.f32 %v3263, %v3269
    %v3272 = vadd.f32 %v3264, %v3269
    %v3273 = vld [vmem:[%s13] sm:$0xff]
    %v3274 = vld [vmem:[%s13 + $0x8] sm:$0xff]
    %v3275 = vld [vmem:[%s13 + $0x10] sm:$0xff]
    %v3276 = vld [vmem:[%s13 + $0x18] sm:$0xff]
    %v3277 = vld [vmem:[%s14] sm:$0x1]
    %v3279 = vlaneseq
    %v3280 = vshrl.u32 %v3279, 7
    %v3281 = vsub.s32 0, %v3280
    %v3282 = vrot.slane %v3277, %v3281
    %v3285 = vsel %vm61, %v3271, 0
    %v3288 = vsel %vm61, %v3272, 0
    %3290 = vmatprep.subr.mxu0 0.0
    %3291 = vmatpush1.msra.mxu0 %v3273
    %3292 = vmatprep.subr.mxu0 0.0
    %3293 = vmatpush1.msra.mxu0 %v3274
    %3294 = vmatprep.subr.mxu0 0.0
    %3295 = vmatpush1.msra.mxu0 %v3275
    %3296 = vmatprep.subr.mxu0 0.0
    %3297 = vmatpush1.msra.mxu0 %v3276
    %3298 = vmatprep.subr.mxu0 0.0
    %3299 = vmatpush1.msra.mxu0 0.0
    %3300 = vmatprep.subr.mxu0 0.0
    %3301 = vmatpush1.msra.mxu0 0.0
    %3302 = vmatprep.subr.mxu0 0.0
    %3303 = vmatpush1.msra.mxu0 0.0
    %3304 = vmatprep.subr.mxu0 0.0
    %3305 = vmatpush1.msra.mxu0 0.0
    %3306 = vmatprep.subr.mxu0 0.0
    %3307 = vmatpush1.msra.mxu0 0.0
    %3308 = vmatprep.subr.mxu0 0.0
    %3309 = vmatpush1.msra.mxu0 0.0
    %3310 = vmatprep.subr.mxu0 0.0
    %3311 = vmatpush1.msra.mxu0 0.0
    %3312 = vmatprep.subr.mxu0 0.0
    %3313 = vmatpush1.msra.mxu0 0.0
    %3314 = vmatprep.subr.mxu0 0.0
    %3315 = vmatpush1.msra.mxu0 0.0
    %3316 = vmatprep.subr.mxu0 0.0
    %3317 = vmatpush1.msra.mxu0 0.0
    %3318 = vmatprep.subr.mxu0 0.0
    %3319 = vmatpush1.msra.mxu0 0.0
    %3320 = vmatprep.subr.mxu0 0.0
    %3321 = vmatpush1.msra.mxu0 0.0
    %3322 = vmatprep.subr.mxu0 0.0
    %3323 = vmatpush1.msra.mxu0 0.0
    %3324 = vmatprep.subr.mxu0 0.0
    %3325 = vmatpush1.msra.mxu0 0.0
    %3326 = vmatprep.subr.mxu0 0.0
    %3327 = vmatpush1.msra.mxu0 0.0
    %3328 = vmatprep.subr.mxu0 0.0
    %3329 = vmatpush1.msra.mxu0 0.0
    %3330 = vmatprep.subr.mxu0 0.0
    %3331 = vmatpush1.msra.mxu0 0.0
    %3332 = vmatprep.subr.mxu0 0.0
    %3333 = vmatpush1.msra.mxu0 0.0
    %3334 = vmatprep.subr.mxu0 0.0
    %3335 = vmatpush1.msra.mxu0 0.0
    %3336 = vmatprep.subr.mxu0 0.0
    %3337 = vmatpush1.msra.mxu0 0.0
    %3338 = vmatprep.subr.mxu0 0.0
    %3339 = vmatpush1.msra.mxu0 0.0
    %3340 = vmatprep.subr.mxu0 0.0
    %3341 = vmatpush1.msra.mxu0 0.0
    %3342 = vmatprep.subr.mxu0 0.0
    %3343 = vmatpush1.msra.mxu0 0.0
    %3344 = vmatprep.subr.mxu0 0.0
    %3345 = vmatpush1.msra.mxu0 0.0
    %3346 = vmatprep.subr.mxu0 0.0
    %3347 = vmatpush1.msra.mxu0 0.0
    %3348 = vmatprep.subr.mxu0 0.0
    %3349 = vmatpush1.msra.mxu0 0.0
    %3350 = vmatprep.subr.mxu0 0.0
    %3351 = vmatpush1.msra.mxu0 0.0
    %3352 = vmatprep.subr.mxu0 0.0
    %3353 = vmatpush1.msra.mxu0 0.0
    %3354 = vmatprep.mubr.f32.mxu0 0.0
    %3355 = vmatmul.mubr.f32.gmra.mrb[0].mxu0 %v3285
    %v3356 = vpop.f32.mrb[0].mxu0
    %v3357 = vadd.f32 %v3282, %v3356
    %v3358 = vpop.f32.mrb[0].mxu0
    %3359 = vmatprep.mubr.f32.mxu0 0.0
    %3360 = vmatmul.mubr.f32.gmra.mrb[0].mxu0 %v3288
    %v3361 = vpop.f32.mrb[0].mxu0
    %v3362 = vadd.f32 %v3282, %v3361
    %v3363 = vpop.f32.mrb[0].mxu0
    %3364 = vdwg.mxu0
    %v3365 = vmul.f32 %v3357, 0.5
    %v3366 = vmul.f32 %v3362, 0.5
    %v3367 = vmul.f32 %v3357, 0.044715
    %v3368 = vmul.f32 %v3362, 0.044715
    %v3369 = vmul.f32 %v3367, %v3357
    %v3370 = vmul.f32 %v3368, %v3362
    %v3371 = vmul.f32 %v3369, %v3357
    %v3372 = vmul.f32 %v3370, %v3362
    %v3373 = vadd.f32 %v3357, %v3371
    %v3374 = vadd.f32 %v3362, %v3372
    %v3375 = vmul.f32 %v3373, 0.7978846
    %v3376 = vmul.f32 %v3374, 0.7978846
    %v3377 = vtanh.pop %v3375
    %v3378 = vtanh.pop %v3376
    %v3379 = vadd.f32 %v3377, 1.0
    %v3380 = vadd.f32 %v3378, 1.0
    %v3381 = vmul.f32 %v3365, %v3379
    %v3382 = vmul.f32 %v3366, %v3380
    %v3383 = vld [vmem:[%s15] sm:$0xff]
    %v3384 = vld [vmem:[%s15 + $0x8] sm:$0xff]
    %v3385 = vld [vmem:[%s15 + $0x10] sm:$0xff]
    %v3386 = vld [vmem:[%s15 + $0x18] sm:$0xff]
    %v3387 = vld [vmem:[%s15 + $0x20] sm:$0xff]
    %v3388 = vld [vmem:[%s15 + $0x28] sm:$0xff]
    %v3389 = vld [vmem:[%s15 + $0x30] sm:$0xff]
    %v3390 = vld [vmem:[%s15 + $0x38] sm:$0xff]
    %v3391 = vld [vmem:[%s15 + $0x40] sm:$0xff]
    %v3392 = vld [vmem:[%s15 + $0x48] sm:$0xff]
    %v3393 = vld [vmem:[%s15 + $0x50] sm:$0xff]
    %v3394 = vld [vmem:[%s15 + $0x58] sm:$0xff]
    %v3395 = vld [vmem:[%s15 + $0x60] sm:$0xff]
    %v3396 = vld [vmem:[%s15 + $0x68] sm:$0xff]
    %v3397 = vld [vmem:[%s15 + $0x70] sm:$0xff]
    %v3398 = vld [vmem:[%s15 + $0x78] sm:$0xff]
    %v3399 = vld [vmem:[%s16] sm:$0x1]
    %v3401 = vlaneseq
    %v3402 = vshrl.u32 %v3401, 7
    %v3403 = vsub.s32 0, %v3402
    %v3404 = vrot.slane %v3399, %v3403
    %3406 = vmatprep.subr.mxu0 0.0
    %3407 = vmatpush1.msra.mxu0 %v3383
    %3408 = vmatprep.subr.mxu0 0.0
    %3409 = vmatpush1.msra.mxu0 %v3384
    %3410 = vmatprep.subr.mxu0 0.0
    %3411 = vmatpush1.msra.mxu0 %v3385
    %3412 = vmatprep.subr.mxu0 0.0
    %3413 = vmatpush1.msra.mxu0 %v3386
    %3414 = vmatprep.subr.mxu0 0.0
    %3415 = vmatpush1.msra.mxu0 %v3387
    %3416 = vmatprep.subr.mxu0 0.0
    %3417 = vmatpush1.msra.mxu0 %v3388
    %3418 = vmatprep.subr.mxu0 0.0
    %3419 = vmatpush1.msra.mxu0 %v3389
    %3420 = vmatprep.subr.mxu0 0.0
    %3421 = vmatpush1.msra.mxu0 %v3390
    %3422 = vmatprep.subr.mxu0 0.0
    %3423 = vmatpush1.msra.mxu0 %v3391
    %3424 = vmatprep.subr.mxu0 0.0
    %3425 = vmatpush1.msra.mxu0 %v3392
    %3426 = vmatprep.subr.mxu0 0.0
    %3427 = vmatpush1.msra.mxu0 %v3393
    %3428 = vmatprep.subr.mxu0 0.0
    %3429 = vmatpush1.msra.mxu0 %v3394
    %3430 = vmatprep.subr.mxu0 0.0
    %3431 = vmatpush1.msra.mxu0 %v3395
    %3432 = vmatprep.subr.mxu0 0.0
    %3433 = vmatpush1.msra.mxu0 %v3396
    %3434 = vmatprep.subr.mxu0 0.0
    %3435 = vmatpush1.msra.mxu0 %v3397
    %3436 = vmatprep.subr.mxu0 0.0
    %3437 = vmatpush1.msra.mxu0 %v3398
    %3438 = vmatprep.subr.mxu0 0.0
    %3439 = vmatpush1.msra.mxu0 0.0
    %3440 = vmatprep.subr.mxu0 0.0
    %3441 = vmatpush1.msra.mxu0 0.0
    %3442 = vmatprep.subr.mxu0 0.0
    %3443 = vmatpush1.msra.mxu0 0.0
    %3444 = vmatprep.subr.mxu0 0.0
    %3445 = vmatpush1.msra.mxu0 0.0
    %3446 = vmatprep.subr.mxu0 0.0
    %3447 = vmatpush1.msra.mxu0 0.0
    %3448 = vmatprep.subr.mxu0 0.0
    %3449 = vmatpush1.msra.mxu0 0.0
    %3450 = vmatprep.subr.mxu0 0.0
    %3451 = vmatpush1.msra.mxu0 0.0
    %3452 = vmatprep.subr.mxu0 0.0
    %3453 = vmatpush1.msra.mxu0 0.0
    %3454 = vmatprep.subr.mxu0 0.0
    %3455 = vmatpush1.msra.mxu0 0.0
    %3456 = vmatprep.subr.mxu0 0.0
    %3457 = vmatpush1.msra.mxu0 0.0
    %3458 = vmatprep.subr.mxu0 0.0
    %3459 = vmatpush1.msra.mxu0 0.0
    %3460 = vmatprep.subr.mxu0 0.0
    %3461 = vmatpush1.msra.mxu0 0.0
    %3462 = vmatprep.subr.mxu0 0.0
    %3463 = vmatpush1.msra.mxu0 0.0
    %3464 = vmatprep.subr.mxu0 0.0
    %3465 = vmatpush1.msra.mxu0 0.0
    %3466 = vmatprep.subr.mxu0 0.0
    %3467 = vmatpush1.msra.mxu0 0.0
    %3468 = vmatprep.subr.mxu0 0.0
    %3469 = vmatpush1.msra.mxu0 0.0
    %3470 = vmatprep.mubr.f32.mxu0 0.0
    %3471 = vmatmul.mubr.f32.gmra.mrb[0].mxu0 %v3381
    %v3472 = vpop.f32.mrb[0].mxu0
    %v3473 = vadd.f32 %v3404, %v3472
    %v3474 = vpop.f32.mrb[0].mxu0
    %3475 = vmatprep.mubr.f32.mxu0 0.0
    %3476 = vmatmul.mubr.f32.gmra.mrb[0].mxu0 %v3382
    %v3477 = vpop.f32.mrb[0].mxu0
    %v3478 = vadd.f32 %v3404, %v3477
    %v3479 = vpop.f32.mrb[0].mxu0
    %3480 = vdwg.mxu0
    %v3481 = vadd.f32 %v3227, %v3473
    %v3482 = vadd.f32 %v3228, %v3478
    %3483 = vst.msk [vmem:[#allocation2] sm:$0xff] %vm61, %v3481
    %3484 = vst.msk [vmem:[#allocation2 + $0x8] sm:$0xff] %vm61, %v3482
    // Predicated region
    $region70: #{tpu_custom_call.1} parent=1 // pred_check
      _
    $region71: #{tpu_custom_call.1} parent=1 // pred_check_branch
      %3486 = sbr.rel (0) target = $region73
    $region72: #{tpu_custom_call.1} parent=1 // pred_region
      %s3488 = ssub.s32 256, 256
      %3489 = vsyncadd [#allocation3], %s3488
      %s3490 = sshll.u32 [#allocation2], 4
      %s3491 = int_to_ptr.vmem [resolvable:$true] %s3490
      %3496 = dma.vmem_to_hbm [thread:$0]  %s3491, 256, %s17, [#allocation3], 128, 128, 8
    $region73: #{tpu_custom_call.1} parent=1 // pred_fallthru
      _
    // Predicated region
    $region74: #{tpu_custom_call.1} parent=1 // pred_check
      _
    $region75: #{tpu_custom_call.1} parent=1 // pred_check_branch
      %3498 = sbr.rel (0) target = $region77
    $region76: #{tpu_custom_call.1} parent=1 // pred_region
      %3499 = dma.done [#allocation3], 256
    $region77: #{tpu_custom_call.1} parent=1 // pred_fallthru
      _
    %3500 = vsyncpa [#allocation3], 1

</llo_original>
